<compile_context>
chip_gen: v7x
topology: tpu7x:2x2x1
jax: 0.10.0
libtpu: 0.0.40
codegen_flags: <defaults>
</compile_context>

<pallas_src>
import jax
import jax.numpy as jnp
import numpy as np
from jax.experimental import pallas as pl
from jax.experimental.pallas import tpu as pltpu


def _wide_nn_kernel(x_ref, w1_ref, b1_ref, w2_ref, b2_ref, o_ref):
    # Per grid step (one tile of TS prior samples):
    #   x_ref : (B, indim)            shared input batch
    #   w1_ref: (indim, TS, width)    fc1 weights, one (indim, width) net per sample
    #   b1_ref: (TS, width)           fc1 bias per sample
    #   w2_ref: (TS, width)           fc2 weight row per sample (lane-dense)
    #   b2_ref: (1, TS)               fc2 bias per sample
    #   o_ref : (B, TS)               y[b, s] = forward of sample s on batch row b
    x = x_ref[...]                                     # (B, indim)
    indim = x.shape[1]

    # fc1: h[b, s, w] = sum_d x[b, d] * W1[d, s, w] + b1[s, w]
    # Unrolled over the tiny static indim axis; pure VPU broadcast-MACs.
    acc = b1_ref[...][None, :, :]                      # (1, TS, width) -> broadcasts
    for d in range(indim):                             # static, tiny
        acc = acc + x[:, d][:, None, None] * w1_ref[d][None, :, :]

    h = jnp.tanh(acc)                                  # (B, TS, width), EUP

    # fc2: VPU multiply + lane (width) reduction; avoids a (width, 1) MXU matmul.
    y = jnp.sum(h * w2_ref[...][None, :, :], axis=-1)  # (B, TS)
    o_ref[...] = (y + b2_ref[...]).astype(o_ref.dtype) # b2 broadcasts over batch rows


def wide_nn_forward(x, w1_all, b1_all, w2_all, b2_all, *, sample_tile=128):
    """Evaluate `num_samples` independent prior draws of the module on batch x.

    x      : (B, indim)
    w1_all : (indim, S, width)   -- w1_all[d, s, w] == fc1.weight[w, d] of sample s
    b1_all : (S, width)
    w2_all : (S, width)          -- w2_all[s, w]   == fc2.weight[0, w] of sample s
    b2_all : (1, S)
    returns (B, S) float32; column s == module.forward(x) for prior sample s.
    """
    B, indim = x.shape
    indim_w, S, width = w1_all.shape
    assert indim_w == indim
    assert S % sample_tile == 0, "num_samples must be a multiple of sample_tile"
    TS = sample_tile

    return pl.pallas_call(
        _wide_nn_kernel,
        out_shape=jax.ShapeDtypeStruct((B, S), jnp.float32),
        grid=(S // TS,),
        in_specs=[
            pl.BlockSpec((B, indim), lambda s: (0, 0)),          # shared batch
            pl.BlockSpec((indim, TS, width), lambda s: (0, s, 0)),
            pl.BlockSpec((TS, width), lambda s: (s, 0)),
            pl.BlockSpec((TS, width), lambda s: (s, 0)),
            pl.BlockSpec((1, TS), lambda s: (0, s)),
        ],
        out_specs=pl.BlockSpec((B, TS), lambda s: (0, s)),       # lane-dense output
        compiler_params=pltpu.CompilerParams(
            dimension_semantics=("parallel",),                   # megacore on v7x
        ),
    )(x, w1_all, b1_all, w2_all, b2_all)


def sample_params_from_prior(key, *, ma, mu, mb, mv, sa, su, sb, wv,
                             width, indim, num_samples):
    """JAX equivalent of the module's sample_from_prior(), batched over samples:
       fc1.weight ~ N(mu, su), fc1.bias ~ N(ma, sa),
       fc2.weight ~ N(mv, wv/sqrt(width)), fc2.bias ~ N(mb, sb)."""
    k1, k2, k3, k4 = jax.random.split(key, 4)
    w1 = mu + su * jax.random.normal(k1, (indim, num_samples, width), jnp.float32)
    b1 = ma + sa * jax.random.normal(k2, (num_samples, width), jnp.float32)
    w2 = mv + (wv / np.sqrt(width)) * jax.random.normal(
        k3, (num_samples, width), jnp.float32)
    b2 = mb + sb * jax.random.normal(k4, (1, num_samples), jnp.float32)
    return w1, b1, w2, b2


if __name__ == "__main__":
    # Small shapes consistent with the module (indim/width are ctor args).
    batch, indim, width = 8, 4, 256
    num_samples, sample_tile = 512, 128

    key = jax.random.PRNGKey(0)
    kx, kp = jax.random.split(key)

    x = jax.random.normal(kx, (batch, indim), jnp.float32)

    prior = dict(ma=0.0, mu=0.0, mb=0.0, mv=0.0, sa=1.0, su=1.0, sb=1.0, wv=1.0)
    w1, b1, w2, b2 = sample_params_from_prior(
        kp, width=width, indim=indim, num_samples=num_samples, **prior)

    y = wide_nn_forward(x, w1, b1, w2, b2, sample_tile=sample_tile)
    y = jax.block_until_ready(y)

    # Pure-JAX reference (broadcast form, avoids matmul precision differences).
    h_ref = jnp.tanh((x[:, :, None, None] * w1[None]).sum(axis=1) + b1[None])
    y_ref = (h_ref * w2[None]).sum(axis=-1) + b2
    np.testing.assert_allclose(np.asarray(y), np.asarray(y_ref),
                               rtol=1e-3, atol=1e-3)
    assert y.shape == (batch, num_samples) and y.dtype == jnp.float32

    print("KERNEL_OK")
</pallas_src>

<mosaic_0001>
module attributes {stable_mosaic.version = 11 : i64} {
  func.func @_wide_nn_kernel(%arg0: i32, %arg1: memref<8x4xf32, #tpu.memory_space<vmem>>, %arg2: memref<4x128x256xf32, #tpu.memory_space<vmem>>, %arg3: memref<128x256xf32, #tpu.memory_space<vmem>>, %arg4: memref<128x256xf32, #tpu.memory_space<vmem>>, %arg5: memref<1x128xf32, #tpu.memory_space<vmem>>, %arg6: memref<8x128xf32, #tpu.memory_space<vmem>>) attributes {dimension_semantics = [#tpu.dimension_semantics<parallel>], iteration_bounds = array<i64: 4>, scalar_prefetch = 0 : i64, scratch_operands = 0 : i64, tpu.core_type = #tpu.core_type<tc>, window_params = [{pipeline_mode = #tpu.pipeline_mode<synchronous>, transform_indices = @transform_0, window_bounds = array<i64: 8, 4>}, {transform_indices = @transform_1, window_bounds = array<i64: 4, 128, 256>}, {transform_indices = @transform_2, window_bounds = array<i64: 128, 256>}, {transform_indices = @transform_3, window_bounds = array<i64: 128, 256>}, {transform_indices = @transform_4, window_bounds = array<i64: 1, 128>}, {transform_indices = @transform_5, window_bounds = array<i64: 8, 128>}]} {
    %c0 = arith.constant 0 : index
    %c0_0 = arith.constant 0 : index
    %0 = vector.load %arg1[%c0, %c0_0] : memref<8x4xf32, #tpu.memory_space<vmem>>, vector<8x4xf32>
    %c0_1 = arith.constant 0 : index
    %c0_2 = arith.constant 0 : index
    %1 = vector.load %arg3[%c0_1, %c0_2] : memref<128x256xf32, #tpu.memory_space<vmem>>, vector<128x256xf32>
    %2 = vector.shape_cast %1 : vector<128x256xf32> to vector<1x128x256xf32>
    %3 = vector.extract_strided_slice %0 {offsets = [0, 0], sizes = [8, 1], strides = [1, 1]} : vector<8x4xf32> to vector<8x1xf32>
    %4 = vector.shape_cast %3 : vector<8x1xf32> to vector<8xf32>
    %5 = vector.shape_cast %4 : vector<8xf32> to vector<8x1x1xf32>
    %c0_3 = arith.constant 0 : index
    %c0_4 = arith.constant 0 : index
    %c0_5 = arith.constant 0 : index
    %6 = vector.load %arg2[%c0_3, %c0_4, %c0_5] : memref<4x128x256xf32, #tpu.memory_space<vmem>>, vector<1x128x256xf32>
    %7 = vector.shape_cast %6 : vector<1x128x256xf32> to vector<128x256xf32>
    %8 = vector.shape_cast %7 : vector<128x256xf32> to vector<1x128x256xf32>
    %9 = vector.broadcast %5 : vector<8x1x1xf32> to vector<8x128x256xf32>
    %10 = vector.broadcast %8 : vector<1x128x256xf32> to vector<8x128x256xf32>
    %11 = arith.mulf %9, %10 : vector<8x128x256xf32>
    %12 = vector.broadcast %2 : vector<1x128x256xf32> to vector<8x128x256xf32>
    %13 = arith.addf %12, %11 : vector<8x128x256xf32>
    %14 = vector.extract_strided_slice %0 {offsets = [0, 1], sizes = [8, 1], strides = [1, 1]} : vector<8x4xf32> to vector<8x1xf32>
    %15 = vector.shape_cast %14 : vector<8x1xf32> to vector<8xf32>
    %16 = vector.shape_cast %15 : vector<8xf32> to vector<8x1x1xf32>
    %c1 = arith.constant 1 : index
    %c0_6 = arith.constant 0 : index
    %c0_7 = arith.constant 0 : index
    %17 = vector.load %arg2[%c1, %c0_6, %c0_7] : memref<4x128x256xf32, #tpu.memory_space<vmem>>, vector<1x128x256xf32>
    %18 = vector.shape_cast %17 : vector<1x128x256xf32> to vector<128x256xf32>
    %19 = vector.shape_cast %18 : vector<128x256xf32> to vector<1x128x256xf32>
    %20 = vector.broadcast %16 : vector<8x1x1xf32> to vector<8x128x256xf32>
    %21 = vector.broadcast %19 : vector<1x128x256xf32> to vector<8x128x256xf32>
    %22 = arith.mulf %20, %21 : vector<8x128x256xf32>
    %23 = arith.addf %13, %22 : vector<8x128x256xf32>
    %24 = vector.extract_strided_slice %0 {offsets = [0, 2], sizes = [8, 1], strides = [1, 1]} : vector<8x4xf32> to vector<8x1xf32>
    %25 = vector.shape_cast %24 : vector<8x1xf32> to vector<8xf32>
    %26 = vector.shape_cast %25 : vector<8xf32> to vector<8x1x1xf32>
    %c2 = arith.constant 2 : index
    %c0_8 = arith.constant 0 : index
    %c0_9 = arith.constant 0 : index
    %27 = vector.load %arg2[%c2, %c0_8, %c0_9] : memref<4x128x256xf32, #tpu.memory_space<vmem>>, vector<1x128x256xf32>
    %28 = vector.shape_cast %27 : vector<1x128x256xf32> to vector<128x256xf32>
    %29 = vector.shape_cast %28 : vector<128x256xf32> to vector<1x128x256xf32>
    %30 = vector.broadcast %26 : vector<8x1x1xf32> to vector<8x128x256xf32>
    %31 = vector.broadcast %29 : vector<1x128x256xf32> to vector<8x128x256xf32>
    %32 = arith.mulf %30, %31 : vector<8x128x256xf32>
    %33 = arith.addf %23, %32 : vector<8x128x256xf32>
    %34 = vector.extract_strided_slice %0 {offsets = [0, 3], sizes = [8, 1], strides = [1, 1]} : vector<8x4xf32> to vector<8x1xf32>
    %35 = vector.shape_cast %34 : vector<8x1xf32> to vector<8xf32>
    %36 = vector.shape_cast %35 : vector<8xf32> to vector<8x1x1xf32>
    %c3 = arith.constant 3 : index
    %c0_10 = arith.constant 0 : index
    %c0_11 = arith.constant 0 : index
    %37 = vector.load %arg2[%c3, %c0_10, %c0_11] : memref<4x128x256xf32, #tpu.memory_space<vmem>>, vector<1x128x256xf32>
    %38 = vector.shape_cast %37 : vector<1x128x256xf32> to vector<128x256xf32>
    %39 = vector.shape_cast %38 : vector<128x256xf32> to vector<1x128x256xf32>
    %40 = vector.broadcast %36 : vector<8x1x1xf32> to vector<8x128x256xf32>
    %41 = vector.broadcast %39 : vector<1x128x256xf32> to vector<8x128x256xf32>
    %42 = arith.mulf %40, %41 : vector<8x128x256xf32>
    %43 = arith.addf %33, %42 : vector<8x128x256xf32>
    %44 = math.tanh %43 : vector<8x128x256xf32>
    %c0_12 = arith.constant 0 : index
    %c0_13 = arith.constant 0 : index
    %45 = vector.load %arg4[%c0_12, %c0_13] : memref<128x256xf32, #tpu.memory_space<vmem>>, vector<128x256xf32>
    %46 = vector.shape_cast %45 : vector<128x256xf32> to vector<1x128x256xf32>
    %47 = vector.broadcast %46 : vector<1x128x256xf32> to vector<8x128x256xf32>
    %48 = arith.mulf %44, %47 : vector<8x128x256xf32>
    %cst = arith.constant dense<0.000000e+00> : vector<8x128xf32>
    %49 = vector.multi_reduction <add>, %48, %cst [2] : vector<8x128x256xf32> to vector<8x128xf32>
    %c0_14 = arith.constant 0 : index
    %c0_15 = arith.constant 0 : index
    %50 = vector.load %arg5[%c0_14, %c0_15] : memref<1x128xf32, #tpu.memory_space<vmem>>, vector<1x128xf32>
    %51 = vector.broadcast %50 : vector<1x128xf32> to vector<8x128xf32>
    %52 = arith.addf %49, %51 : vector<8x128xf32>
    %c0_16 = arith.constant 0 : index
    %c0_17 = arith.constant 0 : index
    %53 = vector.load %arg6[%c0_16, %c0_17] : memref<8x128xf32, #tpu.memory_space<vmem>>, vector<8x128xf32>
    tpu.vector_store %arg6[%c0_16, %c0_17], %52 {strides = array<i32>} : memref<8x128xf32, #tpu.memory_space<vmem>>, vector<8x128xf32>,
    return
  }
  func.func @transform_0(%arg0: i32) -> (i32, i32) {
    %c0_i32 = arith.constant 0 : i32
    %c0_i32_0 = arith.constant 0 : i32
    %c0_i32_1 = arith.constant 0 : i32
    return %c0_i32, %c0_i32_0 : i32, i32
  }
  func.func @transform_1(%arg0: i32) -> (i32, i32, i32) {
    %c0_i32 = arith.constant 0 : i32
    %c0_i32_0 = arith.constant 0 : i32
    %c0_i32_1 = arith.constant 0 : i32
    return %c0_i32, %arg0, %c0_i32_0 : i32, i32, i32
  }
  func.func @transform_2(%arg0: i32) -> (i32, i32) {
    %c0_i32 = arith.constant 0 : i32
    %c0_i32_0 = arith.constant 0 : i32
    return %arg0, %c0_i32 : i32, i32
  }
  func.func @transform_3(%arg0: i32) -> (i32, i32) {
    %c0_i32 = arith.constant 0 : i32
    %c0_i32_0 = arith.constant 0 : i32
    return %arg0, %c0_i32 : i32, i32
  }
  func.func @transform_4(%arg0: i32) -> (i32, i32) {
    %c0_i32 = arith.constant 0 : i32
    %c0_i32_0 = arith.constant 0 : i32
    return %c0_i32, %arg0 : i32, i32
  }
  func.func @transform_5(%arg0: i32) -> (i32, i32) {
    %c0_i32 = arith.constant 0 : i32
    %c0_i32_0 = arith.constant 0 : i32
    return %c0_i32, %arg0 : i32, i32
  }
}

</mosaic_0001>

<llo_original>
// kernel: tpu_custom_call.1
$region0: #{tpu_custom_call.1}
  #allocation0 [shape = 'u32[]', space=smem, size = 0x4, offset = 0x4, fixed_abs, tag = 'smem constant byte address 0x4 - core index']
  #allocation1 [shape = 'u32[144,128]{1,0:T(1,128)}', space=vmem, size = 0x12000, scoped, tag = 'internal scratch']
  #allocation11 [shape = 's32[]', space=sflag, size = 0x4, offset = 0, fixed_abs, tag = 'sflag constant byte address 0x0 - dummy sync flag']
  %s0 = inlined_call_operand.vmem [shape: f32[8,4], index: 0, kind: input, shape index: {}]
  %s1 = inlined_call_operand.hbm [shape: f32[4,512,256], index: 1, kind: input, shape index: {}]
  %s2 = inlined_call_operand.hbm [shape: f32[512,256], index: 2, kind: input, shape index: {}]
  %s3 = inlined_call_operand.hbm [shape: f32[512,256], index: 3, kind: input, shape index: {}]
  %s4 = inlined_call_operand.hbm [shape: f32[1,512], index: 4, kind: input, shape index: {}]
  %s5 = inlined_call_operand.hbm [shape: f32[8,512], index: 5, kind: output, shape index: {}]
  %s6 = sld [smem:[#allocation0]]
  $region69: #{tpu_custom_call.1} parent=0
    _
  %s8 = ssub.s32 1, %s6
  %s9 = scalar_select 0, %s8, %s6
  $region1: #{tpu_custom_call.1} parent=0
    #allocation2 [shape = 'u8[1048576]{0}', space=vmem, size = 0x100000, scoped, tag = 'input window, operand 1']
    #allocation3 [shape = 's32[2]{0}', space=sflag, size = 0x8, scoped, tag = 'scoped memory for tpu_custom_call.1']
    #allocation4 [shape = 's32[2]{0}', space=sflag, size = 0x8, scoped, tag = 'scoped memory for tpu_custom_call.1']
    #allocation5 [shape = 'u8[262144]{0}', space=vmem, size = 0x40000, scoped, tag = 'input window, operand 2']
    #allocation6 [shape = 's32[2]{0}', space=sflag, size = 0x8, scoped, tag = 'scoped memory for tpu_custom_call.1']
    #allocation7 [shape = 'u8[262144]{0}', space=vmem, size = 0x40000, scoped, tag = 'input window, operand 3']
    #allocation8 [shape = 'u8[1024]{0}', space=vmem, size = 0x400, scoped, tag = 'input window, operand 4']
    #allocation9 [shape = 's32[2]{0}', space=sflag, size = 0x8, scoped, tag = 'scoped memory for tpu_custom_call.1']
    #allocation10 [shape = 'u8[8192]{0}', space=vmem, size = 0x2000, scoped, tag = 'output window, operand 0']
    %10 = vsyncpa [#allocation3], 0
    %s11 = scalar_lea.sflag [#allocation3], 1
    %12 = vsyncpa %s11, 0
    %13 = vsyncpa [#allocation6], 0
    %s14 = scalar_lea.sflag [#allocation6], 1
    %15 = vsyncpa %s14, 0
    %16 = vsyncpa [#allocation9], 0
    %s17 = scalar_lea.sflag [#allocation9], 1
    %18 = vsyncpa %s17, 0
    %19 = vsyncpa [#allocation4], 0
    %s20 = scalar_lea.sflag [#allocation4], 1
    %21 = vsyncpa %s20, 0
    loop: start=0, step=1, limit=6
    $region2: #{tpu_custom_call.1} parent=1 // loop_pre_header
      _
    $region3: #{tpu_custom_call.1} parent=1 // loop_header
      %s23 = sphi 0, %s27
      %p24 = scmp.ge.s32.totalorder %s23, 6
      %s31 = sphi 0, %s31
      %s33 = sphi 0, %s31
      %s34 = sphi 0, %s33
      %s48 = sphi 0, %s34
      %s54 = sphi 0, %s56
      %s57 = sphi 0, %s54
      %s58 = sphi 0, %s57
      %s74 = sphi 0, %s58
      %s80 = sphi 0, %s82
      %s83 = sphi 0, %s80
      %s84 = sphi 0, %s83
      %s100 = sphi 0, %s84
      %s106 = sphi 0, %s108
      %s109 = sphi 0, %s106
      %s110 = sphi 0, %s109
      %s126 = sphi 0, %s110
      %s132 = sphi 0, %s134
      %s135 = sphi 0, %s132
      %s136 = sphi 0, %s135
      %s152 = sphi 0, %s136
      %s158 = sphi 0, %s160
      %s161 = sphi 0, %s158
      %s162 = sphi 0, %s161
      %s178 = sphi 0, %s162
    $region4: #{tpu_custom_call.1} parent=1 // loop_header_branch
      %26 = sbr.rel (%p24) target = $region8
    $region5: #{tpu_custom_call.1} parent=1 // loop_body
      %s28 = ssub.s32 %s23, 1
      %s29 = ssub.s32 %s23, 2
      %s30 = sadd.s32 %s23, 1
      %s32 = sadd.s32 %s31, 1
      %p35 = scmp.eq.s32.totalorder %s23, 3
      %p36 = scmp.ne.s32.totalorder %s31, %s33
      %p37 = scmp.eq.s32.totalorder %s23, 0
      %p38 = por %p36, %p37
      %p39 = scmp.ne.s32.totalorder %s31, %s33
      %p40 = scmp.eq.s32.totalorder %s28, 3
      %p41 = por %p39, %p40
      %p42 = scmp.ne.s32.totalorder %s33, %s34
      %p43 = scmp.eq.s32.totalorder %s28, 0
      %p44 = por %p42, %p43
      %p45 = scmp.ne.s32.totalorder %s33, %s34
      %p46 = scmp.eq.s32.totalorder %s29, 3
      %p47 = por %p45, %p46
      %p49 = scmp.ne.s32.totalorder %s34, %s48
      %p50 = scmp.eq.s32.totalorder %s29, 0
      %p51 = por %p49, %p50
      %s52 = ssub.s32 %s23, %s30
      %p53 = scmp.eq.s32.totalorder %s52, 0
      %s55 = sadd.s32 %s54, 1
      %s56 = scalar_select %p53, %s54, %s55
      %p59 = pneg %p53
      %p60 = scmp.eq.s32.totalorder %s23, 3
      %p61 = por %p59, %p60
      %p62 = scmp.ne.s32.totalorder %s54, %s57
      %p63 = scmp.eq.s32.totalorder %s23, 0
      %p64 = por %p62, %p63
      %p65 = scmp.ne.s32.totalorder %s54, %s57
      %p66 = scmp.eq.s32.totalorder %s28, 3
      %p67 = por %p65, %p66
      %p68 = scmp.ne.s32.totalorder %s57, %s58
      %p69 = scmp.eq.s32.totalorder %s28, 0
      %p70 = por %p68, %p69
      %p71 = scmp.ne.s32.totalorder %s57, %s58
      %p72 = scmp.eq.s32.totalorder %s29, 3
      %p73 = por %p71, %p72
      %p75 = scmp.ne.s32.totalorder %s58, %s74
      %p76 = scmp.eq.s32.totalorder %s29, 0
      %p77 = por %p75, %p76
      %s78 = ssub.s32 %s23, %s30
      %p79 = scmp.eq.s32.totalorder %s78, 0
      %s81 = sadd.s32 %s80, 1
      %s82 = scalar_select %p79, %s80, %s81
      %p85 = pneg %p79
      %p86 = scmp.eq.s32.totalorder %s23, 3
      %p87 = por %p85, %p86
      %p88 = scmp.ne.s32.totalorder %s80, %s83
      %p89 = scmp.eq.s32.totalorder %s23, 0
      %p90 = por %p88, %p89
      %p91 = scmp.ne.s32.totalorder %s80, %s83
      %p92 = scmp.eq.s32.totalorder %s28, 3
      %p93 = por %p91, %p92
      %p94 = scmp.ne.s32.totalorder %s83, %s84
      %p95 = scmp.eq.s32.totalorder %s28, 0
      %p96 = por %p94, %p95
      %p97 = scmp.ne.s32.totalorder %s83, %s84
      %p98 = scmp.eq.s32.totalorder %s29, 3
      %p99 = por %p97, %p98
      %p101 = scmp.ne.s32.totalorder %s84, %s100
      %p102 = scmp.eq.s32.totalorder %s29, 0
      %p103 = por %p101, %p102
      %s104 = ssub.s32 %s23, %s30
      %p105 = scmp.eq.s32.totalorder %s104, 0
      %s107 = sadd.s32 %s106, 1
      %s108 = scalar_select %p105, %s106, %s107
      %p111 = pneg %p105
      %p112 = scmp.eq.s32.totalorder %s23, 3
      %p113 = por %p111, %p112
      %p114 = scmp.ne.s32.totalorder %s106, %s109
      %p115 = scmp.eq.s32.totalorder %s23, 0
      %p116 = por %p114, %p115
      %p117 = scmp.ne.s32.totalorder %s106, %s109
      %p118 = scmp.eq.s32.totalorder %s28, 3
      %p119 = por %p117, %p118
      %p120 = scmp.ne.s32.totalorder %s109, %s110
      %p121 = scmp.eq.s32.totalorder %s28, 0
      %p122 = por %p120, %p121
      %p123 = scmp.ne.s32.totalorder %s109, %s110
      %p124 = scmp.eq.s32.totalorder %s29, 3
      %p125 = por %p123, %p124
      %p127 = scmp.ne.s32.totalorder %s110, %s126
      %p128 = scmp.eq.s32.totalorder %s29, 0
      %p129 = por %p127, %p128
      %s130 = ssub.s32 %s23, %s30
      %p131 = scmp.eq.s32.totalorder %s130, 0
      %s133 = sadd.s32 %s132, 1
      %s134 = scalar_select %p131, %s132, %s133
      %p137 = pneg %p131
      %p138 = scmp.eq.s32.totalorder %s23, 3
      %p139 = por %p137, %p138
      %p140 = scmp.ne.s32.totalorder %s132, %s135
      %p141 = scmp.eq.s32.totalorder %s23, 0
      %p142 = por %p140, %p141
      %p143 = scmp.ne.s32.totalorder %s132, %s135
      %p144 = scmp.eq.s32.totalorder %s28, 3
      %p145 = por %p143, %p144
      %p146 = scmp.ne.s32.totalorder %s135, %s136
      %p147 = scmp.eq.s32.totalorder %s28, 0
      %p148 = por %p146, %p147
      %p149 = scmp.ne.s32.totalorder %s135, %s136
      %p150 = scmp.eq.s32.totalorder %s29, 3
      %p151 = por %p149, %p150
      %p153 = scmp.ne.s32.totalorder %s136, %s152
      %p154 = scmp.eq.s32.totalorder %s29, 0
      %p155 = por %p153, %p154
      %s156 = ssub.s32 %s23, %s30
      %p157 = scmp.eq.s32.totalorder %s156, 0
      %s159 = sadd.s32 %s158, 1
      %s160 = scalar_select %p157, %s158, %s159
      %p163 = pneg %p157
      %p164 = scmp.eq.s32.totalorder %s23, 3
      %p165 = por %p163, %p164
      %p166 = scmp.ne.s32.totalorder %s158, %s161
      %p167 = scmp.eq.s32.totalorder %s23, 0
      %p168 = por %p166, %p167
      %p169 = scmp.ne.s32.totalorder %s158, %s161
      %p170 = scmp.eq.s32.totalorder %s28, 3
      %p171 = por %p169, %p170
      %p172 = scmp.ne.s32.totalorder %s161, %s162
      %p173 = scmp.eq.s32.totalorder %s28, 0
      %p174 = por %p172, %p173
      %p175 = scmp.ne.s32.totalorder %s161, %s162
      %p176 = scmp.eq.s32.totalorder %s29, 3
      %p177 = por %p175, %p176
      %p179 = scmp.ne.s32.totalorder %s162, %s178
      %p180 = scmp.eq.s32.totalorder %s29, 0
      %p181 = por %p179, %p180
      %p182 = scmp.le.s32.totalorder 1, %s23
      %p183 = scmp.lt.s32.totalorder %s23, 5
      %p184 = pnand %p182, %p183
      %p185 = pneg %p184
      // Predicated region
      $region9: #{tpu_custom_call.1} parent=5 // pred_check
        _
      $region10: #{tpu_custom_call.1} parent=5 // pred_check_branch
        %187 = sbr.rel (%p184) target = $region12
      $region11: #{tpu_custom_call.1} parent=5 // pred_region
        %s188 = ssub.s32 %s23, 1
        // Predicated region
        $region13: #{tpu_custom_call.1} parent=11 // pred_check
          %p189 = pneg %p44
        $region14: #{tpu_custom_call.1} parent=11 // pred_check_branch
          %191 = sbr.rel (%p189) target = $region16
        $region15: #{tpu_custom_call.1} parent=11 // pred_region
          _
        $region16: #{tpu_custom_call.1} parent=11 // pred_fallthru
          _
      $region12: #{tpu_custom_call.1} parent=5 // pred_fallthru
        _
      %p192 = scmp.lt.s32.totalorder %s23, 4
      // Predicated region
      $region17: #{tpu_custom_call.1} parent=5 // pred_check
        %p193 = pneg %p192
      $region18: #{tpu_custom_call.1} parent=5 // pred_check_branch
        %195 = sbr.rel (%p193) target = $region20
      $region19: #{tpu_custom_call.1} parent=5 // pred_region
        // Predicated region
        $region21: #{tpu_custom_call.1} parent=19 // pred_check
          %p196 = pneg %p64
        $region22: #{tpu_custom_call.1} parent=19 // pred_check_branch
          %198 = sbr.rel (%p196) target = $region24
        $region23: #{tpu_custom_call.1} parent=19 // pred_region
          #allocation12 [shape = 'u32[6]{0}', space=smem, size = 0x18, scoped, tag = 'DMA stride descriptor']
          %s199 = sand.u32 %s54, 1
          %s200 = scalar_lea.sflag [#allocation3], %s199
          %s201 = sand.u32 %s54, 1
          %s202 = smul.addr %s201, 1024
          %s203 = scalar_lea.vmem [#allocation2], %s202
          %s204 = smul.u32 16, %s23
          %s206 = ssub.s32 16384, 16384
          %207 = vsyncadd %s200, %s206
          %s208 = smul.addr %s204, 2
          %s209 = smul.addr %s208, 128
          %s210 = scalar_lea.hbm %s1, %s209
          %s212 = sshll.u32 1, 14
          %s213 = sxor.u32 4294967295, %s212
          %s215 = sld [smem:[#allocation0]]
          %s216 = sadd.s32 2, %s215
          %s218 = sshll.u32 7, 26
          %s219 = sxor.u32 4294967295, %s218
          %s220 = sand.u32 0, %s219
          %s221 = sshll.u32 %s216, 26
          %s222 = sor.u32 %s220, %s221
          %s223 = sshll.u32 %s203, 4
          %s224 = int_to_ptr.vmem [resolvable:$true] %s223
          %230 = sst [smem:[#allocation12]] 16384
          %s231 = scalar_lea.smem [#allocation12], 1
          %232 = sst [smem:[%s231]] 4096
          %s233 = scalar_lea.smem [#allocation12], 2
          %234 = sst [smem:[%s233]] 16
          %s235 = scalar_lea.smem [#allocation12], 3
          %236 = sst [smem:[%s235]] 256
          %s237 = scalar_lea.smem [#allocation12], 4
          %238 = sst [smem:[%s237]] 256
          %s239 = scalar_lea.smem [#allocation12], 5
          %240 = sst [smem:[%s239]] 16
          %242 = dma.general %s210, 16384, %s224, %s200, [#allocation11], [#allocation12], %s222, 0
        $region24: #{tpu_custom_call.1} parent=19 // pred_fallthru
          _
        // Predicated region
        $region25: #{tpu_custom_call.1} parent=19 // pred_check
          %p243 = pneg %p90
        $region26: #{tpu_custom_call.1} parent=19 // pred_check_branch
          %245 = sbr.rel (%p243) target = $region28
        $region27: #{tpu_custom_call.1} parent=19 // pred_region
          %s246 = sand.u32 %s23, 1
          %s247 = scalar_lea.sflag [#allocation6], %s246
          %s248 = sand.u32 %s80, 1
          %s249 = smul.addr %s248, 256
          %s250 = scalar_lea.vmem [#allocation5], %s249
          %s251 = smul.u32 16, %s23
          %s253 = ssub.s32 4096, 4096
          %254 = vsyncadd %s247, %s253
          %s255 = smul.addr %s251, 2
          %s256 = smul.addr %s255, 128
          %s257 = scalar_lea.hbm %s2, %s256
          %s258 = sshll.u32 %s250, 4
          %s259 = int_to_ptr.vmem [resolvable:$true] %s258
          %264 = dma.hbm_to_vmem [thread:$0]  %s257, 4096, %s259, %s247, 256, 256, 16
        $region28: #{tpu_custom_call.1} parent=19 // pred_fallthru
          _
        // Predicated region
        $region29: #{tpu_custom_call.1} parent=19 // pred_check
          %p265 = pneg %p116
        $region30: #{tpu_custom_call.1} parent=19 // pred_check_branch
          %267 = sbr.rel (%p265) target = $region32
        $region31: #{tpu_custom_call.1} parent=19 // pred_region
          %s268 = sand.u32 %s23, 1
          %s269 = scalar_lea.sflag [#allocation6], %s268
          %s270 = sand.u32 %s106, 1
          %s271 = smul.addr %s270, 256
          %s272 = scalar_lea.vmem [#allocation7], %s271
          %s273 = smul.u32 16, %s23
          %s275 = ssub.s32 4096, 4096
          %276 = vsyncadd %s269, %s275
          %s277 = smul.addr %s273, 2
          %s278 = smul.addr %s277, 128
          %s279 = scalar_lea.hbm %s3, %s278
          %s280 = sshll.u32 %s272, 4
          %s281 = int_to_ptr.vmem [resolvable:$true] %s280
          %286 = dma.hbm_to_vmem [thread:$0]  %s279, 4096, %s281, %s269, 256, 256, 16
        $region32: #{tpu_custom_call.1} parent=19 // pred_fallthru
          _
        // Predicated region
        $region33: #{tpu_custom_call.1} parent=19 // pred_check
          %p287 = pneg %p142
        $region34: #{tpu_custom_call.1} parent=19 // pred_check_branch
          %289 = sbr.rel (%p287) target = $region36
        $region35: #{tpu_custom_call.1} parent=19 // pred_region
          %s290 = sand.u32 %s132, 1
          %s291 = scalar_lea.sflag [#allocation9], %s290
          %s292 = sand.u32 %s132, 1
          %s293 = scalar_lea.vmem [#allocation8], %s292
          %s295 = ssub.s32 16, 16
          %296 = vsyncadd %s291, %s295
          %s297 = smul.addr %s23, 16
          %s298 = scalar_lea.hbm %s4, %s297
          %s300 = sshll.u32 %s293, 4
          %s301 = int_to_ptr.vmem [resolvable:$true] %s300
          %303 = dma.hbm_to_vmem [thread:$0]  %s298, 16, %s301, %s291
        $region36: #{tpu_custom_call.1} parent=19 // pred_fallthru
          _
      $region20: #{tpu_custom_call.1} parent=5 // pred_fallthru
        _
      %p304 = scmp.le.s32.totalorder 1, %s23
      %p305 = scmp.lt.s32.totalorder %s23, 5
      %p306 = pnand %p304, %p305
      %p307 = pneg %p306
      // Predicated region
      $region37: #{tpu_custom_call.1} parent=5 // pred_check
        _
      $region38: #{tpu_custom_call.1} parent=5 // pred_check_branch
        %309 = sbr.rel (%p306) target = $region40
      $region39: #{tpu_custom_call.1} parent=5 // pred_region
        %s310 = ssub.s32 %s23, 1
        %s311 = sand.u32 %s57, 1
        %s312 = scalar_lea.sflag [#allocation3], %s311
        %s313 = sand.u32 %s57, 1
        %s314 = smul.addr %s313, 1024
        %s315 = scalar_lea.vmem [#allocation2], %s314
        // Predicated region
        $region41: #{tpu_custom_call.1} parent=39 // pred_check
          %p316 = pneg %p70
        $region42: #{tpu_custom_call.1} parent=39 // pred_check_branch
          %318 = sbr.rel (%p316) target = $region44
        $region43: #{tpu_custom_call.1} parent=39 // pred_region
          %319 = dma.done %s312, 16384
        $region44: #{tpu_custom_call.1} parent=39 // pred_fallthru
          _
        %s320 = sand.u32 %s28, 1
        %s321 = scalar_lea.sflag [#allocation6], %s320
        %s322 = sand.u32 %s83, 1
        %s323 = smul.addr %s322, 256
        %s324 = scalar_lea.vmem [#allocation5], %s323
        // Predicated region
        $region45: #{tpu_custom_call.1} parent=39 // pred_check
          %p325 = pneg %p96
        $region46: #{tpu_custom_call.1} parent=39 // pred_check_branch
          %327 = sbr.rel (%p325) target = $region48
        $region47: #{tpu_custom_call.1} parent=39 // pred_region
          %328 = dma.done %s321, 4096
        $region48: #{tpu_custom_call.1} parent=39 // pred_fallthru
          _
        %s329 = sand.u32 %s28, 1
        %s330 = scalar_lea.sflag [#allocation6], %s329
        %s331 = sand.u32 %s109, 1
        %s332 = smul.addr %s331, 256
        %s333 = scalar_lea.vmem [#allocation7], %s332
        // Predicated region
        $region49: #{tpu_custom_call.1} parent=39 // pred_check
          %p334 = pneg %p122
        $region50: #{tpu_custom_call.1} parent=39 // pred_check_branch
          %336 = sbr.rel (%p334) target = $region52
        $region51: #{tpu_custom_call.1} parent=39 // pred_region
          %337 = dma.done %s330, 4096
        $region52: #{tpu_custom_call.1} parent=39 // pred_fallthru
          _
        %s338 = sand.u32 %s135, 1
        %s339 = scalar_lea.sflag [#allocation9], %s338
        %s340 = sand.u32 %s135, 1
        %s341 = scalar_lea.vmem [#allocation8], %s340
        // Predicated region
        $region53: #{tpu_custom_call.1} parent=39 // pred_check
          %p342 = pneg %p148
        $region54: #{tpu_custom_call.1} parent=39 // pred_check_branch
          %344 = sbr.rel (%p342) target = $region56
        $region55: #{tpu_custom_call.1} parent=39 // pred_region
          %345 = dma.done %s339, 16
        $region56: #{tpu_custom_call.1} parent=39 // pred_fallthru
          _
        %p346 = pneg %p44
        %p347 = pneg %p41
        %s348 = sand.u32 %s57, 1
        %s349 = scalar_lea.sflag [#allocation3], %s348
        %s350 = sand.u32 %s57, 1
        %s351 = smul.addr %s350, 1024
        %s352 = scalar_lea.vmem [#allocation2], %s351
        %p353 = pneg %p70
        %p354 = pneg %p67
        %s355 = sand.u32 %s28, 1
        %s356 = scalar_lea.sflag [#allocation6], %s355
        %s357 = sand.u32 %s83, 1
        %s358 = smul.addr %s357, 256
        %s359 = scalar_lea.vmem [#allocation5], %s358
        %p360 = pneg %p96
        %p361 = pneg %p93
        %s362 = sand.u32 %s28, 1
        %s363 = scalar_lea.sflag [#allocation6], %s362
        %s364 = sand.u32 %s109, 1
        %s365 = smul.addr %s364, 256
        %s366 = scalar_lea.vmem [#allocation7], %s365
        %p367 = pneg %p122
        %p368 = pneg %p119
        %s369 = sand.u32 %s135, 1
        %s370 = scalar_lea.sflag [#allocation9], %s369
        %s371 = sand.u32 %s135, 1
        %s372 = scalar_lea.vmem [#allocation8], %s371
        %p373 = pneg %p148
        %p374 = pneg %p145
        %p375 = pneg %p174
        %p376 = pneg %p171
        %s377 = sand.u32 %s161, 1
        %s378 = scalar_lea.sflag [#allocation4], %s377
        %s379 = sand.u32 %s161, 1
        %s380 = smul.addr %s379, 8
        %s381 = scalar_lea.vmem [#allocation10], %s380
        %s382 = smul.u32 16, %s28
        %s383 = smul.u32 16, %s28
        %s384 = smul.u32 16, %s28
        %v385 = vld [vmem:[%s0] sm:$0xff]
        %v386 = vld [vmem:[%s324] sm:$0xff]
        %v387 = vld [vmem:[%s324 + $0x8] sm:$0xff]
        %v388 = vld [vmem:[%s324 + $0x10] sm:$0xff]
        %v389 = vld [vmem:[%s324 + $0x18] sm:$0xff]
        %v390 = vld [vmem:[%s324 + $0x20] sm:$0xff]
        %v391 = vld [vmem:[%s324 + $0x28] sm:$0xff]
        %v392 = vld [vmem:[%s324 + $0x30] sm:$0xff]
        %v393 = vld [vmem:[%s324 + $0x38] sm:$0xff]
        %v394 = vld [vmem:[%s324 + $0x40] sm:$0xff]
        %v395 = vld [vmem:[%s324 + $0x48] sm:$0xff]
        %v396 = vld [vmem:[%s324 + $0x50] sm:$0xff]
        %v397 = vld [vmem:[%s324 + $0x58] sm:$0xff]
        %v398 = vld [vmem:[%s324 + $0x60] sm:$0xff]
        %v399 = vld [vmem:[%s324 + $0x68] sm:$0xff]
        %v400 = vld [vmem:[%s324 + $0x70] sm:$0xff]
        %v401 = vld [vmem:[%s324 + $0x78] sm:$0xff]
        %v402 = vld [vmem:[%s324 + $0x80] sm:$0xff]
        %v403 = vld [vmem:[%s324 + $0x88] sm:$0xff]
        %v404 = vld [vmem:[%s324 + $0x90] sm:$0xff]
        %v405 = vld [vmem:[%s324 + $0x98] sm:$0xff]
        %v406 = vld [vmem:[%s324 + $0xa0] sm:$0xff]
        %v407 = vld [vmem:[%s324 + $0xa8] sm:$0xff]
        %v408 = vld [vmem:[%s324 + $0xb0] sm:$0xff]
        %v409 = vld [vmem:[%s324 + $0xb8] sm:$0xff]
        %v410 = vld [vmem:[%s324 + $0xc0] sm:$0xff]
        %v411 = vld [vmem:[%s324 + $0xc8] sm:$0xff]
        %v412 = vld [vmem:[%s324 + $0xd0] sm:$0xff]
        %v413 = vld [vmem:[%s324 + $0xd8] sm:$0xff]
        %v414 = vld [vmem:[%s324 + $0xe0] sm:$0xff]
        %v415 = vld [vmem:[%s324 + $0xe8] sm:$0xff]
        %v416 = vld [vmem:[%s324 + $0xf0] sm:$0xff]
        %v417 = vld [vmem:[%s324 + $0xf8] sm:$0xff]
        %v419 = vcombine.high %v385, %v385
        %v421 = vunpack.c.l.s4 1966171168
        %v422 = vunpack.c.0.s8 %v421
        %v423 = vlaneseq
        %v424 = vshrl.u32 %v423, 7
        %v425 = vsub.s32 %v422, %v424
        %v426 = vrot.slane %v385, %v425
        %v428 = vunpack.c.l.s4 1966171168
        %v429 = vunpack.c.0.s8 %v428
        %v430 = vlaneseq
        %v431 = vshrl.u32 %v430, 7
        %v432 = vsub.s32 %v429, %v431
        %v433 = vrot.slane %v419, %v432
        %v434 = vcombine.high %v426, %v426
        %v435 = vcombine.high %v433, %v433
        %v437 = vunpack.c.l.s4 1966171168
        %v438 = vunpack.c.0.s8 %v437
        %v439 = vlaneseq
        %v440 = vshrl.u32 %v439, 7
        %v441 = vsub.s32 %v438, %v440
        %v442 = vrot.slane %v426, %v441
        %v444 = vunpack.c.l.s4 1966171168
        %v445 = vunpack.c.0.s8 %v444
        %v446 = vlaneseq
        %v447 = vshrl.u32 %v446, 7
        %v448 = vsub.s32 %v445, %v447
        %v449 = vrot.slane %v433, %v448
        %v451 = vunpack.c.l.s4 1966171168
        %v452 = vunpack.c.0.s8 %v451
        %v453 = vlaneseq
        %v454 = vshrl.u32 %v453, 7
        %v455 = vsub.s32 %v452, %v454
        %v456 = vrot.slane %v434, %v455
        %v458 = vunpack.c.l.s4 1966171168
        %v459 = vunpack.c.0.s8 %v458
        %v460 = vlaneseq
        %v461 = vshrl.u32 %v460, 7
        %v462 = vsub.s32 %v459, %v461
        %v463 = vrot.slane %v435, %v462
        %v464 = vcombine.high %v442, %v442
        %v465 = vcombine.high %v449, %v449
        %v466 = vcombine.high %v456, %v456
        %v467 = vcombine.high %v463, %v463
        %v468 = vld [vmem:[%s315] sm:$0xff]
        %v469 = vld [vmem:[%s315 + $0x8] sm:$0xff]
        %v470 = vld [vmem:[%s315 + $0x10] sm:$0xff]
        %v471 = vld [vmem:[%s315 + $0x18] sm:$0xff]
        %v472 = vld [vmem:[%s315 + $0x20] sm:$0xff]
        %v473 = vld [vmem:[%s315 + $0x28] sm:$0xff]
        %v474 = vld [vmem:[%s315 + $0x30] sm:$0xff]
        %v475 = vld [vmem:[%s315 + $0x38] sm:$0xff]
        %v476 = vld [vmem:[%s315 + $0x40] sm:$0xff]
        %v477 = vld [vmem:[%s315 + $0x48] sm:$0xff]
        %v478 = vld [vmem:[%s315 + $0x50] sm:$0xff]
        %v479 = vld [vmem:[%s315 + $0x58] sm:$0xff]
        %v480 = vld [vmem:[%s315 + $0x60] sm:$0xff]
        %v481 = vld [vmem:[%s315 + $0x68] sm:$0xff]
        %v482 = vld [vmem:[%s315 + $0x70] sm:$0xff]
        %v483 = vld [vmem:[%s315 + $0x78] sm:$0xff]
        %v484 = vld [vmem:[%s315 + $0x80] sm:$0xff]
        %v485 = vld [vmem:[%s315 + $0x88] sm:$0xff]
        %v486 = vld [vmem:[%s315 + $0x90] sm:$0xff]
        %v487 = vld [vmem:[%s315 + $0x98] sm:$0xff]
        %v488 = vld [vmem:[%s315 + $0xa0] sm:$0xff]
        %v489 = vld [vmem:[%s315 + $0xa8] sm:$0xff]
        %v490 = vld [vmem:[%s315 + $0xb0] sm:$0xff]
        %v491 = vld [vmem:[%s315 + $0xb8] sm:$0xff]
        %v492 = vld [vmem:[%s315 + $0xc0] sm:$0xff]
        %v493 = vld [vmem:[%s315 + $0xc8] sm:$0xff]
        %v494 = vld [vmem:[%s315 + $0xd0] sm:$0xff]
        %v495 = vld [vmem:[%s315 + $0xd8] sm:$0xff]
        %v496 = vld [vmem:[%s315 + $0xe0] sm:$0xff]
        %v497 = vld [vmem:[%s315 + $0xe8] sm:$0xff]
        %v498 = vld [vmem:[%s315 + $0xf0] sm:$0xff]
        %v499 = vld [vmem:[%s315 + $0xf8] sm:$0xff]
        %v500 = vlaneseq
        %v501 = vshrl.u32 %v500, 7
        %v502 = vsub.s32 0, %v501
        %v503 = vrot.slane %v442, %v502
        %v504 = vlaneseq
        %v505 = vshrl.u32 %v504, 7
        %v506 = vsub.s32 0, %v505
        %v507 = vrot.slane %v456, %v506
        %v508 = vlaneseq
        %v509 = vshrl.u32 %v508, 7
        %v510 = vsub.s32 0, %v509
        %v511 = vrot.slane %v464, %v510
        %v512 = vlaneseq
        %v513 = vshrl.u32 %v512, 7
        %v514 = vsub.s32 0, %v513
        %v515 = vrot.slane %v466, %v514
        %v516 = vlaneseq
        %v517 = vshrl.u32 %v516, 7
        %v518 = vsub.s32 0, %v517
        %v519 = vrot.slane %v449, %v518
        %v520 = vlaneseq
        %v521 = vshrl.u32 %v520, 7
        %v522 = vsub.s32 0, %v521
        %v523 = vrot.slane %v463, %v522
        %v524 = vlaneseq
        %v525 = vshrl.u32 %v524, 7
        %v526 = vsub.s32 0, %v525
        %v527 = vrot.slane %v465, %v526
        %v528 = vlaneseq
        %v529 = vshrl.u32 %v528, 7
        %v530 = vsub.s32 0, %v529
        %v531 = vrot.slane %v467, %v530
        %532 = vset.pattern.permute.xlu0 0
        %533 = vperm.xlu0 %532, %v503
        %v534 = vpop.permute.xlu0 %533
        %536 = vset.pattern.permute.xlu0 0
        %537 = vperm.xlu0 %536, %v507
        %v538 = vpop.permute.xlu0 %537
        %540 = vset.pattern.permute.xlu0 0
        %541 = vperm.xlu0 %540, %v511
        %v542 = vpop.permute.xlu0 %541
        %544 = vset.pattern.permute.xlu0 0
        %545 = vperm.xlu0 %544, %v515
        %v546 = vpop.permute.xlu0 %545
        %548 = vset.pattern.permute.xlu0 0
        %549 = vperm.xlu0 %548, %v519
        %v550 = vpop.permute.xlu0 %549
        %552 = vset.pattern.permute.xlu0 0
        %553 = vperm.xlu0 %552, %v523
        %v554 = vpop.permute.xlu0 %553
        %556 = vset.pattern.permute.xlu0 0
        %557 = vperm.xlu0 %556, %v527
        %v558 = vpop.permute.xlu0 %557
        %560 = vset.pattern.permute.xlu0 0
        %561 = vperm.xlu0 %560, %v531
        %v562 = vpop.permute.xlu0 %561
        %v564 = vmul.f32 %v534, %v468
        %v565 = vmul.f32 %v534, %v469
        %v566 = vmul.f32 %v534, %v470
        %v567 = vmul.f32 %v534, %v471
        %v568 = vmul.f32 %v534, %v472
        %v569 = vmul.f32 %v534, %v473
        %v570 = vmul.f32 %v534, %v474
        %v571 = vmul.f32 %v534, %v475
        %v572 = vmul.f32 %v534, %v476
        %v573 = vmul.f32 %v534, %v477
        %v574 = vmul.f32 %v534, %v478
        %v575 = vmul.f32 %v534, %v479
        %v576 = vmul.f32 %v534, %v480
        %v577 = vmul.f32 %v534, %v481
        %v578 = vmul.f32 %v534, %v482
        %v579 = vmul.f32 %v534, %v483
        %v580 = vmul.f32 %v534, %v484
        %v581 = vmul.f32 %v534, %v485
        %v582 = vmul.f32 %v534, %v486
        %v583 = vmul.f32 %v534, %v487
        %v584 = vmul.f32 %v534, %v488
        %v585 = vmul.f32 %v534, %v489
        %v586 = vmul.f32 %v534, %v490
        %v587 = vmul.f32 %v534, %v491
        %v588 = vmul.f32 %v534, %v492
        %v589 = vmul.f32 %v534, %v493
        %v590 = vmul.f32 %v534, %v494
        %v591 = vmul.f32 %v534, %v495
        %v592 = vmul.f32 %v534, %v496
        %v593 = vmul.f32 %v534, %v497
        %v594 = vmul.f32 %v534, %v498
        %v595 = vmul.f32 %v534, %v499
        %v596 = vmul.f32 %v538, %v468
        %v597 = vmul.f32 %v538, %v469
        %v598 = vmul.f32 %v538, %v470
        %v599 = vmul.f32 %v538, %v471
        %v600 = vmul.f32 %v538, %v472
        %v601 = vmul.f32 %v538, %v473
        %v602 = vmul.f32 %v538, %v474
        %v603 = vmul.f32 %v538, %v475
        %v604 = vmul.f32 %v538, %v476
        %v605 = vmul.f32 %v538, %v477
        %v606 = vmul.f32 %v538, %v478
        %v607 = vmul.f32 %v538, %v479
        %v608 = vmul.f32 %v538, %v480
        %v609 = vmul.f32 %v538, %v481
        %v610 = vmul.f32 %v538, %v482
        %v611 = vmul.f32 %v538, %v483
        %v612 = vmul.f32 %v538, %v484
        %v613 = vmul.f32 %v538, %v485
        %v614 = vmul.f32 %v538, %v486
        %v615 = vmul.f32 %v538, %v487
        %v616 = vmul.f32 %v538, %v488
        %v617 = vmul.f32 %v538, %v489
        %v618 = vmul.f32 %v538, %v490
        %v619 = vmul.f32 %v538, %v491
        %v620 = vmul.f32 %v538, %v492
        %v621 = vmul.f32 %v538, %v493
        %v622 = vmul.f32 %v538, %v494
        %v623 = vmul.f32 %v538, %v495
        %v624 = vmul.f32 %v538, %v496
        %v625 = vmul.f32 %v538, %v497
        %v626 = vmul.f32 %v538, %v498
        %v627 = vmul.f32 %v538, %v499
        %v628 = vmul.f32 %v542, %v468
        %v629 = vmul.f32 %v542, %v469
        %v630 = vmul.f32 %v542, %v470
        %v631 = vmul.f32 %v542, %v471
        %v632 = vmul.f32 %v542, %v472
        %v633 = vmul.f32 %v542, %v473
        %v634 = vmul.f32 %v542, %v474
        %v635 = vmul.f32 %v542, %v475
        %v636 = vmul.f32 %v542, %v476
        %v637 = vmul.f32 %v542, %v477
        %v638 = vmul.f32 %v542, %v478
        %v639 = vmul.f32 %v542, %v479
        %v640 = vmul.f32 %v542, %v480
        %v641 = vmul.f32 %v542, %v481
        %v642 = vmul.f32 %v542, %v482
        %v643 = vmul.f32 %v542, %v483
        %v644 = vmul.f32 %v542, %v484
        %v645 = vmul.f32 %v542, %v485
        %v646 = vmul.f32 %v542, %v486
        %v647 = vmul.f32 %v542, %v487
        %v648 = vmul.f32 %v542, %v488
        %v649 = vmul.f32 %v542, %v489
        %v650 = vmul.f32 %v542, %v490
        %v651 = vmul.f32 %v542, %v491
        %v652 = vmul.f32 %v542, %v492
        %v653 = vmul.f32 %v542, %v493
        %v654 = vmul.f32 %v542, %v494
        %v655 = vmul.f32 %v542, %v495
        %v656 = vmul.f32 %v542, %v496
        %v657 = vmul.f32 %v542, %v497
        %v658 = vmul.f32 %v542, %v498
        %v659 = vmul.f32 %v542, %v499
        %v660 = vmul.f32 %v546, %v468
        %v661 = vmul.f32 %v546, %v469
        %v662 = vmul.f32 %v546, %v470
        %v663 = vmul.f32 %v546, %v471
        %v664 = vmul.f32 %v546, %v472
        %v665 = vmul.f32 %v546, %v473
        %v666 = vmul.f32 %v546, %v474
        %v667 = vmul.f32 %v546, %v475
        %v668 = vmul.f32 %v546, %v476
        %v669 = vmul.f32 %v546, %v477
        %v670 = vmul.f32 %v546, %v478
        %v671 = vmul.f32 %v546, %v479
        %v672 = vmul.f32 %v546, %v480
        %v673 = vmul.f32 %v546, %v481
        %v674 = vmul.f32 %v546, %v482
        %v675 = vmul.f32 %v546, %v483
        %v676 = vmul.f32 %v546, %v484
        %v677 = vmul.f32 %v546, %v485
        %v678 = vmul.f32 %v546, %v486
        %v679 = vmul.f32 %v546, %v487
        %v680 = vmul.f32 %v546, %v488
        %v681 = vmul.f32 %v546, %v489
        %v682 = vmul.f32 %v546, %v490
        %v683 = vmul.f32 %v546, %v491
        %v684 = vmul.f32 %v546, %v492
        %v685 = vmul.f32 %v546, %v493
        %v686 = vmul.f32 %v546, %v494
        %v687 = vmul.f32 %v546, %v495
        %v688 = vmul.f32 %v546, %v496
        %v689 = vmul.f32 %v546, %v497
        %v690 = vmul.f32 %v546, %v498
        %v691 = vmul.f32 %v546, %v499
        %v692 = vmul.f32 %v550, %v468
        %v693 = vmul.f32 %v550, %v469
        %v694 = vmul.f32 %v550, %v470
        %v695 = vmul.f32 %v550, %v471
        %v696 = vmul.f32 %v550, %v472
        %v697 = vmul.f32 %v550, %v473
        %v698 = vmul.f32 %v550, %v474
        %v699 = vmul.f32 %v550, %v475
        %v700 = vmul.f32 %v550, %v476
        %v701 = vmul.f32 %v550, %v477
        %v702 = vmul.f32 %v550, %v478
        %v703 = vmul.f32 %v550, %v479
        %v704 = vmul.f32 %v550, %v480
        %v705 = vmul.f32 %v550, %v481
        %v706 = vmul.f32 %v550, %v482
        %v707 = vmul.f32 %v550, %v483
        %v708 = vmul.f32 %v550, %v484
        %v709 = vmul.f32 %v550, %v485
        %v710 = vmul.f32 %v550, %v486
        %v711 = vmul.f32 %v550, %v487
        %v712 = vmul.f32 %v550, %v488
        %v713 = vmul.f32 %v550, %v489
        %v714 = vmul.f32 %v550, %v490
        %v715 = vmul.f32 %v550, %v491
        %v716 = vmul.f32 %v550, %v492
        %v717 = vmul.f32 %v550, %v493
        %v718 = vmul.f32 %v550, %v494
        %v719 = vmul.f32 %v550, %v495
        %v720 = vmul.f32 %v550, %v496
        %v721 = vmul.f32 %v550, %v497
        %v722 = vmul.f32 %v550, %v498
        %v723 = vmul.f32 %v550, %v499
        %v724 = vmul.f32 %v554, %v468
        %v725 = vmul.f32 %v554, %v469
        %v726 = vmul.f32 %v554, %v470
        %v727 = vmul.f32 %v554, %v471
        %v728 = vmul.f32 %v554, %v472
        %v729 = vmul.f32 %v554, %v473
        %v730 = vmul.f32 %v554, %v474
        %v731 = vmul.f32 %v554, %v475
        %v732 = vmul.f32 %v554, %v476
        %v733 = vmul.f32 %v554, %v477
        %v734 = vmul.f32 %v554, %v478
        %v735 = vmul.f32 %v554, %v479
        %v736 = vmul.f32 %v554, %v480
        %v737 = vmul.f32 %v554, %v481
        %v738 = vmul.f32 %v554, %v482
        %v739 = vmul.f32 %v554, %v483
        %v740 = vmul.f32 %v554, %v484
        %v741 = vmul.f32 %v554, %v485
        %v742 = vmul.f32 %v554, %v486
        %v743 = vmul.f32 %v554, %v487
        %v744 = vmul.f32 %v554, %v488
        %v745 = vmul.f32 %v554, %v489
        %v746 = vmul.f32 %v554, %v490
        %v747 = vmul.f32 %v554, %v491
        %v748 = vmul.f32 %v554, %v492
        %v749 = vmul.f32 %v554, %v493
        %v750 = vmul.f32 %v554, %v494
        %v751 = vmul.f32 %v554, %v495
        %v752 = vmul.f32 %v554, %v496
        %v753 = vmul.f32 %v554, %v497
        %v754 = vmul.f32 %v554, %v498
        %v755 = vmul.f32 %v554, %v499
        %v756 = vmul.f32 %v558, %v468
        %v757 = vmul.f32 %v558, %v469
        %v758 = vmul.f32 %v558, %v470
        %v759 = vmul.f32 %v558, %v471
        %v760 = vmul.f32 %v558, %v472
        %v761 = vmul.f32 %v558, %v473
        %v762 = vmul.f32 %v558, %v474
        %v763 = vmul.f32 %v558, %v475
        %v764 = vmul.f32 %v558, %v476
        %v765 = vmul.f32 %v558, %v477
        %v766 = vmul.f32 %v558, %v478
        %v767 = vmul.f32 %v558, %v479
        %v768 = vmul.f32 %v558, %v480
        %v769 = vmul.f32 %v558, %v481
        %v770 = vmul.f32 %v558, %v482
        %v771 = vmul.f32 %v558, %v483
        %v772 = vmul.f32 %v558, %v484
        %v773 = vmul.f32 %v558, %v485
        %v774 = vmul.f32 %v558, %v486
        %v775 = vmul.f32 %v558, %v487
        %v776 = vmul.f32 %v558, %v488
        %v777 = vmul.f32 %v558, %v489
        %v778 = vmul.f32 %v558, %v490
        %v779 = vmul.f32 %v558, %v491
        %v780 = vmul.f32 %v558, %v492
        %v781 = vmul.f32 %v558, %v493
        %v782 = vmul.f32 %v558, %v494
        %v783 = vmul.f32 %v558, %v495
        %v784 = vmul.f32 %v558, %v496
        %v785 = vmul.f32 %v558, %v497
        %v786 = vmul.f32 %v558, %v498
        %v787 = vmul.f32 %v558, %v499
        %v788 = vmul.f32 %v562, %v468
        %v789 = vmul.f32 %v562, %v469
        %v790 = vmul.f32 %v562, %v470
        %v791 = vmul.f32 %v562, %v471
        %v792 = vmul.f32 %v562, %v472
        %v793 = vmul.f32 %v562, %v473
        %v794 = vmul.f32 %v562, %v474
        %v795 = vmul.f32 %v562, %v475
        %v796 = vmul.f32 %v562, %v476
        %v797 = vmul.f32 %v562, %v477
        %v798 = vmul.f32 %v562, %v478
        %v799 = vmul.f32 %v562, %v479
        %v800 = vmul.f32 %v562, %v480
        %v801 = vmul.f32 %v562, %v481
        %v802 = vmul.f32 %v562, %v482
        %v803 = vmul.f32 %v562, %v483
        %v804 = vmul.f32 %v562, %v484
        %v805 = vmul.f32 %v562, %v485
        %v806 = vmul.f32 %v562, %v486
        %v807 = vmul.f32 %v562, %v487
        %v808 = vmul.f32 %v562, %v488
        %v809 = vmul.f32 %v562, %v489
        %v810 = vmul.f32 %v562, %v490
        %v811 = vmul.f32 %v562, %v491
        %v812 = vmul.f32 %v562, %v492
        %v813 = vmul.f32 %v562, %v493
        %v814 = vmul.f32 %v562, %v494
        %v815 = vmul.f32 %v562, %v495
        %v816 = vmul.f32 %v562, %v496
        %v817 = vmul.f32 %v562, %v497
        %v818 = vmul.f32 %v562, %v498
        %v819 = vmul.f32 %v562, %v499
        %v820 = vadd.f32 %v386, %v564
        %v821 = vadd.f32 %v387, %v565
        %v822 = vadd.f32 %v388, %v566
        %v823 = vadd.f32 %v389, %v567
        %v824 = vadd.f32 %v390, %v568
        %v825 = vadd.f32 %v391, %v569
        %v826 = vadd.f32 %v392, %v570
        %v827 = vadd.f32 %v393, %v571
        %v828 = vadd.f32 %v394, %v572
        %v829 = vadd.f32 %v395, %v573
        %v830 = vadd.f32 %v396, %v574
        %v831 = vadd.f32 %v397, %v575
        %v832 = vadd.f32 %v398, %v576
        %v833 = vadd.f32 %v399, %v577
        %v834 = vadd.f32 %v400, %v578
        %v835 = vadd.f32 %v401, %v579
        %v836 = vadd.f32 %v402, %v580
        %v837 = vadd.f32 %v403, %v581
        %v838 = vadd.f32 %v404, %v582
        %v839 = vadd.f32 %v405, %v583
        %v840 = vadd.f32 %v406, %v584
        %v841 = vadd.f32 %v407, %v585
        %v842 = vadd.f32 %v408, %v586
        %v843 = vadd.f32 %v409, %v587
        %v844 = vadd.f32 %v410, %v588
        %v845 = vadd.f32 %v411, %v589
        %v846 = vadd.f32 %v412, %v590
        %v847 = vadd.f32 %v413, %v591
        %v848 = vadd.f32 %v414, %v592
        %v849 = vadd.f32 %v415, %v593
        %v850 = vadd.f32 %v416, %v594
        %v851 = vadd.f32 %v417, %v595
        %v852 = vadd.f32 %v386, %v596
        %v853 = vadd.f32 %v387, %v597
        %v854 = vadd.f32 %v388, %v598
        %v855 = vadd.f32 %v389, %v599
        %v856 = vadd.f32 %v390, %v600
        %v857 = vadd.f32 %v391, %v601
        %v858 = vadd.f32 %v392, %v602
        %v859 = vadd.f32 %v393, %v603
        %v860 = vadd.f32 %v394, %v604
        %v861 = vadd.f32 %v395, %v605
        %v862 = vadd.f32 %v396, %v606
        %v863 = vadd.f32 %v397, %v607
        %v864 = vadd.f32 %v398, %v608
        %v865 = vadd.f32 %v399, %v609
        %v866 = vadd.f32 %v400, %v610
        %v867 = vadd.f32 %v401, %v611
        %v868 = vadd.f32 %v402, %v612
        %v869 = vadd.f32 %v403, %v613
        %v870 = vadd.f32 %v404, %v614
        %v871 = vadd.f32 %v405, %v615
        %v872 = vadd.f32 %v406, %v616
        %v873 = vadd.f32 %v407, %v617
        %v874 = vadd.f32 %v408, %v618
        %v875 = vadd.f32 %v409, %v619
        %v876 = vadd.f32 %v410, %v620
        %v877 = vadd.f32 %v411, %v621
        %v878 = vadd.f32 %v412, %v622
        %v879 = vadd.f32 %v413, %v623
        %v880 = vadd.f32 %v414, %v624
        %v881 = vadd.f32 %v415, %v625
        %v882 = vadd.f32 %v416, %v626
        %v883 = vadd.f32 %v417, %v627
        %v884 = vadd.f32 %v386, %v628
        %v885 = vadd.f32 %v387, %v629
        %v886 = vadd.f32 %v388, %v630
        %v887 = vadd.f32 %v389, %v631
        %v888 = vadd.f32 %v390, %v632
        %v889 = vadd.f32 %v391, %v633
        %v890 = vadd.f32 %v392, %v634
        %v891 = vadd.f32 %v393, %v635
        %v892 = vadd.f32 %v394, %v636
        %v893 = vadd.f32 %v395, %v637
        %v894 = vadd.f32 %v396, %v638
        %v895 = vadd.f32 %v397, %v639
        %v896 = vadd.f32 %v398, %v640
        %v897 = vadd.f32 %v399, %v641
        %v898 = vadd.f32 %v400, %v642
        %v899 = vadd.f32 %v401, %v643
        %v900 = vadd.f32 %v402, %v644
        %v901 = vadd.f32 %v403, %v645
        %v902 = vadd.f32 %v404, %v646
        %v903 = vadd.f32 %v405, %v647
        %v904 = vadd.f32 %v406, %v648
        %v905 = vadd.f32 %v407, %v649
        %v906 = vadd.f32 %v408, %v650
        %v907 = vadd.f32 %v409, %v651
        %v908 = vadd.f32 %v410, %v652
        %v909 = vadd.f32 %v411, %v653
        %v910 = vadd.f32 %v412, %v654
        %v911 = vadd.f32 %v413, %v655
        %v912 = vadd.f32 %v414, %v656
        %v913 = vadd.f32 %v415, %v657
        %v914 = vadd.f32 %v416, %v658
        %v915 = vadd.f32 %v417, %v659
        %v916 = vadd.f32 %v386, %v660
        %v917 = vadd.f32 %v387, %v661
        %v918 = vadd.f32 %v388, %v662
        %v919 = vadd.f32 %v389, %v663
        %v920 = vadd.f32 %v390, %v664
        %v921 = vadd.f32 %v391, %v665
        %v922 = vadd.f32 %v392, %v666
        %v923 = vadd.f32 %v393, %v667
        %v924 = vadd.f32 %v394, %v668
        %v925 = vadd.f32 %v395, %v669
        %v926 = vadd.f32 %v396, %v670
        %v927 = vadd.f32 %v397, %v671
        %v928 = vadd.f32 %v398, %v672
        %v929 = vadd.f32 %v399, %v673
        %v930 = vadd.f32 %v400, %v674
        %v931 = vadd.f32 %v401, %v675
        %v932 = vadd.f32 %v402, %v676
        %v933 = vadd.f32 %v403, %v677
        %v934 = vadd.f32 %v404, %v678
        %v935 = vadd.f32 %v405, %v679
        %v936 = vadd.f32 %v406, %v680
        %v937 = vadd.f32 %v407, %v681
        %v938 = vadd.f32 %v408, %v682
        %v939 = vadd.f32 %v409, %v683
        %v940 = vadd.f32 %v410, %v684
        %v941 = vadd.f32 %v411, %v685
        %v942 = vadd.f32 %v412, %v686
        %v943 = vadd.f32 %v413, %v687
        %v944 = vadd.f32 %v414, %v688
        %v945 = vadd.f32 %v415, %v689
        %v946 = vadd.f32 %v416, %v690
        %v947 = vadd.f32 %v417, %v691
        %v948 = vadd.f32 %v386, %v692
        %v949 = vadd.f32 %v387, %v693
        %v950 = vadd.f32 %v388, %v694
        %v951 = vadd.f32 %v389, %v695
        %v952 = vadd.f32 %v390, %v696
        %v953 = vadd.f32 %v391, %v697
        %v954 = vadd.f32 %v392, %v698
        %v955 = vadd.f32 %v393, %v699
        %v956 = vadd.f32 %v394, %v700
        %v957 = vadd.f32 %v395, %v701
        %v958 = vadd.f32 %v396, %v702
        %v959 = vadd.f32 %v397, %v703
        %v960 = vadd.f32 %v398, %v704
        %v961 = vadd.f32 %v399, %v705
        %v962 = vadd.f32 %v400, %v706
        %v963 = vadd.f32 %v401, %v707
        %v964 = vadd.f32 %v402, %v708
        %v965 = vadd.f32 %v403, %v709
        %v966 = vadd.f32 %v404, %v710
        %v967 = vadd.f32 %v405, %v711
        %v968 = vadd.f32 %v406, %v712
        %v969 = vadd.f32 %v407, %v713
        %v970 = vadd.f32 %v408, %v714
        %v971 = vadd.f32 %v409, %v715
        %v972 = vadd.f32 %v410, %v716
        %v973 = vadd.f32 %v411, %v717
        %v974 = vadd.f32 %v412, %v718
        %v975 = vadd.f32 %v413, %v719
        %v976 = vadd.f32 %v414, %v720
        %v977 = vadd.f32 %v415, %v721
        %v978 = vadd.f32 %v416, %v722
        %v979 = vadd.f32 %v417, %v723
        %v980 = vadd.f32 %v386, %v724
        %v981 = vadd.f32 %v387, %v725
        %v982 = vadd.f32 %v388, %v726
        %v983 = vadd.f32 %v389, %v727
        %v984 = vadd.f32 %v390, %v728
        %v985 = vadd.f32 %v391, %v729
        %v986 = vadd.f32 %v392, %v730
        %v987 = vadd.f32 %v393, %v731
        %v988 = vadd.f32 %v394, %v732
        %v989 = vadd.f32 %v395, %v733
        %v990 = vadd.f32 %v396, %v734
        %v991 = vadd.f32 %v397, %v735
        %v992 = vadd.f32 %v398, %v736
        %v993 = vadd.f32 %v399, %v737
        %v994 = vadd.f32 %v400, %v738
        %v995 = vadd.f32 %v401, %v739
        %v996 = vadd.f32 %v402, %v740
        %v997 = vadd.f32 %v403, %v741
        %v998 = vadd.f32 %v404, %v742
        %v999 = vadd.f32 %v405, %v743
        %v1000 = vadd.f32 %v406, %v744
        %v1001 = vadd.f32 %v407, %v745
        %v1002 = vadd.f32 %v408, %v746
        %v1003 = vadd.f32 %v409, %v747
        %v1004 = vadd.f32 %v410, %v748
        %v1005 = vadd.f32 %v411, %v749
        %v1006 = vadd.f32 %v412, %v750
        %v1007 = vadd.f32 %v413, %v751
        %v1008 = vadd.f32 %v414, %v752
        %v1009 = vadd.f32 %v415, %v753
        %v1010 = vadd.f32 %v416, %v754
        %v1011 = vadd.f32 %v417, %v755
        %v1012 = vadd.f32 %v386, %v756
        %v1013 = vadd.f32 %v387, %v757
        %v1014 = vadd.f32 %v388, %v758
        %v1015 = vadd.f32 %v389, %v759
        %v1016 = vadd.f32 %v390, %v760
        %v1017 = vadd.f32 %v391, %v761
        %v1018 = vadd.f32 %v392, %v762
        %v1019 = vadd.f32 %v393, %v763
        %v1020 = vadd.f32 %v394, %v764
        %v1021 = vadd.f32 %v395, %v765
        %v1022 = vadd.f32 %v396, %v766
        %v1023 = vadd.f32 %v397, %v767
        %v1024 = vadd.f32 %v398, %v768
        %v1025 = vadd.f32 %v399, %v769
        %v1026 = vadd.f32 %v400, %v770
        %v1027 = vadd.f32 %v401, %v771
        %v1028 = vadd.f32 %v402, %v772
        %v1029 = vadd.f32 %v403, %v773
        %v1030 = vadd.f32 %v404, %v774
        %v1031 = vadd.f32 %v405, %v775
        %v1032 = vadd.f32 %v406, %v776
        %v1033 = vadd.f32 %v407, %v777
        %v1034 = vadd.f32 %v408, %v778
        %v1035 = vadd.f32 %v409, %v779
        %v1036 = vadd.f32 %v410, %v780
        %v1037 = vadd.f32 %v411, %v781
        %v1038 = vadd.f32 %v412, %v782
        %v1039 = vadd.f32 %v413, %v783
        %v1040 = vadd.f32 %v414, %v784
        %v1041 = vadd.f32 %v415, %v785
        %v1042 = vadd.f32 %v416, %v786
        %v1043 = vadd.f32 %v417, %v787
        %v1044 = vadd.f32 %v386, %v788
        %v1045 = vadd.f32 %v387, %v789
        %v1046 = vadd.f32 %v388, %v790
        %v1047 = vadd.f32 %v389, %v791
        %v1048 = vadd.f32 %v390, %v792
        %v1049 = vadd.f32 %v391, %v793
        %v1050 = vadd.f32 %v392, %v794
        %v1051 = vadd.f32 %v393, %v795
        %v1052 = vadd.f32 %v394, %v796
        %v1053 = vadd.f32 %v395, %v797
        %v1054 = vadd.f32 %v396, %v798
        %v1055 = vadd.f32 %v397, %v799
        %v1056 = vadd.f32 %v398, %v800
        %v1057 = vadd.f32 %v399, %v801
        %v1058 = vadd.f32 %v400, %v802
        %v1059 = vadd.f32 %v401, %v803
        %v1060 = vadd.f32 %v402, %v804
        %v1061 = vadd.f32 %v403, %v805
        %v1062 = vadd.f32 %v404, %v806
        %v1063 = vadd.f32 %v405, %v807
        %v1064 = vadd.f32 %v406, %v808
        %v1065 = vadd.f32 %v407, %v809
        %v1066 = vadd.f32 %v408, %v810
        %v1067 = vadd.f32 %v409, %v811
        %v1068 = vadd.f32 %v410, %v812
        %v1069 = vadd.f32 %v411, %v813
        %v1070 = vadd.f32 %v412, %v814
        %v1071 = vadd.f32 %v413, %v815
        %v1072 = vadd.f32 %v414, %v816
        %v1073 = vadd.f32 %v415, %v817
        %v1074 = vadd.f32 %v416, %v818
        %v1075 = vadd.f32 %v417, %v819
        %s1076 = scalar_lea.vmem %s315, 256 [#allocation2]
        %v1077 = vld [vmem:[%s1076] sm:$0xff]
        %v1078 = vld [vmem:[%s1076 + $0x8] sm:$0xff]
        %v1079 = vld [vmem:[%s1076 + $0x10] sm:$0xff]
        %v1080 = vld [vmem:[%s1076 + $0x18] sm:$0xff]
        %v1081 = vld [vmem:[%s1076 + $0x20] sm:$0xff]
        %v1082 = vld [vmem:[%s1076 + $0x28] sm:$0xff]
        %v1083 = vld [vmem:[%s1076 + $0x30] sm:$0xff]
        %v1084 = vld [vmem:[%s1076 + $0x38] sm:$0xff]
        %v1085 = vld [vmem:[%s1076 + $0x40] sm:$0xff]
        %v1086 = vld [vmem:[%s1076 + $0x48] sm:$0xff]
        %v1087 = vld [vmem:[%s1076 + $0x50] sm:$0xff]
        %v1088 = vld [vmem:[%s1076 + $0x58] sm:$0xff]
        %v1089 = vld [vmem:[%s1076 + $0x60] sm:$0xff]
        %v1090 = vld [vmem:[%s1076 + $0x68] sm:$0xff]
        %v1091 = vld [vmem:[%s1076 + $0x70] sm:$0xff]
        %v1092 = vld [vmem:[%s1076 + $0x78] sm:$0xff]
        %v1093 = vld [vmem:[%s1076 + $0x80] sm:$0xff]
        %v1094 = vld [vmem:[%s1076 + $0x88] sm:$0xff]
        %v1095 = vld [vmem:[%s1076 + $0x90] sm:$0xff]
        %v1096 = vld [vmem:[%s1076 + $0x98] sm:$0xff]
        %v1097 = vld [vmem:[%s1076 + $0xa0] sm:$0xff]
        %v1098 = vld [vmem:[%s1076 + $0xa8] sm:$0xff]
        %v1099 = vld [vmem:[%s1076 + $0xb0] sm:$0xff]
        %v1100 = vld [vmem:[%s1076 + $0xb8] sm:$0xff]
        %v1101 = vld [vmem:[%s1076 + $0xc0] sm:$0xff]
        %v1102 = vld [vmem:[%s1076 + $0xc8] sm:$0xff]
        %v1103 = vld [vmem:[%s1076 + $0xd0] sm:$0xff]
        %v1104 = vld [vmem:[%s1076 + $0xd8] sm:$0xff]
        %v1105 = vld [vmem:[%s1076 + $0xe0] sm:$0xff]
        %v1106 = vld [vmem:[%s1076 + $0xe8] sm:$0xff]
        %v1107 = vld [vmem:[%s1076 + $0xf0] sm:$0xff]
        %v1108 = vld [vmem:[%s1076 + $0xf8] sm:$0xff]
        %1109 = vset.pattern.permute.xlu0 1
        %1110 = vperm.xlu0 %1109, %v503
        %v1111 = vpop.permute.xlu0 %1110
        %1113 = vset.pattern.permute.xlu0 1
        %1114 = vperm.xlu0 %1113, %v507
        %v1115 = vpop.permute.xlu0 %1114
        %1117 = vset.pattern.permute.xlu0 1
        %1118 = vperm.xlu0 %1117, %v511
        %v1119 = vpop.permute.xlu0 %1118
        %1121 = vset.pattern.permute.xlu0 1
        %1122 = vperm.xlu0 %1121, %v515
        %v1123 = vpop.permute.xlu0 %1122
        %1125 = vset.pattern.permute.xlu0 1
        %1126 = vperm.xlu0 %1125, %v519
        %v1127 = vpop.permute.xlu0 %1126
        %1129 = vset.pattern.permute.xlu0 1
        %1130 = vperm.xlu0 %1129, %v523
        %v1131 = vpop.permute.xlu0 %1130
        %1133 = vset.pattern.permute.xlu0 1
        %1134 = vperm.xlu0 %1133, %v527
        %v1135 = vpop.permute.xlu0 %1134
        %1137 = vset.pattern.permute.xlu0 1
        %1138 = vperm.xlu0 %1137, %v531
        %v1139 = vpop.permute.xlu0 %1138
        %v1141 = vmul.f32 %v1111, %v1077
        %v1142 = vmul.f32 %v1111, %v1078
        %v1143 = vmul.f32 %v1111, %v1079
        %v1144 = vmul.f32 %v1111, %v1080
        %v1145 = vmul.f32 %v1111, %v1081
        %v1146 = vmul.f32 %v1111, %v1082
        %v1147 = vmul.f32 %v1111, %v1083
        %v1148 = vmul.f32 %v1111, %v1084
        %v1149 = vmul.f32 %v1111, %v1085
        %v1150 = vmul.f32 %v1111, %v1086
        %v1151 = vmul.f32 %v1111, %v1087
        %v1152 = vmul.f32 %v1111, %v1088
        %v1153 = vmul.f32 %v1111, %v1089
        %v1154 = vmul.f32 %v1111, %v1090
        %v1155 = vmul.f32 %v1111, %v1091
        %v1156 = vmul.f32 %v1111, %v1092
        %v1157 = vmul.f32 %v1111, %v1093
        %v1158 = vmul.f32 %v1111, %v1094
        %v1159 = vmul.f32 %v1111, %v1095
        %v1160 = vmul.f32 %v1111, %v1096
        %v1161 = vmul.f32 %v1111, %v1097
        %v1162 = vmul.f32 %v1111, %v1098
        %v1163 = vmul.f32 %v1111, %v1099
        %v1164 = vmul.f32 %v1111, %v1100
        %v1165 = vmul.f32 %v1111, %v1101
        %v1166 = vmul.f32 %v1111, %v1102
        %v1167 = vmul.f32 %v1111, %v1103
        %v1168 = vmul.f32 %v1111, %v1104
        %v1169 = vmul.f32 %v1111, %v1105
        %v1170 = vmul.f32 %v1111, %v1106
        %v1171 = vmul.f32 %v1111, %v1107
        %v1172 = vmul.f32 %v1111, %v1108
        %v1173 = vmul.f32 %v1115, %v1077
        %v1174 = vmul.f32 %v1115, %v1078
        %v1175 = vmul.f32 %v1115, %v1079
        %v1176 = vmul.f32 %v1115, %v1080
        %v1177 = vmul.f32 %v1115, %v1081
        %v1178 = vmul.f32 %v1115, %v1082
        %v1179 = vmul.f32 %v1115, %v1083
        %v1180 = vmul.f32 %v1115, %v1084
        %v1181 = vmul.f32 %v1115, %v1085
        %v1182 = vmul.f32 %v1115, %v1086
        %v1183 = vmul.f32 %v1115, %v1087
        %v1184 = vmul.f32 %v1115, %v1088
        %v1185 = vmul.f32 %v1115, %v1089
        %v1186 = vmul.f32 %v1115, %v1090
        %v1187 = vmul.f32 %v1115, %v1091
        %v1188 = vmul.f32 %v1115, %v1092
        %v1189 = vmul.f32 %v1115, %v1093
        %v1190 = vmul.f32 %v1115, %v1094
        %v1191 = vmul.f32 %v1115, %v1095
        %v1192 = vmul.f32 %v1115, %v1096
        %v1193 = vmul.f32 %v1115, %v1097
        %v1194 = vmul.f32 %v1115, %v1098
        %v1195 = vmul.f32 %v1115, %v1099
        %v1196 = vmul.f32 %v1115, %v1100
        %v1197 = vmul.f32 %v1115, %v1101
        %v1198 = vmul.f32 %v1115, %v1102
        %v1199 = vmul.f32 %v1115, %v1103
        %v1200 = vmul.f32 %v1115, %v1104
        %v1201 = vmul.f32 %v1115, %v1105
        %v1202 = vmul.f32 %v1115, %v1106
        %v1203 = vmul.f32 %v1115, %v1107
        %v1204 = vmul.f32 %v1115, %v1108
        %v1205 = vmul.f32 %v1119, %v1077
        %v1206 = vmul.f32 %v1119, %v1078
        %v1207 = vmul.f32 %v1119, %v1079
        %v1208 = vmul.f32 %v1119, %v1080
        %v1209 = vmul.f32 %v1119, %v1081
        %v1210 = vmul.f32 %v1119, %v1082
        %v1211 = vmul.f32 %v1119, %v1083
        %v1212 = vmul.f32 %v1119, %v1084
        %v1213 = vmul.f32 %v1119, %v1085
        %v1214 = vmul.f32 %v1119, %v1086
        %v1215 = vmul.f32 %v1119, %v1087
        %v1216 = vmul.f32 %v1119, %v1088
        %v1217 = vmul.f32 %v1119, %v1089
        %v1218 = vmul.f32 %v1119, %v1090
        %v1219 = vmul.f32 %v1119, %v1091
        %v1220 = vmul.f32 %v1119, %v1092
        %v1221 = vmul.f32 %v1119, %v1093
        %v1222 = vmul.f32 %v1119, %v1094
        %v1223 = vmul.f32 %v1119, %v1095
        %v1224 = vmul.f32 %v1119, %v1096
        %v1225 = vmul.f32 %v1119, %v1097
        %v1226 = vmul.f32 %v1119, %v1098
        %v1227 = vmul.f32 %v1119, %v1099
        %v1228 = vmul.f32 %v1119, %v1100
        %v1229 = vmul.f32 %v1119, %v1101
        %v1230 = vmul.f32 %v1119, %v1102
        %v1231 = vmul.f32 %v1119, %v1103
        %v1232 = vmul.f32 %v1119, %v1104
        %v1233 = vmul.f32 %v1119, %v1105
        %v1234 = vmul.f32 %v1119, %v1106
        %v1235 = vmul.f32 %v1119, %v1107
        %v1236 = vmul.f32 %v1119, %v1108
        %v1237 = vmul.f32 %v1123, %v1077
        %v1238 = vmul.f32 %v1123, %v1078
        %v1239 = vmul.f32 %v1123, %v1079
        %v1240 = vmul.f32 %v1123, %v1080
        %v1241 = vmul.f32 %v1123, %v1081
        %v1242 = vmul.f32 %v1123, %v1082
        %v1243 = vmul.f32 %v1123, %v1083
        %v1244 = vmul.f32 %v1123, %v1084
        %v1245 = vmul.f32 %v1123, %v1085
        %v1246 = vmul.f32 %v1123, %v1086
        %v1247 = vmul.f32 %v1123, %v1087
        %v1248 = vmul.f32 %v1123, %v1088
        %v1249 = vmul.f32 %v1123, %v1089
        %v1250 = vmul.f32 %v1123, %v1090
        %v1251 = vmul.f32 %v1123, %v1091
        %v1252 = vmul.f32 %v1123, %v1092
        %v1253 = vmul.f32 %v1123, %v1093
        %v1254 = vmul.f32 %v1123, %v1094
        %v1255 = vmul.f32 %v1123, %v1095
        %v1256 = vmul.f32 %v1123, %v1096
        %v1257 = vmul.f32 %v1123, %v1097
        %v1258 = vmul.f32 %v1123, %v1098
        %v1259 = vmul.f32 %v1123, %v1099
        %v1260 = vmul.f32 %v1123, %v1100
        %v1261 = vmul.f32 %v1123, %v1101
        %v1262 = vmul.f32 %v1123, %v1102
        %v1263 = vmul.f32 %v1123, %v1103
        %v1264 = vmul.f32 %v1123, %v1104
        %v1265 = vmul.f32 %v1123, %v1105
        %v1266 = vmul.f32 %v1123, %v1106
        %v1267 = vmul.f32 %v1123, %v1107
        %v1268 = vmul.f32 %v1123, %v1108
        %v1269 = vmul.f32 %v1127, %v1077
        %v1270 = vmul.f32 %v1127, %v1078
        %v1271 = vmul.f32 %v1127, %v1079
        %v1272 = vmul.f32 %v1127, %v1080
        %v1273 = vmul.f32 %v1127, %v1081
        %v1274 = vmul.f32 %v1127, %v1082
        %v1275 = vmul.f32 %v1127, %v1083
        %v1276 = vmul.f32 %v1127, %v1084
        %v1277 = vmul.f32 %v1127, %v1085
        %v1278 = vmul.f32 %v1127, %v1086
        %v1279 = vmul.f32 %v1127, %v1087
        %v1280 = vmul.f32 %v1127, %v1088
        %v1281 = vmul.f32 %v1127, %v1089
        %v1282 = vmul.f32 %v1127, %v1090
        %v1283 = vmul.f32 %v1127, %v1091
        %v1284 = vmul.f32 %v1127, %v1092
        %v1285 = vmul.f32 %v1127, %v1093
        %v1286 = vmul.f32 %v1127, %v1094
        %v1287 = vmul.f32 %v1127, %v1095
        %v1288 = vmul.f32 %v1127, %v1096
        %v1289 = vmul.f32 %v1127, %v1097
        %v1290 = vmul.f32 %v1127, %v1098
        %v1291 = vmul.f32 %v1127, %v1099
        %v1292 = vmul.f32 %v1127, %v1100
        %v1293 = vmul.f32 %v1127, %v1101
        %v1294 = vmul.f32 %v1127, %v1102
        %v1295 = vmul.f32 %v1127, %v1103
        %v1296 = vmul.f32 %v1127, %v1104
        %v1297 = vmul.f32 %v1127, %v1105
        %v1298 = vmul.f32 %v1127, %v1106
        %v1299 = vmul.f32 %v1127, %v1107
        %v1300 = vmul.f32 %v1127, %v1108
        %v1301 = vmul.f32 %v1131, %v1077
        %v1302 = vmul.f32 %v1131, %v1078
        %v1303 = vmul.f32 %v1131, %v1079
        %v1304 = vmul.f32 %v1131, %v1080
        %v1305 = vmul.f32 %v1131, %v1081
        %v1306 = vmul.f32 %v1131, %v1082
        %v1307 = vmul.f32 %v1131, %v1083
        %v1308 = vmul.f32 %v1131, %v1084
        %v1309 = vmul.f32 %v1131, %v1085
        %v1310 = vmul.f32 %v1131, %v1086
        %v1311 = vmul.f32 %v1131, %v1087
        %v1312 = vmul.f32 %v1131, %v1088
        %v1313 = vmul.f32 %v1131, %v1089
        %v1314 = vmul.f32 %v1131, %v1090
        %v1315 = vmul.f32 %v1131, %v1091
        %v1316 = vmul.f32 %v1131, %v1092
        %v1317 = vmul.f32 %v1131, %v1093
        %v1318 = vmul.f32 %v1131, %v1094
        %v1319 = vmul.f32 %v1131, %v1095
        %v1320 = vmul.f32 %v1131, %v1096
        %v1321 = vmul.f32 %v1131, %v1097
        %v1322 = vmul.f32 %v1131, %v1098
        %v1323 = vmul.f32 %v1131, %v1099
        %v1324 = vmul.f32 %v1131, %v1100
        %v1325 = vmul.f32 %v1131, %v1101
        %v1326 = vmul.f32 %v1131, %v1102
        %v1327 = vmul.f32 %v1131, %v1103
        %v1328 = vmul.f32 %v1131, %v1104
        %v1329 = vmul.f32 %v1131, %v1105
        %v1330 = vmul.f32 %v1131, %v1106
        %v1331 = vmul.f32 %v1131, %v1107
        %v1332 = vmul.f32 %v1131, %v1108
        %v1333 = vmul.f32 %v1135, %v1077
        %v1334 = vmul.f32 %v1135, %v1078
        %v1335 = vmul.f32 %v1135, %v1079
        %v1336 = vmul.f32 %v1135, %v1080
        %v1337 = vmul.f32 %v1135, %v1081
        %v1338 = vmul.f32 %v1135, %v1082
        %v1339 = vmul.f32 %v1135, %v1083
        %v1340 = vmul.f32 %v1135, %v1084
        %v1341 = vmul.f32 %v1135, %v1085
        %v1342 = vmul.f32 %v1135, %v1086
        %v1343 = vmul.f32 %v1135, %v1087
        %v1344 = vmul.f32 %v1135, %v1088
        %v1345 = vmul.f32 %v1135, %v1089
        %v1346 = vmul.f32 %v1135, %v1090
        %v1347 = vmul.f32 %v1135, %v1091
        %v1348 = vmul.f32 %v1135, %v1092
        %v1349 = vmul.f32 %v1135, %v1093
        %v1350 = vmul.f32 %v1135, %v1094
        %v1351 = vmul.f32 %v1135, %v1095
        %v1352 = vmul.f32 %v1135, %v1096
        %v1353 = vmul.f32 %v1135, %v1097
        %v1354 = vmul.f32 %v1135, %v1098
        %v1355 = vmul.f32 %v1135, %v1099
        %v1356 = vmul.f32 %v1135, %v1100
        %v1357 = vmul.f32 %v1135, %v1101
        %v1358 = vmul.f32 %v1135, %v1102
        %v1359 = vmul.f32 %v1135, %v1103
        %v1360 = vmul.f32 %v1135, %v1104
        %v1361 = vmul.f32 %v1135, %v1105
        %v1362 = vmul.f32 %v1135, %v1106
        %v1363 = vmul.f32 %v1135, %v1107
        %v1364 = vmul.f32 %v1135, %v1108
        %v1365 = vmul.f32 %v1139, %v1077
        %v1366 = vmul.f32 %v1139, %v1078
        %v1367 = vmul.f32 %v1139, %v1079
        %v1368 = vmul.f32 %v1139, %v1080
        %v1369 = vmul.f32 %v1139, %v1081
        %v1370 = vmul.f32 %v1139, %v1082
        %v1371 = vmul.f32 %v1139, %v1083
        %v1372 = vmul.f32 %v1139, %v1084
        %v1373 = vmul.f32 %v1139, %v1085
        %v1374 = vmul.f32 %v1139, %v1086
        %v1375 = vmul.f32 %v1139, %v1087
        %v1376 = vmul.f32 %v1139, %v1088
        %v1377 = vmul.f32 %v1139, %v1089
        %v1378 = vmul.f32 %v1139, %v1090
        %v1379 = vmul.f32 %v1139, %v1091
        %v1380 = vmul.f32 %v1139, %v1092
        %v1381 = vmul.f32 %v1139, %v1093
        %v1382 = vmul.f32 %v1139, %v1094
        %v1383 = vmul.f32 %v1139, %v1095
        %v1384 = vmul.f32 %v1139, %v1096
        %v1385 = vmul.f32 %v1139, %v1097
        %v1386 = vmul.f32 %v1139, %v1098
        %v1387 = vmul.f32 %v1139, %v1099
        %v1388 = vmul.f32 %v1139, %v1100
        %v1389 = vmul.f32 %v1139, %v1101
        %v1390 = vmul.f32 %v1139, %v1102
        %v1391 = vmul.f32 %v1139, %v1103
        %v1392 = vmul.f32 %v1139, %v1104
        %v1393 = vmul.f32 %v1139, %v1105
        %v1394 = vmul.f32 %v1139, %v1106
        %v1395 = vmul.f32 %v1139, %v1107
        %v1396 = vmul.f32 %v1139, %v1108
        %v1397 = vadd.f32 %v820, %v1141
        %v1398 = vadd.f32 %v821, %v1142
        %v1399 = vadd.f32 %v822, %v1143
        %v1400 = vadd.f32 %v823, %v1144
        %v1401 = vadd.f32 %v824, %v1145
        %v1402 = vadd.f32 %v825, %v1146
        %v1403 = vadd.f32 %v826, %v1147
        %v1404 = vadd.f32 %v827, %v1148
        %v1405 = vadd.f32 %v828, %v1149
        %v1406 = vadd.f32 %v829, %v1150
        %v1407 = vadd.f32 %v830, %v1151
        %v1408 = vadd.f32 %v831, %v1152
        %v1409 = vadd.f32 %v832, %v1153
        %v1410 = vadd.f32 %v833, %v1154
        %v1411 = vadd.f32 %v834, %v1155
        %v1412 = vadd.f32 %v835, %v1156
        %v1413 = vadd.f32 %v836, %v1157
        %v1414 = vadd.f32 %v837, %v1158
        %v1415 = vadd.f32 %v838, %v1159
        %v1416 = vadd.f32 %v839, %v1160
        %v1417 = vadd.f32 %v840, %v1161
        %v1418 = vadd.f32 %v841, %v1162
        %v1419 = vadd.f32 %v842, %v1163
        %v1420 = vadd.f32 %v843, %v1164
        %v1421 = vadd.f32 %v844, %v1165
        %v1422 = vadd.f32 %v845, %v1166
        %v1423 = vadd.f32 %v846, %v1167
        %v1424 = vadd.f32 %v847, %v1168
        %v1425 = vadd.f32 %v848, %v1169
        %v1426 = vadd.f32 %v849, %v1170
        %v1427 = vadd.f32 %v850, %v1171
        %v1428 = vadd.f32 %v851, %v1172
        %v1429 = vadd.f32 %v852, %v1173
        %v1430 = vadd.f32 %v853, %v1174
        %v1431 = vadd.f32 %v854, %v1175
        %v1432 = vadd.f32 %v855, %v1176
        %v1433 = vadd.f32 %v856, %v1177
        %v1434 = vadd.f32 %v857, %v1178
        %v1435 = vadd.f32 %v858, %v1179
        %v1436 = vadd.f32 %v859, %v1180
        %v1437 = vadd.f32 %v860, %v1181
        %v1438 = vadd.f32 %v861, %v1182
        %v1439 = vadd.f32 %v862, %v1183
        %v1440 = vadd.f32 %v863, %v1184
        %v1441 = vadd.f32 %v864, %v1185
        %v1442 = vadd.f32 %v865, %v1186
        %v1443 = vadd.f32 %v866, %v1187
        %v1444 = vadd.f32 %v867, %v1188
        %v1445 = vadd.f32 %v868, %v1189
        %v1446 = vadd.f32 %v869, %v1190
        %v1447 = vadd.f32 %v870, %v1191
        %v1448 = vadd.f32 %v871, %v1192
        %v1449 = vadd.f32 %v872, %v1193
        %v1450 = vadd.f32 %v873, %v1194
        %v1451 = vadd.f32 %v874, %v1195
        %v1452 = vadd.f32 %v875, %v1196
        %v1453 = vadd.f32 %v876, %v1197
        %v1454 = vadd.f32 %v877, %v1198
        %v1455 = vadd.f32 %v878, %v1199
        %v1456 = vadd.f32 %v879, %v1200
        %v1457 = vadd.f32 %v880, %v1201
        %v1458 = vadd.f32 %v881, %v1202
        %v1459 = vadd.f32 %v882, %v1203
        %v1460 = vadd.f32 %v883, %v1204
        %v1461 = vadd.f32 %v884, %v1205
        %v1462 = vadd.f32 %v885, %v1206
        %v1463 = vadd.f32 %v886, %v1207
        %v1464 = vadd.f32 %v887, %v1208
        %v1465 = vadd.f32 %v888, %v1209
        %v1466 = vadd.f32 %v889, %v1210
        %v1467 = vadd.f32 %v890, %v1211
        %v1468 = vadd.f32 %v891, %v1212
        %v1469 = vadd.f32 %v892, %v1213
        %v1470 = vadd.f32 %v893, %v1214
        %v1471 = vadd.f32 %v894, %v1215
        %v1472 = vadd.f32 %v895, %v1216
        %v1473 = vadd.f32 %v896, %v1217
        %v1474 = vadd.f32 %v897, %v1218
        %v1475 = vadd.f32 %v898, %v1219
        %v1476 = vadd.f32 %v899, %v1220
        %v1477 = vadd.f32 %v900, %v1221
        %v1478 = vadd.f32 %v901, %v1222
        %v1479 = vadd.f32 %v902, %v1223
        %v1480 = vadd.f32 %v903, %v1224
        %v1481 = vadd.f32 %v904, %v1225
        %v1482 = vadd.f32 %v905, %v1226
        %v1483 = vadd.f32 %v906, %v1227
        %v1484 = vadd.f32 %v907, %v1228
        %v1485 = vadd.f32 %v908, %v1229
        %v1486 = vadd.f32 %v909, %v1230
        %v1487 = vadd.f32 %v910, %v1231
        %v1488 = vadd.f32 %v911, %v1232
        %v1489 = vadd.f32 %v912, %v1233
        %v1490 = vadd.f32 %v913, %v1234
        %v1491 = vadd.f32 %v914, %v1235
        %v1492 = vadd.f32 %v915, %v1236
        %v1493 = vadd.f32 %v916, %v1237
        %v1494 = vadd.f32 %v917, %v1238
        %v1495 = vadd.f32 %v918, %v1239
        %v1496 = vadd.f32 %v919, %v1240
        %v1497 = vadd.f32 %v920, %v1241
        %v1498 = vadd.f32 %v921, %v1242
        %v1499 = vadd.f32 %v922, %v1243
        %v1500 = vadd.f32 %v923, %v1244
        %v1501 = vadd.f32 %v924, %v1245
        %v1502 = vadd.f32 %v925, %v1246
        %v1503 = vadd.f32 %v926, %v1247
        %v1504 = vadd.f32 %v927, %v1248
        %v1505 = vadd.f32 %v928, %v1249
        %v1506 = vadd.f32 %v929, %v1250
        %v1507 = vadd.f32 %v930, %v1251
        %v1508 = vadd.f32 %v931, %v1252
        %v1509 = vadd.f32 %v932, %v1253
        %v1510 = vadd.f32 %v933, %v1254
        %v1511 = vadd.f32 %v934, %v1255
        %v1512 = vadd.f32 %v935, %v1256
        %v1513 = vadd.f32 %v936, %v1257
        %v1514 = vadd.f32 %v937, %v1258
        %v1515 = vadd.f32 %v938, %v1259
        %v1516 = vadd.f32 %v939, %v1260
        %v1517 = vadd.f32 %v940, %v1261
        %v1518 = vadd.f32 %v941, %v1262
        %v1519 = vadd.f32 %v942, %v1263
        %v1520 = vadd.f32 %v943, %v1264
        %v1521 = vadd.f32 %v944, %v1265
        %v1522 = vadd.f32 %v945, %v1266
        %v1523 = vadd.f32 %v946, %v1267
        %v1524 = vadd.f32 %v947, %v1268
        %v1525 = vadd.f32 %v948, %v1269
        %v1526 = vadd.f32 %v949, %v1270
        %v1527 = vadd.f32 %v950, %v1271
        %v1528 = vadd.f32 %v951, %v1272
        %v1529 = vadd.f32 %v952, %v1273
        %v1530 = vadd.f32 %v953, %v1274
        %v1531 = vadd.f32 %v954, %v1275
        %v1532 = vadd.f32 %v955, %v1276
        %v1533 = vadd.f32 %v956, %v1277
        %v1534 = vadd.f32 %v957, %v1278
        %v1535 = vadd.f32 %v958, %v1279
        %v1536 = vadd.f32 %v959, %v1280
        %v1537 = vadd.f32 %v960, %v1281
        %v1538 = vadd.f32 %v961, %v1282
        %v1539 = vadd.f32 %v962, %v1283
        %v1540 = vadd.f32 %v963, %v1284
        %v1541 = vadd.f32 %v964, %v1285
        %v1542 = vadd.f32 %v965, %v1286
        %v1543 = vadd.f32 %v966, %v1287
        %v1544 = vadd.f32 %v967, %v1288
        %v1545 = vadd.f32 %v968, %v1289
        %v1546 = vadd.f32 %v969, %v1290
        %v1547 = vadd.f32 %v970, %v1291
        %v1548 = vadd.f32 %v971, %v1292
        %v1549 = vadd.f32 %v972, %v1293
        %v1550 = vadd.f32 %v973, %v1294
        %v1551 = vadd.f32 %v974, %v1295
        %v1552 = vadd.f32 %v975, %v1296
        %v1553 = vadd.f32 %v976, %v1297
        %v1554 = vadd.f32 %v977, %v1298
        %v1555 = vadd.f32 %v978, %v1299
        %v1556 = vadd.f32 %v979, %v1300
        %v1557 = vadd.f32 %v980, %v1301
        %v1558 = vadd.f32 %v981, %v1302
        %v1559 = vadd.f32 %v982, %v1303
        %v1560 = vadd.f32 %v983, %v1304
        %v1561 = vadd.f32 %v984, %v1305
        %v1562 = vadd.f32 %v985, %v1306
        %v1563 = vadd.f32 %v986, %v1307
        %v1564 = vadd.f32 %v987, %v1308
        %v1565 = vadd.f32 %v988, %v1309
        %v1566 = vadd.f32 %v989, %v1310
        %v1567 = vadd.f32 %v990, %v1311
        %v1568 = vadd.f32 %v991, %v1312
        %v1569 = vadd.f32 %v992, %v1313
        %v1570 = vadd.f32 %v993, %v1314
        %v1571 = vadd.f32 %v994, %v1315
        %v1572 = vadd.f32 %v995, %v1316
        %v1573 = vadd.f32 %v996, %v1317
        %v1574 = vadd.f32 %v997, %v1318
        %v1575 = vadd.f32 %v998, %v1319
        %v1576 = vadd.f32 %v999, %v1320
        %v1577 = vadd.f32 %v1000, %v1321
        %v1578 = vadd.f32 %v1001, %v1322
        %v1579 = vadd.f32 %v1002, %v1323
        %v1580 = vadd.f32 %v1003, %v1324
        %v1581 = vadd.f32 %v1004, %v1325
        %v1582 = vadd.f32 %v1005, %v1326
        %v1583 = vadd.f32 %v1006, %v1327
        %v1584 = vadd.f32 %v1007, %v1328
        %v1585 = vadd.f32 %v1008, %v1329
        %v1586 = vadd.f32 %v1009, %v1330
        %v1587 = vadd.f32 %v1010, %v1331
        %v1588 = vadd.f32 %v1011, %v1332
        %v1589 = vadd.f32 %v1012, %v1333
        %v1590 = vadd.f32 %v1013, %v1334
        %v1591 = vadd.f32 %v1014, %v1335
        %v1592 = vadd.f32 %v1015, %v1336
        %v1593 = vadd.f32 %v1016, %v1337
        %v1594 = vadd.f32 %v1017, %v1338
        %v1595 = vadd.f32 %v1018, %v1339
        %v1596 = vadd.f32 %v1019, %v1340
        %v1597 = vadd.f32 %v1020, %v1341
        %v1598 = vadd.f32 %v1021, %v1342
        %v1599 = vadd.f32 %v1022, %v1343
        %v1600 = vadd.f32 %v1023, %v1344
        %v1601 = vadd.f32 %v1024, %v1345
        %v1602 = vadd.f32 %v1025, %v1346
        %v1603 = vadd.f32 %v1026, %v1347
        %v1604 = vadd.f32 %v1027, %v1348
        %v1605 = vadd.f32 %v1028, %v1349
        %v1606 = vadd.f32 %v1029, %v1350
        %v1607 = vadd.f32 %v1030, %v1351
        %v1608 = vadd.f32 %v1031, %v1352
        %v1609 = vadd.f32 %v1032, %v1353
        %v1610 = vadd.f32 %v1033, %v1354
        %v1611 = vadd.f32 %v1034, %v1355
        %v1612 = vadd.f32 %v1035, %v1356
        %v1613 = vadd.f32 %v1036, %v1357
        %v1614 = vadd.f32 %v1037, %v1358
        %v1615 = vadd.f32 %v1038, %v1359
        %v1616 = vadd.f32 %v1039, %v1360
        %v1617 = vadd.f32 %v1040, %v1361
        %v1618 = vadd.f32 %v1041, %v1362
        %v1619 = vadd.f32 %v1042, %v1363
        %v1620 = vadd.f32 %v1043, %v1364
        %v1621 = vadd.f32 %v1044, %v1365
        %v1622 = vadd.f32 %v1045, %v1366
        %v1623 = vadd.f32 %v1046, %v1367
        %v1624 = vadd.f32 %v1047, %v1368
        %v1625 = vadd.f32 %v1048, %v1369
        %v1626 = vadd.f32 %v1049, %v1370
        %v1627 = vadd.f32 %v1050, %v1371
        %v1628 = vadd.f32 %v1051, %v1372
        %v1629 = vadd.f32 %v1052, %v1373
        %v1630 = vadd.f32 %v1053, %v1374
        %v1631 = vadd.f32 %v1054, %v1375
        %v1632 = vadd.f32 %v1055, %v1376
        %v1633 = vadd.f32 %v1056, %v1377
        %v1634 = vadd.f32 %v1057, %v1378
        %v1635 = vadd.f32 %v1058, %v1379
        %v1636 = vadd.f32 %v1059, %v1380
        %v1637 = vadd.f32 %v1060, %v1381
        %v1638 = vadd.f32 %v1061, %v1382
        %v1639 = vadd.f32 %v1062, %v1383
        %v1640 = vadd.f32 %v1063, %v1384
        %v1641 = vadd.f32 %v1064, %v1385
        %v1642 = vadd.f32 %v1065, %v1386
        %v1643 = vadd.f32 %v1066, %v1387
        %v1644 = vadd.f32 %v1067, %v1388
        %v1645 = vadd.f32 %v1068, %v1389
        %v1646 = vadd.f32 %v1069, %v1390
        %v1647 = vadd.f32 %v1070, %v1391
        %v1648 = vadd.f32 %v1071, %v1392
        %v1649 = vadd.f32 %v1072, %v1393
        %v1650 = vadd.f32 %v1073, %v1394
        %v1651 = vadd.f32 %v1074, %v1395
        %v1652 = vadd.f32 %v1075, %v1396
        %s1653 = scalar_lea.vmem %s315, 512 [#allocation2]
        %v1654 = vld [vmem:[%s1653] sm:$0xff]
        %v1655 = vld [vmem:[%s1653 + $0x8] sm:$0xff]
        %v1656 = vld [vmem:[%s1653 + $0x10] sm:$0xff]
        %v1657 = vld [vmem:[%s1653 + $0x18] sm:$0xff]
        %v1658 = vld [vmem:[%s1653 + $0x20] sm:$0xff]
        %v1659 = vld [vmem:[%s1653 + $0x28] sm:$0xff]
        %v1660 = vld [vmem:[%s1653 + $0x30] sm:$0xff]
        %v1661 = vld [vmem:[%s1653 + $0x38] sm:$0xff]
        %v1662 = vld [vmem:[%s1653 + $0x40] sm:$0xff]
        %v1663 = vld [vmem:[%s1653 + $0x48] sm:$0xff]
        %v1664 = vld [vmem:[%s1653 + $0x50] sm:$0xff]
        %v1665 = vld [vmem:[%s1653 + $0x58] sm:$0xff]
        %v1666 = vld [vmem:[%s1653 + $0x60] sm:$0xff]
        %v1667 = vld [vmem:[%s1653 + $0x68] sm:$0xff]
        %v1668 = vld [vmem:[%s1653 + $0x70] sm:$0xff]
        %v1669 = vld [vmem:[%s1653 + $0x78] sm:$0xff]
        %v1670 = vld [vmem:[%s1653 + $0x80] sm:$0xff]
        %v1671 = vld [vmem:[%s1653 + $0x88] sm:$0xff]
        %v1672 = vld [vmem:[%s1653 + $0x90] sm:$0xff]
        %v1673 = vld [vmem:[%s1653 + $0x98] sm:$0xff]
        %v1674 = vld [vmem:[%s1653 + $0xa0] sm:$0xff]
        %v1675 = vld [vmem:[%s1653 + $0xa8] sm:$0xff]
        %v1676 = vld [vmem:[%s1653 + $0xb0] sm:$0xff]
        %v1677 = vld [vmem:[%s1653 + $0xb8] sm:$0xff]
        %v1678 = vld [vmem:[%s1653 + $0xc0] sm:$0xff]
        %v1679 = vld [vmem:[%s1653 + $0xc8] sm:$0xff]
        %v1680 = vld [vmem:[%s1653 + $0xd0] sm:$0xff]
        %v1681 = vld [vmem:[%s1653 + $0xd8] sm:$0xff]
        %v1682 = vld [vmem:[%s1653 + $0xe0] sm:$0xff]
        %v1683 = vld [vmem:[%s1653 + $0xe8] sm:$0xff]
        %v1684 = vld [vmem:[%s1653 + $0xf0] sm:$0xff]
        %v1685 = vld [vmem:[%s1653 + $0xf8] sm:$0xff]
        %1686 = vset.pattern.permute.xlu0 2
        %1687 = vperm.xlu0 %1686, %v503
        %v1688 = vpop.permute.xlu0 %1687
        %1690 = vset.pattern.permute.xlu0 2
        %1691 = vperm.xlu0 %1690, %v507
        %v1692 = vpop.permute.xlu0 %1691
        %1694 = vset.pattern.permute.xlu0 2
        %1695 = vperm.xlu0 %1694, %v511
        %v1696 = vpop.permute.xlu0 %1695
        %1698 = vset.pattern.permute.xlu0 2
        %1699 = vperm.xlu0 %1698, %v515
        %v1700 = vpop.permute.xlu0 %1699
        %1702 = vset.pattern.permute.xlu0 2
        %1703 = vperm.xlu0 %1702, %v519
        %v1704 = vpop.permute.xlu0 %1703
        %1706 = vset.pattern.permute.xlu0 2
        %1707 = vperm.xlu0 %1706, %v523
        %v1708 = vpop.permute.xlu0 %1707
        %1710 = vset.pattern.permute.xlu0 2
        %1711 = vperm.xlu0 %1710, %v527
        %v1712 = vpop.permute.xlu0 %1711
        %1714 = vset.pattern.permute.xlu0 2
        %1715 = vperm.xlu0 %1714, %v531
        %v1716 = vpop.permute.xlu0 %1715
        %v1718 = vmul.f32 %v1688, %v1654
        %v1719 = vmul.f32 %v1688, %v1655
        %v1720 = vmul.f32 %v1688, %v1656
        %v1721 = vmul.f32 %v1688, %v1657
        %v1722 = vmul.f32 %v1688, %v1658
        %v1723 = vmul.f32 %v1688, %v1659
        %v1724 = vmul.f32 %v1688, %v1660
        %v1725 = vmul.f32 %v1688, %v1661
        %v1726 = vmul.f32 %v1688, %v1662
        %v1727 = vmul.f32 %v1688, %v1663
        %v1728 = vmul.f32 %v1688, %v1664
        %v1729 = vmul.f32 %v1688, %v1665
        %v1730 = vmul.f32 %v1688, %v1666
        %v1731 = vmul.f32 %v1688, %v1667
        %v1732 = vmul.f32 %v1688, %v1668
        %v1733 = vmul.f32 %v1688, %v1669
        %v1734 = vmul.f32 %v1688, %v1670
        %v1735 = vmul.f32 %v1688, %v1671
        %v1736 = vmul.f32 %v1688, %v1672
        %v1737 = vmul.f32 %v1688, %v1673
        %v1738 = vmul.f32 %v1688, %v1674
        %v1739 = vmul.f32 %v1688, %v1675
        %v1740 = vmul.f32 %v1688, %v1676
        %v1741 = vmul.f32 %v1688, %v1677
        %v1742 = vmul.f32 %v1688, %v1678
        %v1743 = vmul.f32 %v1688, %v1679
        %v1744 = vmul.f32 %v1688, %v1680
        %v1745 = vmul.f32 %v1688, %v1681
        %v1746 = vmul.f32 %v1688, %v1682
        %v1747 = vmul.f32 %v1688, %v1683
        %v1748 = vmul.f32 %v1688, %v1684
        %v1749 = vmul.f32 %v1688, %v1685
        %v1750 = vmul.f32 %v1692, %v1654
        %v1751 = vmul.f32 %v1692, %v1655
        %v1752 = vmul.f32 %v1692, %v1656
        %v1753 = vmul.f32 %v1692, %v1657
        %v1754 = vmul.f32 %v1692, %v1658
        %v1755 = vmul.f32 %v1692, %v1659
        %v1756 = vmul.f32 %v1692, %v1660
        %v1757 = vmul.f32 %v1692, %v1661
        %v1758 = vmul.f32 %v1692, %v1662
        %v1759 = vmul.f32 %v1692, %v1663
        %v1760 = vmul.f32 %v1692, %v1664
        %v1761 = vmul.f32 %v1692, %v1665
        %v1762 = vmul.f32 %v1692, %v1666
        %v1763 = vmul.f32 %v1692, %v1667
        %v1764 = vmul.f32 %v1692, %v1668
        %v1765 = vmul.f32 %v1692, %v1669
        %v1766 = vmul.f32 %v1692, %v1670
        %v1767 = vmul.f32 %v1692, %v1671
        %v1768 = vmul.f32 %v1692, %v1672
        %v1769 = vmul.f32 %v1692, %v1673
        %v1770 = vmul.f32 %v1692, %v1674
        %v1771 = vmul.f32 %v1692, %v1675
        %v1772 = vmul.f32 %v1692, %v1676
        %v1773 = vmul.f32 %v1692, %v1677
        %v1774 = vmul.f32 %v1692, %v1678
        %v1775 = vmul.f32 %v1692, %v1679
        %v1776 = vmul.f32 %v1692, %v1680
        %v1777 = vmul.f32 %v1692, %v1681
        %v1778 = vmul.f32 %v1692, %v1682
        %v1779 = vmul.f32 %v1692, %v1683
        %v1780 = vmul.f32 %v1692, %v1684
        %v1781 = vmul.f32 %v1692, %v1685
        %v1782 = vmul.f32 %v1696, %v1654
        %v1783 = vmul.f32 %v1696, %v1655
        %v1784 = vmul.f32 %v1696, %v1656
        %v1785 = vmul.f32 %v1696, %v1657
        %v1786 = vmul.f32 %v1696, %v1658
        %v1787 = vmul.f32 %v1696, %v1659
        %v1788 = vmul.f32 %v1696, %v1660
        %v1789 = vmul.f32 %v1696, %v1661
        %v1790 = vmul.f32 %v1696, %v1662
        %v1791 = vmul.f32 %v1696, %v1663
        %v1792 = vmul.f32 %v1696, %v1664
        %v1793 = vmul.f32 %v1696, %v1665
        %v1794 = vmul.f32 %v1696, %v1666
        %v1795 = vmul.f32 %v1696, %v1667
        %v1796 = vmul.f32 %v1696, %v1668
        %v1797 = vmul.f32 %v1696, %v1669
        %v1798 = vmul.f32 %v1696, %v1670
        %v1799 = vmul.f32 %v1696, %v1671
        %v1800 = vmul.f32 %v1696, %v1672
        %v1801 = vmul.f32 %v1696, %v1673
        %v1802 = vmul.f32 %v1696, %v1674
        %v1803 = vmul.f32 %v1696, %v1675
        %v1804 = vmul.f32 %v1696, %v1676
        %v1805 = vmul.f32 %v1696, %v1677
        %v1806 = vmul.f32 %v1696, %v1678
        %v1807 = vmul.f32 %v1696, %v1679
        %v1808 = vmul.f32 %v1696, %v1680
        %v1809 = vmul.f32 %v1696, %v1681
        %v1810 = vmul.f32 %v1696, %v1682
        %v1811 = vmul.f32 %v1696, %v1683
        %v1812 = vmul.f32 %v1696, %v1684
        %v1813 = vmul.f32 %v1696, %v1685
        %v1814 = vmul.f32 %v1700, %v1654
        %v1815 = vmul.f32 %v1700, %v1655
        %v1816 = vmul.f32 %v1700, %v1656
        %v1817 = vmul.f32 %v1700, %v1657
        %v1818 = vmul.f32 %v1700, %v1658
        %v1819 = vmul.f32 %v1700, %v1659
        %v1820 = vmul.f32 %v1700, %v1660
        %v1821 = vmul.f32 %v1700, %v1661
        %v1822 = vmul.f32 %v1700, %v1662
        %v1823 = vmul.f32 %v1700, %v1663
        %v1824 = vmul.f32 %v1700, %v1664
        %v1825 = vmul.f32 %v1700, %v1665
        %v1826 = vmul.f32 %v1700, %v1666
        %v1827 = vmul.f32 %v1700, %v1667
        %v1828 = vmul.f32 %v1700, %v1668
        %v1829 = vmul.f32 %v1700, %v1669
        %v1830 = vmul.f32 %v1700, %v1670
        %v1831 = vmul.f32 %v1700, %v1671
        %v1832 = vmul.f32 %v1700, %v1672
        %v1833 = vmul.f32 %v1700, %v1673
        %v1834 = vmul.f32 %v1700, %v1674
        %v1835 = vmul.f32 %v1700, %v1675
        %v1836 = vmul.f32 %v1700, %v1676
        %v1837 = vmul.f32 %v1700, %v1677
        %v1838 = vmul.f32 %v1700, %v1678
        %v1839 = vmul.f32 %v1700, %v1679
        %v1840 = vmul.f32 %v1700, %v1680
        %v1841 = vmul.f32 %v1700, %v1681
        %v1842 = vmul.f32 %v1700, %v1682
        %v1843 = vmul.f32 %v1700, %v1683
        %v1844 = vmul.f32 %v1700, %v1684
        %v1845 = vmul.f32 %v1700, %v1685
        %v1846 = vmul.f32 %v1704, %v1654
        %v1847 = vmul.f32 %v1704, %v1655
        %v1848 = vmul.f32 %v1704, %v1656
        %v1849 = vmul.f32 %v1704, %v1657
        %v1850 = vmul.f32 %v1704, %v1658
        %v1851 = vmul.f32 %v1704, %v1659
        %v1852 = vmul.f32 %v1704, %v1660
        %v1853 = vmul.f32 %v1704, %v1661
        %v1854 = vmul.f32 %v1704, %v1662
        %v1855 = vmul.f32 %v1704, %v1663
        %v1856 = vmul.f32 %v1704, %v1664
        %v1857 = vmul.f32 %v1704, %v1665
        %v1858 = vmul.f32 %v1704, %v1666
        %v1859 = vmul.f32 %v1704, %v1667
        %v1860 = vmul.f32 %v1704, %v1668
        %v1861 = vmul.f32 %v1704, %v1669
        %v1862 = vmul.f32 %v1704, %v1670
        %v1863 = vmul.f32 %v1704, %v1671
        %v1864 = vmul.f32 %v1704, %v1672
        %v1865 = vmul.f32 %v1704, %v1673
        %v1866 = vmul.f32 %v1704, %v1674
        %v1867 = vmul.f32 %v1704, %v1675
        %v1868 = vmul.f32 %v1704, %v1676
        %v1869 = vmul.f32 %v1704, %v1677
        %v1870 = vmul.f32 %v1704, %v1678
        %v1871 = vmul.f32 %v1704, %v1679
        %v1872 = vmul.f32 %v1704, %v1680
        %v1873 = vmul.f32 %v1704, %v1681
        %v1874 = vmul.f32 %v1704, %v1682
        %v1875 = vmul.f32 %v1704, %v1683
        %v1876 = vmul.f32 %v1704, %v1684
        %v1877 = vmul.f32 %v1704, %v1685
        %v1878 = vmul.f32 %v1708, %v1654
        %v1879 = vmul.f32 %v1708, %v1655
        %v1880 = vmul.f32 %v1708, %v1656
        %v1881 = vmul.f32 %v1708, %v1657
        %v1882 = vmul.f32 %v1708, %v1658
        %v1883 = vmul.f32 %v1708, %v1659
        %v1884 = vmul.f32 %v1708, %v1660
        %v1885 = vmul.f32 %v1708, %v1661
        %v1886 = vmul.f32 %v1708, %v1662
        %v1887 = vmul.f32 %v1708, %v1663
        %v1888 = vmul.f32 %v1708, %v1664
        %v1889 = vmul.f32 %v1708, %v1665
        %v1890 = vmul.f32 %v1708, %v1666
        %v1891 = vmul.f32 %v1708, %v1667
        %v1892 = vmul.f32 %v1708, %v1668
        %v1893 = vmul.f32 %v1708, %v1669
        %v1894 = vmul.f32 %v1708, %v1670
        %v1895 = vmul.f32 %v1708, %v1671
        %v1896 = vmul.f32 %v1708, %v1672
        %v1897 = vmul.f32 %v1708, %v1673
        %v1898 = vmul.f32 %v1708, %v1674
        %v1899 = vmul.f32 %v1708, %v1675
        %v1900 = vmul.f32 %v1708, %v1676
        %v1901 = vmul.f32 %v1708, %v1677
        %v1902 = vmul.f32 %v1708, %v1678
        %v1903 = vmul.f32 %v1708, %v1679
        %v1904 = vmul.f32 %v1708, %v1680
        %v1905 = vmul.f32 %v1708, %v1681
        %v1906 = vmul.f32 %v1708, %v1682
        %v1907 = vmul.f32 %v1708, %v1683
        %v1908 = vmul.f32 %v1708, %v1684
        %v1909 = vmul.f32 %v1708, %v1685
        %v1910 = vmul.f32 %v1712, %v1654
        %v1911 = vmul.f32 %v1712, %v1655
        %v1912 = vmul.f32 %v1712, %v1656
        %v1913 = vmul.f32 %v1712, %v1657
        %v1914 = vmul.f32 %v1712, %v1658
        %v1915 = vmul.f32 %v1712, %v1659
        %v1916 = vmul.f32 %v1712, %v1660
        %v1917 = vmul.f32 %v1712, %v1661
        %v1918 = vmul.f32 %v1712, %v1662
        %v1919 = vmul.f32 %v1712, %v1663
        %v1920 = vmul.f32 %v1712, %v1664
        %v1921 = vmul.f32 %v1712, %v1665
        %v1922 = vmul.f32 %v1712, %v1666
        %v1923 = vmul.f32 %v1712, %v1667
        %v1924 = vmul.f32 %v1712, %v1668
        %v1925 = vmul.f32 %v1712, %v1669
        %v1926 = vmul.f32 %v1712, %v1670
        %v1927 = vmul.f32 %v1712, %v1671
        %v1928 = vmul.f32 %v1712, %v1672
        %v1929 = vmul.f32 %v1712, %v1673
        %v1930 = vmul.f32 %v1712, %v1674
        %v1931 = vmul.f32 %v1712, %v1675
        %v1932 = vmul.f32 %v1712, %v1676
        %v1933 = vmul.f32 %v1712, %v1677
        %v1934 = vmul.f32 %v1712, %v1678
        %v1935 = vmul.f32 %v1712, %v1679
        %v1936 = vmul.f32 %v1712, %v1680
        %v1937 = vmul.f32 %v1712, %v1681
        %v1938 = vmul.f32 %v1712, %v1682
        %v1939 = vmul.f32 %v1712, %v1683
        %v1940 = vmul.f32 %v1712, %v1684
        %v1941 = vmul.f32 %v1712, %v1685
        %v1942 = vmul.f32 %v1716, %v1654
        %v1943 = vmul.f32 %v1716, %v1655
        %v1944 = vmul.f32 %v1716, %v1656
        %v1945 = vmul.f32 %v1716, %v1657
        %v1946 = vmul.f32 %v1716, %v1658
        %v1947 = vmul.f32 %v1716, %v1659
        %v1948 = vmul.f32 %v1716, %v1660
        %v1949 = vmul.f32 %v1716, %v1661
        %v1950 = vmul.f32 %v1716, %v1662
        %v1951 = vmul.f32 %v1716, %v1663
        %v1952 = vmul.f32 %v1716, %v1664
        %v1953 = vmul.f32 %v1716, %v1665
        %v1954 = vmul.f32 %v1716, %v1666
        %v1955 = vmul.f32 %v1716, %v1667
        %v1956 = vmul.f32 %v1716, %v1668
        %v1957 = vmul.f32 %v1716, %v1669
        %v1958 = vmul.f32 %v1716, %v1670
        %v1959 = vmul.f32 %v1716, %v1671
        %v1960 = vmul.f32 %v1716, %v1672
        %v1961 = vmul.f32 %v1716, %v1673
        %v1962 = vmul.f32 %v1716, %v1674
        %v1963 = vmul.f32 %v1716, %v1675
        %v1964 = vmul.f32 %v1716, %v1676
        %v1965 = vmul.f32 %v1716, %v1677
        %v1966 = vmul.f32 %v1716, %v1678
        %v1967 = vmul.f32 %v1716, %v1679
        %v1968 = vmul.f32 %v1716, %v1680
        %v1969 = vmul.f32 %v1716, %v1681
        %v1970 = vmul.f32 %v1716, %v1682
        %v1971 = vmul.f32 %v1716, %v1683
        %v1972 = vmul.f32 %v1716, %v1684
        %v1973 = vmul.f32 %v1716, %v1685
        %v1974 = vadd.f32 %v1397, %v1718
        %v1975 = vadd.f32 %v1398, %v1719
        %v1976 = vadd.f32 %v1399, %v1720
        %v1977 = vadd.f32 %v1400, %v1721
        %v1978 = vadd.f32 %v1401, %v1722
        %v1979 = vadd.f32 %v1402, %v1723
        %v1980 = vadd.f32 %v1403, %v1724
        %v1981 = vadd.f32 %v1404, %v1725
        %v1982 = vadd.f32 %v1405, %v1726
        %v1983 = vadd.f32 %v1406, %v1727
        %v1984 = vadd.f32 %v1407, %v1728
        %v1985 = vadd.f32 %v1408, %v1729
        %v1986 = vadd.f32 %v1409, %v1730
        %v1987 = vadd.f32 %v1410, %v1731
        %v1988 = vadd.f32 %v1411, %v1732
        %v1989 = vadd.f32 %v1412, %v1733
        %v1990 = vadd.f32 %v1413, %v1734
        %v1991 = vadd.f32 %v1414, %v1735
        %v1992 = vadd.f32 %v1415, %v1736
        %v1993 = vadd.f32 %v1416, %v1737
        %v1994 = vadd.f32 %v1417, %v1738
        %v1995 = vadd.f32 %v1418, %v1739
        %v1996 = vadd.f32 %v1419, %v1740
        %v1997 = vadd.f32 %v1420, %v1741
        %v1998 = vadd.f32 %v1421, %v1742
        %v1999 = vadd.f32 %v1422, %v1743
        %v2000 = vadd.f32 %v1423, %v1744
        %v2001 = vadd.f32 %v1424, %v1745
        %v2002 = vadd.f32 %v1425, %v1746
        %v2003 = vadd.f32 %v1426, %v1747
        %v2004 = vadd.f32 %v1427, %v1748
        %v2005 = vadd.f32 %v1428, %v1749
        %v2006 = vadd.f32 %v1429, %v1750
        %v2007 = vadd.f32 %v1430, %v1751
        %v2008 = vadd.f32 %v1431, %v1752
        %v2009 = vadd.f32 %v1432, %v1753
        %v2010 = vadd.f32 %v1433, %v1754
        %v2011 = vadd.f32 %v1434, %v1755
        %v2012 = vadd.f32 %v1435, %v1756
        %v2013 = vadd.f32 %v1436, %v1757
        %v2014 = vadd.f32 %v1437, %v1758
        %v2015 = vadd.f32 %v1438, %v1759
        %v2016 = vadd.f32 %v1439, %v1760
        %v2017 = vadd.f32 %v1440, %v1761
        %v2018 = vadd.f32 %v1441, %v1762
        %v2019 = vadd.f32 %v1442, %v1763
        %v2020 = vadd.f32 %v1443, %v1764
        %v2021 = vadd.f32 %v1444, %v1765
        %v2022 = vadd.f32 %v1445, %v1766
        %v2023 = vadd.f32 %v1446, %v1767
        %v2024 = vadd.f32 %v1447, %v1768
        %v2025 = vadd.f32 %v1448, %v1769
        %v2026 = vadd.f32 %v1449, %v1770
        %v2027 = vadd.f32 %v1450, %v1771
        %v2028 = vadd.f32 %v1451, %v1772
        %v2029 = vadd.f32 %v1452, %v1773
        %v2030 = vadd.f32 %v1453, %v1774
        %v2031 = vadd.f32 %v1454, %v1775
        %v2032 = vadd.f32 %v1455, %v1776
        %v2033 = vadd.f32 %v1456, %v1777
        %v2034 = vadd.f32 %v1457, %v1778
        %v2035 = vadd.f32 %v1458, %v1779
        %v2036 = vadd.f32 %v1459, %v1780
        %v2037 = vadd.f32 %v1460, %v1781
        %v2038 = vadd.f32 %v1461, %v1782
        %v2039 = vadd.f32 %v1462, %v1783
        %v2040 = vadd.f32 %v1463, %v1784
        %v2041 = vadd.f32 %v1464, %v1785
        %v2042 = vadd.f32 %v1465, %v1786
        %v2043 = vadd.f32 %v1466, %v1787
        %v2044 = vadd.f32 %v1467, %v1788
        %v2045 = vadd.f32 %v1468, %v1789
        %v2046 = vadd.f32 %v1469, %v1790
        %v2047 = vadd.f32 %v1470, %v1791
        %v2048 = vadd.f32 %v1471, %v1792
        %v2049 = vadd.f32 %v1472, %v1793
        %v2050 = vadd.f32 %v1473, %v1794
        %v2051 = vadd.f32 %v1474, %v1795
        %v2052 = vadd.f32 %v1475, %v1796
        %v2053 = vadd.f32 %v1476, %v1797
        %v2054 = vadd.f32 %v1477, %v1798
        %v2055 = vadd.f32 %v1478, %v1799
        %v2056 = vadd.f32 %v1479, %v1800
        %v2057 = vadd.f32 %v1480, %v1801
        %v2058 = vadd.f32 %v1481, %v1802
        %v2059 = vadd.f32 %v1482, %v1803
        %v2060 = vadd.f32 %v1483, %v1804
        %v2061 = vadd.f32 %v1484, %v1805
        %v2062 = vadd.f32 %v1485, %v1806
        %v2063 = vadd.f32 %v1486, %v1807
        %v2064 = vadd.f32 %v1487, %v1808
        %v2065 = vadd.f32 %v1488, %v1809
        %v2066 = vadd.f32 %v1489, %v1810
        %v2067 = vadd.f32 %v1490, %v1811
        %v2068 = vadd.f32 %v1491, %v1812
        %v2069 = vadd.f32 %v1492, %v1813
        %v2070 = vadd.f32 %v1493, %v1814
        %v2071 = vadd.f32 %v1494, %v1815
        %v2072 = vadd.f32 %v1495, %v1816
        %v2073 = vadd.f32 %v1496, %v1817
        %v2074 = vadd.f32 %v1497, %v1818
        %v2075 = vadd.f32 %v1498, %v1819
        %v2076 = vadd.f32 %v1499, %v1820
        %v2077 = vadd.f32 %v1500, %v1821
        %v2078 = vadd.f32 %v1501, %v1822
        %v2079 = vadd.f32 %v1502, %v1823
        %v2080 = vadd.f32 %v1503, %v1824
        %v2081 = vadd.f32 %v1504, %v1825
        %v2082 = vadd.f32 %v1505, %v1826
        %v2083 = vadd.f32 %v1506, %v1827
        %v2084 = vadd.f32 %v1507, %v1828
        %v2085 = vadd.f32 %v1508, %v1829
        %v2086 = vadd.f32 %v1509, %v1830
        %v2087 = vadd.f32 %v1510, %v1831
        %v2088 = vadd.f32 %v1511, %v1832
        %v2089 = vadd.f32 %v1512, %v1833
        %v2090 = vadd.f32 %v1513, %v1834
        %v2091 = vadd.f32 %v1514, %v1835
        %v2092 = vadd.f32 %v1515, %v1836
        %v2093 = vadd.f32 %v1516, %v1837
        %v2094 = vadd.f32 %v1517, %v1838
        %v2095 = vadd.f32 %v1518, %v1839
        %v2096 = vadd.f32 %v1519, %v1840
        %v2097 = vadd.f32 %v1520, %v1841
        %v2098 = vadd.f32 %v1521, %v1842
        %v2099 = vadd.f32 %v1522, %v1843
        %v2100 = vadd.f32 %v1523, %v1844
        %v2101 = vadd.f32 %v1524, %v1845
        %v2102 = vadd.f32 %v1525, %v1846
        %v2103 = vadd.f32 %v1526, %v1847
        %v2104 = vadd.f32 %v1527, %v1848
        %v2105 = vadd.f32 %v1528, %v1849
        %v2106 = vadd.f32 %v1529, %v1850
        %v2107 = vadd.f32 %v1530, %v1851
        %v2108 = vadd.f32 %v1531, %v1852
        %v2109 = vadd.f32 %v1532, %v1853
        %v2110 = vadd.f32 %v1533, %v1854
        %v2111 = vadd.f32 %v1534, %v1855
        %v2112 = vadd.f32 %v1535, %v1856
        %v2113 = vadd.f32 %v1536, %v1857
        %v2114 = vadd.f32 %v1537, %v1858
        %v2115 = vadd.f32 %v1538, %v1859
        %v2116 = vadd.f32 %v1539, %v1860
        %v2117 = vadd.f32 %v1540, %v1861
        %v2118 = vadd.f32 %v1541, %v1862
        %v2119 = vadd.f32 %v1542, %v1863
        %v2120 = vadd.f32 %v1543, %v1864
        %v2121 = vadd.f32 %v1544, %v1865
        %v2122 = vadd.f32 %v1545, %v1866
        %v2123 = vadd.f32 %v1546, %v1867
        %v2124 = vadd.f32 %v1547, %v1868
        %v2125 = vadd.f32 %v1548, %v1869
        %v2126 = vadd.f32 %v1549, %v1870
        %v2127 = vadd.f32 %v1550, %v1871
        %v2128 = vadd.f32 %v1551, %v1872
        %v2129 = vadd.f32 %v1552, %v1873
        %v2130 = vadd.f32 %v1553, %v1874
        %v2131 = vadd.f32 %v1554, %v1875
        %v2132 = vadd.f32 %v1555, %v1876
        %v2133 = vadd.f32 %v1556, %v1877
        %v2134 = vadd.f32 %v1557, %v1878
        %v2135 = vadd.f32 %v1558, %v1879
        %v2136 = vadd.f32 %v1559, %v1880
        %v2137 = vadd.f32 %v1560, %v1881
        %v2138 = vadd.f32 %v1561, %v1882
        %v2139 = vadd.f32 %v1562, %v1883
        %v2140 = vadd.f32 %v1563, %v1884
        %v2141 = vadd.f32 %v1564, %v1885
        %v2142 = vadd.f32 %v1565, %v1886
        %v2143 = vadd.f32 %v1566, %v1887
        %v2144 = vadd.f32 %v1567, %v1888
        %v2145 = vadd.f32 %v1568, %v1889
        %v2146 = vadd.f32 %v1569, %v1890
        %v2147 = vadd.f32 %v1570, %v1891
        %v2148 = vadd.f32 %v1571, %v1892
        %v2149 = vadd.f32 %v1572, %v1893
        %v2150 = vadd.f32 %v1573, %v1894
        %v2151 = vadd.f32 %v1574, %v1895
        %v2152 = vadd.f32 %v1575, %v1896
        %v2153 = vadd.f32 %v1576, %v1897
        %v2154 = vadd.f32 %v1577, %v1898
        %v2155 = vadd.f32 %v1578, %v1899
        %v2156 = vadd.f32 %v1579, %v1900
        %v2157 = vadd.f32 %v1580, %v1901
        %v2158 = vadd.f32 %v1581, %v1902
        %v2159 = vadd.f32 %v1582, %v1903
        %v2160 = vadd.f32 %v1583, %v1904
        %v2161 = vadd.f32 %v1584, %v1905
        %v2162 = vadd.f32 %v1585, %v1906
        %v2163 = vadd.f32 %v1586, %v1907
        %v2164 = vadd.f32 %v1587, %v1908
        %v2165 = vadd.f32 %v1588, %v1909
        %v2166 = vadd.f32 %v1589, %v1910
        %v2167 = vadd.f32 %v1590, %v1911
        %v2168 = vadd.f32 %v1591, %v1912
        %v2169 = vadd.f32 %v1592, %v1913
        %v2170 = vadd.f32 %v1593, %v1914
        %v2171 = vadd.f32 %v1594, %v1915
        %v2172 = vadd.f32 %v1595, %v1916
        %v2173 = vadd.f32 %v1596, %v1917
        %v2174 = vadd.f32 %v1597, %v1918
        %v2175 = vadd.f32 %v1598, %v1919
        %v2176 = vadd.f32 %v1599, %v1920
        %v2177 = vadd.f32 %v1600, %v1921
        %v2178 = vadd.f32 %v1601, %v1922
        %v2179 = vadd.f32 %v1602, %v1923
        %v2180 = vadd.f32 %v1603, %v1924
        %v2181 = vadd.f32 %v1604, %v1925
        %v2182 = vadd.f32 %v1605, %v1926
        %v2183 = vadd.f32 %v1606, %v1927
        %v2184 = vadd.f32 %v1607, %v1928
        %v2185 = vadd.f32 %v1608, %v1929
        %v2186 = vadd.f32 %v1609, %v1930
        %v2187 = vadd.f32 %v1610, %v1931
        %v2188 = vadd.f32 %v1611, %v1932
        %v2189 = vadd.f32 %v1612, %v1933
        %v2190 = vadd.f32 %v1613, %v1934
        %v2191 = vadd.f32 %v1614, %v1935
        %v2192 = vadd.f32 %v1615, %v1936
        %v2193 = vadd.f32 %v1616, %v1937
        %v2194 = vadd.f32 %v1617, %v1938
        %v2195 = vadd.f32 %v1618, %v1939
        %v2196 = vadd.f32 %v1619, %v1940
        %v2197 = vadd.f32 %v1620, %v1941
        %v2198 = vadd.f32 %v1621, %v1942
        %v2199 = vadd.f32 %v1622, %v1943
        %v2200 = vadd.f32 %v1623, %v1944
        %v2201 = vadd.f32 %v1624, %v1945
        %v2202 = vadd.f32 %v1625, %v1946
        %v2203 = vadd.f32 %v1626, %v1947
        %v2204 = vadd.f32 %v1627, %v1948
        %v2205 = vadd.f32 %v1628, %v1949
        %v2206 = vadd.f32 %v1629, %v1950
        %v2207 = vadd.f32 %v1630, %v1951
        %v2208 = vadd.f32 %v1631, %v1952
        %v2209 = vadd.f32 %v1632, %v1953
        %v2210 = vadd.f32 %v1633, %v1954
        %v2211 = vadd.f32 %v1634, %v1955
        %v2212 = vadd.f32 %v1635, %v1956
        %v2213 = vadd.f32 %v1636, %v1957
        %v2214 = vadd.f32 %v1637, %v1958
        %v2215 = vadd.f32 %v1638, %v1959
        %v2216 = vadd.f32 %v1639, %v1960
        %v2217 = vadd.f32 %v1640, %v1961
        %v2218 = vadd.f32 %v1641, %v1962
        %v2219 = vadd.f32 %v1642, %v1963
        %v2220 = vadd.f32 %v1643, %v1964
        %v2221 = vadd.f32 %v1644, %v1965
        %v2222 = vadd.f32 %v1645, %v1966
        %v2223 = vadd.f32 %v1646, %v1967
        %v2224 = vadd.f32 %v1647, %v1968
        %v2225 = vadd.f32 %v1648, %v1969
        %v2226 = vadd.f32 %v1649, %v1970
        %v2227 = vadd.f32 %v1650, %v1971
        %v2228 = vadd.f32 %v1651, %v1972
        %v2229 = vadd.f32 %v1652, %v1973
        %s2230 = scalar_lea.vmem %s315, 768 [#allocation2]
        %v2231 = vld [vmem:[%s2230] sm:$0xff]
        %v2232 = vld [vmem:[%s2230 + $0x8] sm:$0xff]
        %v2233 = vld [vmem:[%s2230 + $0x10] sm:$0xff]
        %v2234 = vld [vmem:[%s2230 + $0x18] sm:$0xff]
        %v2235 = vld [vmem:[%s2230 + $0x20] sm:$0xff]
        %v2236 = vld [vmem:[%s2230 + $0x28] sm:$0xff]
        %v2237 = vld [vmem:[%s2230 + $0x30] sm:$0xff]
        %v2238 = vld [vmem:[%s2230 + $0x38] sm:$0xff]
        %v2239 = vld [vmem:[%s2230 + $0x40] sm:$0xff]
        %v2240 = vld [vmem:[%s2230 + $0x48] sm:$0xff]
        %v2241 = vld [vmem:[%s2230 + $0x50] sm:$0xff]
        %v2242 = vld [vmem:[%s2230 + $0x58] sm:$0xff]
        %v2243 = vld [vmem:[%s2230 + $0x60] sm:$0xff]
        %v2244 = vld [vmem:[%s2230 + $0x68] sm:$0xff]
        %v2245 = vld [vmem:[%s2230 + $0x70] sm:$0xff]
        %v2246 = vld [vmem:[%s2230 + $0x78] sm:$0xff]
        %v2247 = vld [vmem:[%s2230 + $0x80] sm:$0xff]
        %v2248 = vld [vmem:[%s2230 + $0x88] sm:$0xff]
        %v2249 = vld [vmem:[%s2230 + $0x90] sm:$0xff]
        %v2250 = vld [vmem:[%s2230 + $0x98] sm:$0xff]
        %v2251 = vld [vmem:[%s2230 + $0xa0] sm:$0xff]
        %v2252 = vld [vmem:[%s2230 + $0xa8] sm:$0xff]
        %v2253 = vld [vmem:[%s2230 + $0xb0] sm:$0xff]
        %v2254 = vld [vmem:[%s2230 + $0xb8] sm:$0xff]
        %v2255 = vld [vmem:[%s2230 + $0xc0] sm:$0xff]
        %v2256 = vld [vmem:[%s2230 + $0xc8] sm:$0xff]
        %v2257 = vld [vmem:[%s2230 + $0xd0] sm:$0xff]
        %v2258 = vld [vmem:[%s2230 + $0xd8] sm:$0xff]
        %v2259 = vld [vmem:[%s2230 + $0xe0] sm:$0xff]
        %v2260 = vld [vmem:[%s2230 + $0xe8] sm:$0xff]
        %v2261 = vld [vmem:[%s2230 + $0xf0] sm:$0xff]
        %v2262 = vld [vmem:[%s2230 + $0xf8] sm:$0xff]
        %2263 = vset.pattern.permute.xlu0 3
        %2264 = vperm.xlu0 %2263, %v503
        %v2265 = vpop.permute.xlu0 %2264
        %2267 = vset.pattern.permute.xlu0 3
        %2268 = vperm.xlu0 %2267, %v507
        %v2269 = vpop.permute.xlu0 %2268
        %2271 = vset.pattern.permute.xlu0 3
        %2272 = vperm.xlu0 %2271, %v511
        %v2273 = vpop.permute.xlu0 %2272
        %2275 = vset.pattern.permute.xlu0 3
        %2276 = vperm.xlu0 %2275, %v515
        %v2277 = vpop.permute.xlu0 %2276
        %2279 = vset.pattern.permute.xlu0 3
        %2280 = vperm.xlu0 %2279, %v519
        %v2281 = vpop.permute.xlu0 %2280
        %2283 = vset.pattern.permute.xlu0 3
        %2284 = vperm.xlu0 %2283, %v523
        %v2285 = vpop.permute.xlu0 %2284
        %2287 = vset.pattern.permute.xlu0 3
        %2288 = vperm.xlu0 %2287, %v527
        %v2289 = vpop.permute.xlu0 %2288
        %2291 = vset.pattern.permute.xlu0 3
        %2292 = vperm.xlu0 %2291, %v531
        %v2293 = vpop.permute.xlu0 %2292
        %v2295 = vmul.f32 %v2265, %v2231
        %v2296 = vmul.f32 %v2265, %v2232
        %v2297 = vmul.f32 %v2265, %v2233
        %v2298 = vmul.f32 %v2265, %v2234
        %v2299 = vmul.f32 %v2265, %v2235
        %v2300 = vmul.f32 %v2265, %v2236
        %v2301 = vmul.f32 %v2265, %v2237
        %v2302 = vmul.f32 %v2265, %v2238
        %v2303 = vmul.f32 %v2265, %v2239
        %v2304 = vmul.f32 %v2265, %v2240
        %v2305 = vmul.f32 %v2265, %v2241
        %v2306 = vmul.f32 %v2265, %v2242
        %v2307 = vmul.f32 %v2265, %v2243
        %v2308 = vmul.f32 %v2265, %v2244
        %v2309 = vmul.f32 %v2265, %v2245
        %v2310 = vmul.f32 %v2265, %v2246
        %v2311 = vmul.f32 %v2265, %v2247
        %v2312 = vmul.f32 %v2265, %v2248
        %v2313 = vmul.f32 %v2265, %v2249
        %v2314 = vmul.f32 %v2265, %v2250
        %v2315 = vmul.f32 %v2265, %v2251
        %v2316 = vmul.f32 %v2265, %v2252
        %v2317 = vmul.f32 %v2265, %v2253
        %v2318 = vmul.f32 %v2265, %v2254
        %v2319 = vmul.f32 %v2265, %v2255
        %v2320 = vmul.f32 %v2265, %v2256
        %v2321 = vmul.f32 %v2265, %v2257
        %v2322 = vmul.f32 %v2265, %v2258
        %v2323 = vmul.f32 %v2265, %v2259
        %v2324 = vmul.f32 %v2265, %v2260
        %v2325 = vmul.f32 %v2265, %v2261
        %v2326 = vmul.f32 %v2265, %v2262
        %v2327 = vmul.f32 %v2269, %v2231
        %v2328 = vmul.f32 %v2269, %v2232
        %v2329 = vmul.f32 %v2269, %v2233
        %v2330 = vmul.f32 %v2269, %v2234
        %v2331 = vmul.f32 %v2269, %v2235
        %v2332 = vmul.f32 %v2269, %v2236
        %v2333 = vmul.f32 %v2269, %v2237
        %v2334 = vmul.f32 %v2269, %v2238
        %v2335 = vmul.f32 %v2269, %v2239
        %v2336 = vmul.f32 %v2269, %v2240
        %v2337 = vmul.f32 %v2269, %v2241
        %v2338 = vmul.f32 %v2269, %v2242
        %v2339 = vmul.f32 %v2269, %v2243
        %v2340 = vmul.f32 %v2269, %v2244
        %v2341 = vmul.f32 %v2269, %v2245
        %v2342 = vmul.f32 %v2269, %v2246
        %v2343 = vmul.f32 %v2269, %v2247
        %v2344 = vmul.f32 %v2269, %v2248
        %v2345 = vmul.f32 %v2269, %v2249
        %v2346 = vmul.f32 %v2269, %v2250
        %v2347 = vmul.f32 %v2269, %v2251
        %v2348 = vmul.f32 %v2269, %v2252
        %v2349 = vmul.f32 %v2269, %v2253
        %v2350 = vmul.f32 %v2269, %v2254
        %v2351 = vmul.f32 %v2269, %v2255
        %v2352 = vmul.f32 %v2269, %v2256
        %v2353 = vmul.f32 %v2269, %v2257
        %v2354 = vmul.f32 %v2269, %v2258
        %v2355 = vmul.f32 %v2269, %v2259
        %v2356 = vmul.f32 %v2269, %v2260
        %v2357 = vmul.f32 %v2269, %v2261
        %v2358 = vmul.f32 %v2269, %v2262
        %v2359 = vmul.f32 %v2273, %v2231
        %v2360 = vmul.f32 %v2273, %v2232
        %v2361 = vmul.f32 %v2273, %v2233
        %v2362 = vmul.f32 %v2273, %v2234
        %v2363 = vmul.f32 %v2273, %v2235
        %v2364 = vmul.f32 %v2273, %v2236
        %v2365 = vmul.f32 %v2273, %v2237
        %v2366 = vmul.f32 %v2273, %v2238
        %v2367 = vmul.f32 %v2273, %v2239
        %v2368 = vmul.f32 %v2273, %v2240
        %v2369 = vmul.f32 %v2273, %v2241
        %v2370 = vmul.f32 %v2273, %v2242
        %v2371 = vmul.f32 %v2273, %v2243
        %v2372 = vmul.f32 %v2273, %v2244
        %v2373 = vmul.f32 %v2273, %v2245
        %v2374 = vmul.f32 %v2273, %v2246
        %v2375 = vmul.f32 %v2273, %v2247
        %v2376 = vmul.f32 %v2273, %v2248
        %v2377 = vmul.f32 %v2273, %v2249
        %v2378 = vmul.f32 %v2273, %v2250
        %v2379 = vmul.f32 %v2273, %v2251
        %v2380 = vmul.f32 %v2273, %v2252
        %v2381 = vmul.f32 %v2273, %v2253
        %v2382 = vmul.f32 %v2273, %v2254
        %v2383 = vmul.f32 %v2273, %v2255
        %v2384 = vmul.f32 %v2273, %v2256
        %v2385 = vmul.f32 %v2273, %v2257
        %v2386 = vmul.f32 %v2273, %v2258
        %v2387 = vmul.f32 %v2273, %v2259
        %v2388 = vmul.f32 %v2273, %v2260
        %v2389 = vmul.f32 %v2273, %v2261
        %v2390 = vmul.f32 %v2273, %v2262
        %v2391 = vmul.f32 %v2277, %v2231
        %v2392 = vmul.f32 %v2277, %v2232
        %v2393 = vmul.f32 %v2277, %v2233
        %v2394 = vmul.f32 %v2277, %v2234
        %v2395 = vmul.f32 %v2277, %v2235
        %v2396 = vmul.f32 %v2277, %v2236
        %v2397 = vmul.f32 %v2277, %v2237
        %v2398 = vmul.f32 %v2277, %v2238
        %v2399 = vmul.f32 %v2277, %v2239
        %v2400 = vmul.f32 %v2277, %v2240
        %v2401 = vmul.f32 %v2277, %v2241
        %v2402 = vmul.f32 %v2277, %v2242
        %v2403 = vmul.f32 %v2277, %v2243
        %v2404 = vmul.f32 %v2277, %v2244
        %v2405 = vmul.f32 %v2277, %v2245
        %v2406 = vmul.f32 %v2277, %v2246
        %v2407 = vmul.f32 %v2277, %v2247
        %v2408 = vmul.f32 %v2277, %v2248
        %v2409 = vmul.f32 %v2277, %v2249
        %v2410 = vmul.f32 %v2277, %v2250
        %v2411 = vmul.f32 %v2277, %v2251
        %v2412 = vmul.f32 %v2277, %v2252
        %v2413 = vmul.f32 %v2277, %v2253
        %v2414 = vmul.f32 %v2277, %v2254
        %v2415 = vmul.f32 %v2277, %v2255
        %v2416 = vmul.f32 %v2277, %v2256
        %v2417 = vmul.f32 %v2277, %v2257
        %v2418 = vmul.f32 %v2277, %v2258
        %v2419 = vmul.f32 %v2277, %v2259
        %v2420 = vmul.f32 %v2277, %v2260
        %v2421 = vmul.f32 %v2277, %v2261
        %v2422 = vmul.f32 %v2277, %v2262
        %v2423 = vmul.f32 %v2281, %v2231
        %v2424 = vmul.f32 %v2281, %v2232
        %v2425 = vmul.f32 %v2281, %v2233
        %v2426 = vmul.f32 %v2281, %v2234
        %v2427 = vmul.f32 %v2281, %v2235
        %v2428 = vmul.f32 %v2281, %v2236
        %v2429 = vmul.f32 %v2281, %v2237
        %v2430 = vmul.f32 %v2281, %v2238
        %v2431 = vmul.f32 %v2281, %v2239
        %v2432 = vmul.f32 %v2281, %v2240
        %v2433 = vmul.f32 %v2281, %v2241
        %v2434 = vmul.f32 %v2281, %v2242
        %v2435 = vmul.f32 %v2281, %v2243
        %v2436 = vmul.f32 %v2281, %v2244
        %v2437 = vmul.f32 %v2281, %v2245
        %v2438 = vmul.f32 %v2281, %v2246
        %v2439 = vmul.f32 %v2281, %v2247
        %v2440 = vmul.f32 %v2281, %v2248
        %v2441 = vmul.f32 %v2281, %v2249
        %v2442 = vmul.f32 %v2281, %v2250
        %v2443 = vmul.f32 %v2281, %v2251
        %v2444 = vmul.f32 %v2281, %v2252
        %v2445 = vmul.f32 %v2281, %v2253
        %v2446 = vmul.f32 %v2281, %v2254
        %v2447 = vmul.f32 %v2281, %v2255
        %v2448 = vmul.f32 %v2281, %v2256
        %v2449 = vmul.f32 %v2281, %v2257
        %v2450 = vmul.f32 %v2281, %v2258
        %v2451 = vmul.f32 %v2281, %v2259
        %v2452 = vmul.f32 %v2281, %v2260
        %v2453 = vmul.f32 %v2281, %v2261
        %v2454 = vmul.f32 %v2281, %v2262
        %v2455 = vmul.f32 %v2285, %v2231
        %v2456 = vmul.f32 %v2285, %v2232
        %v2457 = vmul.f32 %v2285, %v2233
        %v2458 = vmul.f32 %v2285, %v2234
        %v2459 = vmul.f32 %v2285, %v2235
        %v2460 = vmul.f32 %v2285, %v2236
        %v2461 = vmul.f32 %v2285, %v2237
        %v2462 = vmul.f32 %v2285, %v2238
        %v2463 = vmul.f32 %v2285, %v2239
        %v2464 = vmul.f32 %v2285, %v2240
        %v2465 = vmul.f32 %v2285, %v2241
        %v2466 = vmul.f32 %v2285, %v2242
        %v2467 = vmul.f32 %v2285, %v2243
        %v2468 = vmul.f32 %v2285, %v2244
        %v2469 = vmul.f32 %v2285, %v2245
        %v2470 = vmul.f32 %v2285, %v2246
        %v2471 = vmul.f32 %v2285, %v2247
        %v2472 = vmul.f32 %v2285, %v2248
        %v2473 = vmul.f32 %v2285, %v2249
        %v2474 = vmul.f32 %v2285, %v2250
        %v2475 = vmul.f32 %v2285, %v2251
        %v2476 = vmul.f32 %v2285, %v2252
        %v2477 = vmul.f32 %v2285, %v2253
        %v2478 = vmul.f32 %v2285, %v2254
        %v2479 = vmul.f32 %v2285, %v2255
        %v2480 = vmul.f32 %v2285, %v2256
        %v2481 = vmul.f32 %v2285, %v2257
        %v2482 = vmul.f32 %v2285, %v2258
        %v2483 = vmul.f32 %v2285, %v2259
        %v2484 = vmul.f32 %v2285, %v2260
        %v2485 = vmul.f32 %v2285, %v2261
        %v2486 = vmul.f32 %v2285, %v2262
        %v2487 = vmul.f32 %v2289, %v2231
        %v2488 = vmul.f32 %v2289, %v2232
        %v2489 = vmul.f32 %v2289, %v2233
        %v2490 = vmul.f32 %v2289, %v2234
        %v2491 = vmul.f32 %v2289, %v2235
        %v2492 = vmul.f32 %v2289, %v2236
        %v2493 = vmul.f32 %v2289, %v2237
        %v2494 = vmul.f32 %v2289, %v2238
        %v2495 = vmul.f32 %v2289, %v2239
        %v2496 = vmul.f32 %v2289, %v2240
        %v2497 = vmul.f32 %v2289, %v2241
        %v2498 = vmul.f32 %v2289, %v2242
        %v2499 = vmul.f32 %v2289, %v2243
        %v2500 = vmul.f32 %v2289, %v2244
        %v2501 = vmul.f32 %v2289, %v2245
        %v2502 = vmul.f32 %v2289, %v2246
        %v2503 = vmul.f32 %v2289, %v2247
        %v2504 = vmul.f32 %v2289, %v2248
        %v2505 = vmul.f32 %v2289, %v2249
        %v2506 = vmul.f32 %v2289, %v2250
        %v2507 = vmul.f32 %v2289, %v2251
        %v2508 = vmul.f32 %v2289, %v2252
        %v2509 = vmul.f32 %v2289, %v2253
        %v2510 = vmul.f32 %v2289, %v2254
        %v2511 = vmul.f32 %v2289, %v2255
        %v2512 = vmul.f32 %v2289, %v2256
        %v2513 = vmul.f32 %v2289, %v2257
        %v2514 = vmul.f32 %v2289, %v2258
        %v2515 = vmul.f32 %v2289, %v2259
        %v2516 = vmul.f32 %v2289, %v2260
        %v2517 = vmul.f32 %v2289, %v2261
        %v2518 = vmul.f32 %v2289, %v2262
        %v2519 = vmul.f32 %v2293, %v2231
        %v2520 = vmul.f32 %v2293, %v2232
        %v2521 = vmul.f32 %v2293, %v2233
        %v2522 = vmul.f32 %v2293, %v2234
        %v2523 = vmul.f32 %v2293, %v2235
        %v2524 = vmul.f32 %v2293, %v2236
        %v2525 = vmul.f32 %v2293, %v2237
        %v2526 = vmul.f32 %v2293, %v2238
        %v2527 = vmul.f32 %v2293, %v2239
        %v2528 = vmul.f32 %v2293, %v2240
        %v2529 = vmul.f32 %v2293, %v2241
        %v2530 = vmul.f32 %v2293, %v2242
        %v2531 = vmul.f32 %v2293, %v2243
        %v2532 = vmul.f32 %v2293, %v2244
        %v2533 = vmul.f32 %v2293, %v2245
        %v2534 = vmul.f32 %v2293, %v2246
        %v2535 = vmul.f32 %v2293, %v2247
        %v2536 = vmul.f32 %v2293, %v2248
        %v2537 = vmul.f32 %v2293, %v2249
        %v2538 = vmul.f32 %v2293, %v2250
        %v2539 = vmul.f32 %v2293, %v2251
        %v2540 = vmul.f32 %v2293, %v2252
        %v2541 = vmul.f32 %v2293, %v2253
        %v2542 = vmul.f32 %v2293, %v2254
        %v2543 = vmul.f32 %v2293, %v2255
        %v2544 = vmul.f32 %v2293, %v2256
        %v2545 = vmul.f32 %v2293, %v2257
        %v2546 = vmul.f32 %v2293, %v2258
        %v2547 = vmul.f32 %v2293, %v2259
        %v2548 = vmul.f32 %v2293, %v2260
        %v2549 = vmul.f32 %v2293, %v2261
        %v2550 = vmul.f32 %v2293, %v2262
        %v2551 = vadd.f32 %v1974, %v2295
        %v2552 = vadd.f32 %v1975, %v2296
        %v2553 = vadd.f32 %v1976, %v2297
        %v2554 = vadd.f32 %v1977, %v2298
        %v2555 = vadd.f32 %v1978, %v2299
        %v2556 = vadd.f32 %v1979, %v2300
        %v2557 = vadd.f32 %v1980, %v2301
        %v2558 = vadd.f32 %v1981, %v2302
        %v2559 = vadd.f32 %v1982, %v2303
        %v2560 = vadd.f32 %v1983, %v2304
        %v2561 = vadd.f32 %v1984, %v2305
        %v2562 = vadd.f32 %v1985, %v2306
        %v2563 = vadd.f32 %v1986, %v2307
        %v2564 = vadd.f32 %v1987, %v2308
        %v2565 = vadd.f32 %v1988, %v2309
        %v2566 = vadd.f32 %v1989, %v2310
        %v2567 = vadd.f32 %v1990, %v2311
        %v2568 = vadd.f32 %v1991, %v2312
        %v2569 = vadd.f32 %v1992, %v2313
        %v2570 = vadd.f32 %v1993, %v2314
        %v2571 = vadd.f32 %v1994, %v2315
        %v2572 = vadd.f32 %v1995, %v2316
        %v2573 = vadd.f32 %v1996, %v2317
        %v2574 = vadd.f32 %v1997, %v2318
        %v2575 = vadd.f32 %v1998, %v2319
        %v2576 = vadd.f32 %v1999, %v2320
        %v2577 = vadd.f32 %v2000, %v2321
        %v2578 = vadd.f32 %v2001, %v2322
        %v2579 = vadd.f32 %v2002, %v2323
        %v2580 = vadd.f32 %v2003, %v2324
        %v2581 = vadd.f32 %v2004, %v2325
        %v2582 = vadd.f32 %v2005, %v2326
        %v2583 = vadd.f32 %v2006, %v2327
        %v2584 = vadd.f32 %v2007, %v2328
        %v2585 = vadd.f32 %v2008, %v2329
        %v2586 = vadd.f32 %v2009, %v2330
        %v2587 = vadd.f32 %v2010, %v2331
        %v2588 = vadd.f32 %v2011, %v2332
        %v2589 = vadd.f32 %v2012, %v2333
        %v2590 = vadd.f32 %v2013, %v2334
        %v2591 = vadd.f32 %v2014, %v2335
        %v2592 = vadd.f32 %v2015, %v2336
        %v2593 = vadd.f32 %v2016, %v2337
        %v2594 = vadd.f32 %v2017, %v2338
        %v2595 = vadd.f32 %v2018, %v2339
        %v2596 = vadd.f32 %v2019, %v2340
        %v2597 = vadd.f32 %v2020, %v2341
        %v2598 = vadd.f32 %v2021, %v2342
        %v2599 = vadd.f32 %v2022, %v2343
        %v2600 = vadd.f32 %v2023, %v2344
        %v2601 = vadd.f32 %v2024, %v2345
        %v2602 = vadd.f32 %v2025, %v2346
        %v2603 = vadd.f32 %v2026, %v2347
        %v2604 = vadd.f32 %v2027, %v2348
        %v2605 = vadd.f32 %v2028, %v2349
        %v2606 = vadd.f32 %v2029, %v2350
        %v2607 = vadd.f32 %v2030, %v2351
        %v2608 = vadd.f32 %v2031, %v2352
        %v2609 = vadd.f32 %v2032, %v2353
        %v2610 = vadd.f32 %v2033, %v2354
        %v2611 = vadd.f32 %v2034, %v2355
        %v2612 = vadd.f32 %v2035, %v2356
        %v2613 = vadd.f32 %v2036, %v2357
        %v2614 = vadd.f32 %v2037, %v2358
        %v2615 = vadd.f32 %v2038, %v2359
        %v2616 = vadd.f32 %v2039, %v2360
        %v2617 = vadd.f32 %v2040, %v2361
        %v2618 = vadd.f32 %v2041, %v2362
        %v2619 = vadd.f32 %v2042, %v2363
        %v2620 = vadd.f32 %v2043, %v2364
        %v2621 = vadd.f32 %v2044, %v2365
        %v2622 = vadd.f32 %v2045, %v2366
        %v2623 = vadd.f32 %v2046, %v2367
        %v2624 = vadd.f32 %v2047, %v2368
        %v2625 = vadd.f32 %v2048, %v2369
        %v2626 = vadd.f32 %v2049, %v2370
        %v2627 = vadd.f32 %v2050, %v2371
        %v2628 = vadd.f32 %v2051, %v2372
        %v2629 = vadd.f32 %v2052, %v2373
        %v2630 = vadd.f32 %v2053, %v2374
        %v2631 = vadd.f32 %v2054, %v2375
        %v2632 = vadd.f32 %v2055, %v2376
        %v2633 = vadd.f32 %v2056, %v2377
        %v2634 = vadd.f32 %v2057, %v2378
        %v2635 = vadd.f32 %v2058, %v2379
        %v2636 = vadd.f32 %v2059, %v2380
        %v2637 = vadd.f32 %v2060, %v2381
        %v2638 = vadd.f32 %v2061, %v2382
        %v2639 = vadd.f32 %v2062, %v2383
        %v2640 = vadd.f32 %v2063, %v2384
        %v2641 = vadd.f32 %v2064, %v2385
        %v2642 = vadd.f32 %v2065, %v2386
        %v2643 = vadd.f32 %v2066, %v2387
        %v2644 = vadd.f32 %v2067, %v2388
        %v2645 = vadd.f32 %v2068, %v2389
        %v2646 = vadd.f32 %v2069, %v2390
        %v2647 = vadd.f32 %v2070, %v2391
        %v2648 = vadd.f32 %v2071, %v2392
        %v2649 = vadd.f32 %v2072, %v2393
        %v2650 = vadd.f32 %v2073, %v2394
        %v2651 = vadd.f32 %v2074, %v2395
        %v2652 = vadd.f32 %v2075, %v2396
        %v2653 = vadd.f32 %v2076, %v2397
        %v2654 = vadd.f32 %v2077, %v2398
        %v2655 = vadd.f32 %v2078, %v2399
        %v2656 = vadd.f32 %v2079, %v2400
        %v2657 = vadd.f32 %v2080, %v2401
        %v2658 = vadd.f32 %v2081, %v2402
        %v2659 = vadd.f32 %v2082, %v2403
        %v2660 = vadd.f32 %v2083, %v2404
        %v2661 = vadd.f32 %v2084, %v2405
        %v2662 = vadd.f32 %v2085, %v2406
        %v2663 = vadd.f32 %v2086, %v2407
        %v2664 = vadd.f32 %v2087, %v2408
        %v2665 = vadd.f32 %v2088, %v2409
        %v2666 = vadd.f32 %v2089, %v2410
        %v2667 = vadd.f32 %v2090, %v2411
        %v2668 = vadd.f32 %v2091, %v2412
        %v2669 = vadd.f32 %v2092, %v2413
        %v2670 = vadd.f32 %v2093, %v2414
        %v2671 = vadd.f32 %v2094, %v2415
        %v2672 = vadd.f32 %v2095, %v2416
        %v2673 = vadd.f32 %v2096, %v2417
        %v2674 = vadd.f32 %v2097, %v2418
        %v2675 = vadd.f32 %v2098, %v2419
        %v2676 = vadd.f32 %v2099, %v2420
        %v2677 = vadd.f32 %v2100, %v2421
        %v2678 = vadd.f32 %v2101, %v2422
        %v2679 = vadd.f32 %v2102, %v2423
        %v2680 = vadd.f32 %v2103, %v2424
        %v2681 = vadd.f32 %v2104, %v2425
        %v2682 = vadd.f32 %v2105, %v2426
        %v2683 = vadd.f32 %v2106, %v2427
        %v2684 = vadd.f32 %v2107, %v2428
        %v2685 = vadd.f32 %v2108, %v2429
        %v2686 = vadd.f32 %v2109, %v2430
        %v2687 = vadd.f32 %v2110, %v2431
        %v2688 = vadd.f32 %v2111, %v2432
        %v2689 = vadd.f32 %v2112, %v2433
        %v2690 = vadd.f32 %v2113, %v2434
        %v2691 = vadd.f32 %v2114, %v2435
        %v2692 = vadd.f32 %v2115, %v2436
        %v2693 = vadd.f32 %v2116, %v2437
        %v2694 = vadd.f32 %v2117, %v2438
        %v2695 = vadd.f32 %v2118, %v2439
        %v2696 = vadd.f32 %v2119, %v2440
        %v2697 = vadd.f32 %v2120, %v2441
        %v2698 = vadd.f32 %v2121, %v2442
        %v2699 = vadd.f32 %v2122, %v2443
        %v2700 = vadd.f32 %v2123, %v2444
        %v2701 = vadd.f32 %v2124, %v2445
        %v2702 = vadd.f32 %v2125, %v2446
        %v2703 = vadd.f32 %v2126, %v2447
        %v2704 = vadd.f32 %v2127, %v2448
        %v2705 = vadd.f32 %v2128, %v2449
        %v2706 = vadd.f32 %v2129, %v2450
        %v2707 = vadd.f32 %v2130, %v2451
        %v2708 = vadd.f32 %v2131, %v2452
        %v2709 = vadd.f32 %v2132, %v2453
        %v2710 = vadd.f32 %v2133, %v2454
        %v2711 = vadd.f32 %v2134, %v2455
        %v2712 = vadd.f32 %v2135, %v2456
        %v2713 = vadd.f32 %v2136, %v2457
        %v2714 = vadd.f32 %v2137, %v2458
        %v2715 = vadd.f32 %v2138, %v2459
        %v2716 = vadd.f32 %v2139, %v2460
        %v2717 = vadd.f32 %v2140, %v2461
        %v2718 = vadd.f32 %v2141, %v2462
        %v2719 = vadd.f32 %v2142, %v2463
        %v2720 = vadd.f32 %v2143, %v2464
        %v2721 = vadd.f32 %v2144, %v2465
        %v2722 = vadd.f32 %v2145, %v2466
        %v2723 = vadd.f32 %v2146, %v2467
        %v2724 = vadd.f32 %v2147, %v2468
        %v2725 = vadd.f32 %v2148, %v2469
        %v2726 = vadd.f32 %v2149, %v2470
        %v2727 = vadd.f32 %v2150, %v2471
        %v2728 = vadd.f32 %v2151, %v2472
        %v2729 = vadd.f32 %v2152, %v2473
        %v2730 = vadd.f32 %v2153, %v2474
        %v2731 = vadd.f32 %v2154, %v2475
        %v2732 = vadd.f32 %v2155, %v2476
        %v2733 = vadd.f32 %v2156, %v2477
        %v2734 = vadd.f32 %v2157, %v2478
        %v2735 = vadd.f32 %v2158, %v2479
        %v2736 = vadd.f32 %v2159, %v2480
        %v2737 = vadd.f32 %v2160, %v2481
        %v2738 = vadd.f32 %v2161, %v2482
        %v2739 = vadd.f32 %v2162, %v2483
        %v2740 = vadd.f32 %v2163, %v2484
        %v2741 = vadd.f32 %v2164, %v2485
        %v2742 = vadd.f32 %v2165, %v2486
        %v2743 = vadd.f32 %v2166, %v2487
        %v2744 = vadd.f32 %v2167, %v2488
        %v2745 = vadd.f32 %v2168, %v2489
        %v2746 = vadd.f32 %v2169, %v2490
        %v2747 = vadd.f32 %v2170, %v2491
        %v2748 = vadd.f32 %v2171, %v2492
        %v2749 = vadd.f32 %v2172, %v2493
        %v2750 = vadd.f32 %v2173, %v2494
        %v2751 = vadd.f32 %v2174, %v2495
        %v2752 = vadd.f32 %v2175, %v2496
        %v2753 = vadd.f32 %v2176, %v2497
        %v2754 = vadd.f32 %v2177, %v2498
        %v2755 = vadd.f32 %v2178, %v2499
        %v2756 = vadd.f32 %v2179, %v2500
        %v2757 = vadd.f32 %v2180, %v2501
        %v2758 = vadd.f32 %v2181, %v2502
        %v2759 = vadd.f32 %v2182, %v2503
        %v2760 = vadd.f32 %v2183, %v2504
        %v2761 = vadd.f32 %v2184, %v2505
        %v2762 = vadd.f32 %v2185, %v2506
        %v2763 = vadd.f32 %v2186, %v2507
        %v2764 = vadd.f32 %v2187, %v2508
        %v2765 = vadd.f32 %v2188, %v2509
        %v2766 = vadd.f32 %v2189, %v2510
        %v2767 = vadd.f32 %v2190, %v2511
        %v2768 = vadd.f32 %v2191, %v2512
        %v2769 = vadd.f32 %v2192, %v2513
        %v2770 = vadd.f32 %v2193, %v2514
        %v2771 = vadd.f32 %v2194, %v2515
        %v2772 = vadd.f32 %v2195, %v2516
        %v2773 = vadd.f32 %v2196, %v2517
        %v2774 = vadd.f32 %v2197, %v2518
        %v2775 = vadd.f32 %v2198, %v2519
        %v2776 = vadd.f32 %v2199, %v2520
        %v2777 = vadd.f32 %v2200, %v2521
        %v2778 = vadd.f32 %v2201, %v2522
        %v2779 = vadd.f32 %v2202, %v2523
        %v2780 = vadd.f32 %v2203, %v2524
        %v2781 = vadd.f32 %v2204, %v2525
        %v2782 = vadd.f32 %v2205, %v2526
        %v2783 = vadd.f32 %v2206, %v2527
        %v2784 = vadd.f32 %v2207, %v2528
        %v2785 = vadd.f32 %v2208, %v2529
        %v2786 = vadd.f32 %v2209, %v2530
        %v2787 = vadd.f32 %v2210, %v2531
        %v2788 = vadd.f32 %v2211, %v2532
        %v2789 = vadd.f32 %v2212, %v2533
        %v2790 = vadd.f32 %v2213, %v2534
        %v2791 = vadd.f32 %v2214, %v2535
        %v2792 = vadd.f32 %v2215, %v2536
        %v2793 = vadd.f32 %v2216, %v2537
        %v2794 = vadd.f32 %v2217, %v2538
        %v2795 = vadd.f32 %v2218, %v2539
        %v2796 = vadd.f32 %v2219, %v2540
        %v2797 = vadd.f32 %v2220, %v2541
        %v2798 = vadd.f32 %v2221, %v2542
        %v2799 = vadd.f32 %v2222, %v2543
        %v2800 = vadd.f32 %v2223, %v2544
        %v2801 = vadd.f32 %v2224, %v2545
        %v2802 = vadd.f32 %v2225, %v2546
        %v2803 = vadd.f32 %v2226, %v2547
        %v2804 = vadd.f32 %v2227, %v2548
        %v2805 = vadd.f32 %v2228, %v2549
        %v2806 = vadd.f32 %v2229, %v2550
        %v2807 = vtanh.pop %v2551
        %v2808 = vtanh.pop %v2552
        %v2809 = vtanh.pop %v2553
        %v2810 = vtanh.pop %v2554
        %v2811 = vtanh.pop %v2555
        %v2812 = vtanh.pop %v2556
        %v2813 = vtanh.pop %v2557
        %v2814 = vtanh.pop %v2558
        %v2815 = vtanh.pop %v2559
        %v2816 = vtanh.pop %v2560
        %v2817 = vtanh.pop %v2561
        %v2818 = vtanh.pop %v2562
        %v2819 = vtanh.pop %v2563
        %v2820 = vtanh.pop %v2564
        %v2821 = vtanh.pop %v2565
        %v2822 = vtanh.pop %v2566
        %v2823 = vtanh.pop %v2567
        %v2824 = vtanh.pop %v2568
        %v2825 = vtanh.pop %v2569
        %v2826 = vtanh.pop %v2570
        %v2827 = vtanh.pop %v2571
        %v2828 = vtanh.pop %v2572
        %v2829 = vtanh.pop %v2573
        %v2830 = vtanh.pop %v2574
        %v2831 = vtanh.pop %v2575
        %v2832 = vtanh.pop %v2576
        %v2833 = vtanh.pop %v2577
        %v2834 = vtanh.pop %v2578
        %v2835 = vtanh.pop %v2579
        %v2836 = vtanh.pop %v2580
        %v2837 = vtanh.pop %v2581
        %v2838 = vtanh.pop %v2582
        %v2839 = vtanh.pop %v2583
        %v2840 = vtanh.pop %v2584
        %v2841 = vtanh.pop %v2585
        %v2842 = vtanh.pop %v2586
        %v2843 = vtanh.pop %v2587
        %v2844 = vtanh.pop %v2588
        %v2845 = vtanh.pop %v2589
        %v2846 = vtanh.pop %v2590
        %v2847 = vtanh.pop %v2591
        %v2848 = vtanh.pop %v2592
        %v2849 = vtanh.pop %v2593
        %v2850 = vtanh.pop %v2594
        %v2851 = vtanh.pop %v2595
        %v2852 = vtanh.pop %v2596
        %v2853 = vtanh.pop %v2597
        %v2854 = vtanh.pop %v2598
        %v2855 = vtanh.pop %v2599
        %v2856 = vtanh.pop %v2600
        %v2857 = vtanh.pop %v2601
        %v2858 = vtanh.pop %v2602
        %v2859 = vtanh.pop %v2603
        %v2860 = vtanh.pop %v2604
        %v2861 = vtanh.pop %v2605
        %v2862 = vtanh.pop %v2606
        %v2863 = vtanh.pop %v2607
        %v2864 = vtanh.pop %v2608
        %v2865 = vtanh.pop %v2609
        %v2866 = vtanh.pop %v2610
        %v2867 = vtanh.pop %v2611
        %v2868 = vtanh.pop %v2612
        %v2869 = vtanh.pop %v2613
        %v2870 = vtanh.pop %v2614
        %v2871 = vtanh.pop %v2615
        %v2872 = vtanh.pop %v2616
        %v2873 = vtanh.pop %v2617
        %v2874 = vtanh.pop %v2618
        %v2875 = vtanh.pop %v2619
        %v2876 = vtanh.pop %v2620
        %v2877 = vtanh.pop %v2621
        %v2878 = vtanh.pop %v2622
        %v2879 = vtanh.pop %v2623
        %v2880 = vtanh.pop %v2624
        %v2881 = vtanh.pop %v2625
        %v2882 = vtanh.pop %v2626
        %v2883 = vtanh.pop %v2627
        %v2884 = vtanh.pop %v2628
        %v2885 = vtanh.pop %v2629
        %v2886 = vtanh.pop %v2630
        %v2887 = vtanh.pop %v2631
        %v2888 = vtanh.pop %v2632
        %v2889 = vtanh.pop %v2633
        %v2890 = vtanh.pop %v2634
        %v2891 = vtanh.pop %v2635
        %v2892 = vtanh.pop %v2636
        %v2893 = vtanh.pop %v2637
        %v2894 = vtanh.pop %v2638
        %v2895 = vtanh.pop %v2639
        %v2896 = vtanh.pop %v2640
        %v2897 = vtanh.pop %v2641
        %v2898 = vtanh.pop %v2642
        %v2899 = vtanh.pop %v2643
        %v2900 = vtanh.pop %v2644
        %v2901 = vtanh.pop %v2645
        %v2902 = vtanh.pop %v2646
        %v2903 = vtanh.pop %v2647
        %v2904 = vtanh.pop %v2648
        %v2905 = vtanh.pop %v2649
        %v2906 = vtanh.pop %v2650
        %v2907 = vtanh.pop %v2651
        %v2908 = vtanh.pop %v2652
        %v2909 = vtanh.pop %v2653
        %v2910 = vtanh.pop %v2654
        %v2911 = vtanh.pop %v2655
        %v2912 = vtanh.pop %v2656
        %v2913 = vtanh.pop %v2657
        %v2914 = vtanh.pop %v2658
        %v2915 = vtanh.pop %v2659
        %v2916 = vtanh.pop %v2660
        %v2917 = vtanh.pop %v2661
        %v2918 = vtanh.pop %v2662
        %v2919 = vtanh.pop %v2663
        %v2920 = vtanh.pop %v2664
        %v2921 = vtanh.pop %v2665
        %v2922 = vtanh.pop %v2666
        %v2923 = vtanh.pop %v2667
        %v2924 = vtanh.pop %v2668
        %v2925 = vtanh.pop %v2669
        %v2926 = vtanh.pop %v2670
        %v2927 = vtanh.pop %v2671
        %v2928 = vtanh.pop %v2672
        %v2929 = vtanh.pop %v2673
        %v2930 = vtanh.pop %v2674
        %v2931 = vtanh.pop %v2675
        %v2932 = vtanh.pop %v2676
        %v2933 = vtanh.pop %v2677
        %v2934 = vtanh.pop %v2678
        %v2935 = vtanh.pop %v2679
        %v2936 = vtanh.pop %v2680
        %v2937 = vtanh.pop %v2681
        %v2938 = vtanh.pop %v2682
        %v2939 = vtanh.pop %v2683
        %v2940 = vtanh.pop %v2684
        %v2941 = vtanh.pop %v2685
        %v2942 = vtanh.pop %v2686
        %v2943 = vtanh.pop %v2687
        %v2944 = vtanh.pop %v2688
        %v2945 = vtanh.pop %v2689
        %v2946 = vtanh.pop %v2690
        %v2947 = vtanh.pop %v2691
        %v2948 = vtanh.pop %v2692
        %v2949 = vtanh.pop %v2693
        %v2950 = vtanh.pop %v2694
        %v2951 = vtanh.pop %v2695
        %v2952 = vtanh.pop %v2696
        %v2953 = vtanh.pop %v2697
        %v2954 = vtanh.pop %v2698
        %v2955 = vtanh.pop %v2699
        %v2956 = vtanh.pop %v2700
        %v2957 = vtanh.pop %v2701
        %v2958 = vtanh.pop %v2702
        %v2959 = vtanh.pop %v2703
        %v2960 = vtanh.pop %v2704
        %v2961 = vtanh.pop %v2705
        %v2962 = vtanh.pop %v2706
        %v2963 = vtanh.pop %v2707
        %v2964 = vtanh.pop %v2708
        %v2965 = vtanh.pop %v2709
        %v2966 = vtanh.pop %v2710
        %v2967 = vtanh.pop %v2711
        %v2968 = vtanh.pop %v2712
        %v2969 = vtanh.pop %v2713
        %v2970 = vtanh.pop %v2714
        %v2971 = vtanh.pop %v2715
        %v2972 = vtanh.pop %v2716
        %v2973 = vtanh.pop %v2717
        %v2974 = vtanh.pop %v2718
        %v2975 = vtanh.pop %v2719
        %v2976 = vtanh.pop %v2720
        %v2977 = vtanh.pop %v2721
        %v2978 = vtanh.pop %v2722
        %v2979 = vtanh.pop %v2723
        %v2980 = vtanh.pop %v2724
        %v2981 = vtanh.pop %v2725
        %v2982 = vtanh.pop %v2726
        %v2983 = vtanh.pop %v2727
        %v2984 = vtanh.pop %v2728
        %v2985 = vtanh.pop %v2729
        %v2986 = vtanh.pop %v2730
        %v2987 = vtanh.pop %v2731
        %v2988 = vtanh.pop %v2732
        %v2989 = vtanh.pop %v2733
        %v2990 = vtanh.pop %v2734
        %v2991 = vtanh.pop %v2735
        %v2992 = vtanh.pop %v2736
        %v2993 = vtanh.pop %v2737
        %v2994 = vtanh.pop %v2738
        %v2995 = vtanh.pop %v2739
        %v2996 = vtanh.pop %v2740
        %v2997 = vtanh.pop %v2741
        %v2998 = vtanh.pop %v2742
        %v2999 = vtanh.pop %v2743
        %v3000 = vtanh.pop %v2744
        %v3001 = vtanh.pop %v2745
        %v3002 = vtanh.pop %v2746
        %v3003 = vtanh.pop %v2747
        %v3004 = vtanh.pop %v2748
        %v3005 = vtanh.pop %v2749
        %v3006 = vtanh.pop %v2750
        %v3007 = vtanh.pop %v2751
        %v3008 = vtanh.pop %v2752
        %v3009 = vtanh.pop %v2753
        %v3010 = vtanh.pop %v2754
        %v3011 = vtanh.pop %v2755
        %v3012 = vtanh.pop %v2756
        %v3013 = vtanh.pop %v2757
        %v3014 = vtanh.pop %v2758
        %v3015 = vtanh.pop %v2759
        %v3016 = vtanh.pop %v2760
        %v3017 = vtanh.pop %v2761
        %v3018 = vtanh.pop %v2762
        %v3019 = vtanh.pop %v2763
        %v3020 = vtanh.pop %v2764
        %v3021 = vtanh.pop %v2765
        %v3022 = vtanh.pop %v2766
        %v3023 = vtanh.pop %v2767
        %v3024 = vtanh.pop %v2768
        %v3025 = vtanh.pop %v2769
        %v3026 = vtanh.pop %v2770
        %v3027 = vtanh.pop %v2771
        %v3028 = vtanh.pop %v2772
        %v3029 = vtanh.pop %v2773
        %v3030 = vtanh.pop %v2774
        %v3031 = vtanh.pop %v2775
        %v3032 = vtanh.pop %v2776
        %v3033 = vtanh.pop %v2777
        %v3034 = vtanh.pop %v2778
        %v3035 = vtanh.pop %v2779
        %v3036 = vtanh.pop %v2780
        %v3037 = vtanh.pop %v2781
        %v3038 = vtanh.pop %v2782
        %v3039 = vtanh.pop %v2783
        %v3040 = vtanh.pop %v2784
        %v3041 = vtanh.pop %v2785
        %v3042 = vtanh.pop %v2786
        %v3043 = vtanh.pop %v2787
        %v3044 = vtanh.pop %v2788
        %v3045 = vtanh.pop %v2789
        %v3046 = vtanh.pop %v2790
        %v3047 = vtanh.pop %v2791
        %v3048 = vtanh.pop %v2792
        %v3049 = vtanh.pop %v2793
        %v3050 = vtanh.pop %v2794
        %v3051 = vtanh.pop %v2795
        %v3052 = vtanh.pop %v2796
        %v3053 = vtanh.pop %v2797
        %v3054 = vtanh.pop %v2798
        %v3055 = vtanh.pop %v2799
        %v3056 = vtanh.pop %v2800
        %v3057 = vtanh.pop %v2801
        %v3058 = vtanh.pop %v2802
        %v3059 = vtanh.pop %v2803
        %v3060 = vtanh.pop %v2804
        %v3061 = vtanh.pop %v2805
        %v3062 = vtanh.pop %v2806
        %v3063 = vld [vmem:[%s333] sm:$0xff]
        %v3064 = vld [vmem:[%s333 + $0x8] sm:$0xff]
        %v3065 = vld [vmem:[%s333 + $0x10] sm:$0xff]
        %v3066 = vld [vmem:[%s333 + $0x18] sm:$0xff]
        %v3067 = vld [vmem:[%s333 + $0x20] sm:$0xff]
        %v3068 = vld [vmem:[%s333 + $0x28] sm:$0xff]
        %v3069 = vld [vmem:[%s333 + $0x30] sm:$0xff]
        %v3070 = vld [vmem:[%s333 + $0x38] sm:$0xff]
        %v3071 = vld [vmem:[%s333 + $0x40] sm:$0xff]
        %v3072 = vld [vmem:[%s333 + $0x48] sm:$0xff]
        %v3073 = vld [vmem:[%s333 + $0x50] sm:$0xff]
        %v3074 = vld [vmem:[%s333 + $0x58] sm:$0xff]
        %v3075 = vld [vmem:[%s333 + $0x60] sm:$0xff]
        %v3076 = vld [vmem:[%s333 + $0x68] sm:$0xff]
        %v3077 = vld [vmem:[%s333 + $0x70] sm:$0xff]
        %v3078 = vld [vmem:[%s333 + $0x78] sm:$0xff]
        %v3079 = vld [vmem:[%s333 + $0x80] sm:$0xff]
        %v3080 = vld [vmem:[%s333 + $0x88] sm:$0xff]
        %v3081 = vld [vmem:[%s333 + $0x90] sm:$0xff]
        %v3082 = vld [vmem:[%s333 + $0x98] sm:$0xff]
        %v3083 = vld [vmem:[%s333 + $0xa0] sm:$0xff]
        %v3084 = vld [vmem:[%s333 + $0xa8] sm:$0xff]
        %v3085 = vld [vmem:[%s333 + $0xb0] sm:$0xff]
        %v3086 = vld [vmem:[%s333 + $0xb8] sm:$0xff]
        %v3087 = vld [vmem:[%s333 + $0xc0] sm:$0xff]
        %v3088 = vld [vmem:[%s333 + $0xc8] sm:$0xff]
        %v3089 = vld [vmem:[%s333 + $0xd0] sm:$0xff]
        %v3090 = vld [vmem:[%s333 + $0xd8] sm:$0xff]
        %v3091 = vld [vmem:[%s333 + $0xe0] sm:$0xff]
        %v3092 = vld [vmem:[%s333 + $0xe8] sm:$0xff]
        %v3093 = vld [vmem:[%s333 + $0xf0] sm:$0xff]
        %v3094 = vld [vmem:[%s333 + $0xf8] sm:$0xff]
        %v3095 = vmul.f32 %v2807, %v3063
        %v3096 = vmul.f32 %v2808, %v3064
        %v3097 = vmul.f32 %v2809, %v3065
        %v3098 = vmul.f32 %v2810, %v3066
        %v3099 = vmul.f32 %v2811, %v3067
        %v3100 = vmul.f32 %v2812, %v3068
        %v3101 = vmul.f32 %v2813, %v3069
        %v3102 = vmul.f32 %v2814, %v3070
        %v3103 = vmul.f32 %v2815, %v3071
        %v3104 = vmul.f32 %v2816, %v3072
        %v3105 = vmul.f32 %v2817, %v3073
        %v3106 = vmul.f32 %v2818, %v3074
        %v3107 = vmul.f32 %v2819, %v3075
        %v3108 = vmul.f32 %v2820, %v3076
        %v3109 = vmul.f32 %v2821, %v3077
        %v3110 = vmul.f32 %v2822, %v3078
        %v3111 = vmul.f32 %v2823, %v3079
        %v3112 = vmul.f32 %v2824, %v3080
        %v3113 = vmul.f32 %v2825, %v3081
        %v3114 = vmul.f32 %v2826, %v3082
        %v3115 = vmul.f32 %v2827, %v3083
        %v3116 = vmul.f32 %v2828, %v3084
        %v3117 = vmul.f32 %v2829, %v3085
        %v3118 = vmul.f32 %v2830, %v3086
        %v3119 = vmul.f32 %v2831, %v3087
        %v3120 = vmul.f32 %v2832, %v3088
        %v3121 = vmul.f32 %v2833, %v3089
        %v3122 = vmul.f32 %v2834, %v3090
        %v3123 = vmul.f32 %v2835, %v3091
        %v3124 = vmul.f32 %v2836, %v3092
        %v3125 = vmul.f32 %v2837, %v3093
        %v3126 = vmul.f32 %v2838, %v3094
        %v3127 = vmul.f32 %v2839, %v3063
        %v3128 = vmul.f32 %v2840, %v3064
        %v3129 = vmul.f32 %v2841, %v3065
        %v3130 = vmul.f32 %v2842, %v3066
        %v3131 = vmul.f32 %v2843, %v3067
        %v3132 = vmul.f32 %v2844, %v3068
        %v3133 = vmul.f32 %v2845, %v3069
        %v3134 = vmul.f32 %v2846, %v3070
        %v3135 = vmul.f32 %v2847, %v3071
        %v3136 = vmul.f32 %v2848, %v3072
        %v3137 = vmul.f32 %v2849, %v3073
        %v3138 = vmul.f32 %v2850, %v3074
        %v3139 = vmul.f32 %v2851, %v3075
        %v3140 = vmul.f32 %v2852, %v3076
        %v3141 = vmul.f32 %v2853, %v3077
        %v3142 = vmul.f32 %v2854, %v3078
        %v3143 = vmul.f32 %v2855, %v3079
        %v3144 = vmul.f32 %v2856, %v3080
        %v3145 = vmul.f32 %v2857, %v3081
        %v3146 = vmul.f32 %v2858, %v3082
        %v3147 = vmul.f32 %v2859, %v3083
        %v3148 = vmul.f32 %v2860, %v3084
        %v3149 = vmul.f32 %v2861, %v3085
        %v3150 = vmul.f32 %v2862, %v3086
        %v3151 = vmul.f32 %v2863, %v3087
        %v3152 = vmul.f32 %v2864, %v3088
        %v3153 = vmul.f32 %v2865, %v3089
        %v3154 = vmul.f32 %v2866, %v3090
        %v3155 = vmul.f32 %v2867, %v3091
        %v3156 = vmul.f32 %v2868, %v3092
        %v3157 = vmul.f32 %v2869, %v3093
        %v3158 = vmul.f32 %v2870, %v3094
        %v3159 = vmul.f32 %v2871, %v3063
        %v3160 = vmul.f32 %v2872, %v3064
        %v3161 = vmul.f32 %v2873, %v3065
        %v3162 = vmul.f32 %v2874, %v3066
        %v3163 = vmul.f32 %v2875, %v3067
        %v3164 = vmul.f32 %v2876, %v3068
        %v3165 = vmul.f32 %v2877, %v3069
        %v3166 = vmul.f32 %v2878, %v3070
        %v3167 = vmul.f32 %v2879, %v3071
        %v3168 = vmul.f32 %v2880, %v3072
        %v3169 = vmul.f32 %v2881, %v3073
        %v3170 = vmul.f32 %v2882, %v3074
        %v3171 = vmul.f32 %v2883, %v3075
        %v3172 = vmul.f32 %v2884, %v3076
        %v3173 = vmul.f32 %v2885, %v3077
        %v3174 = vmul.f32 %v2886, %v3078
        %v3175 = vmul.f32 %v2887, %v3079
        %v3176 = vmul.f32 %v2888, %v3080
        %v3177 = vmul.f32 %v2889, %v3081
        %v3178 = vmul.f32 %v2890, %v3082
        %v3179 = vmul.f32 %v2891, %v3083
        %v3180 = vmul.f32 %v2892, %v3084
        %v3181 = vmul.f32 %v2893, %v3085
        %v3182 = vmul.f32 %v2894, %v3086
        %v3183 = vmul.f32 %v2895, %v3087
        %v3184 = vmul.f32 %v2896, %v3088
        %v3185 = vmul.f32 %v2897, %v3089
        %v3186 = vmul.f32 %v2898, %v3090
        %v3187 = vmul.f32 %v2899, %v3091
        %v3188 = vmul.f32 %v2900, %v3092
        %v3189 = vmul.f32 %v2901, %v3093
        %v3190 = vmul.f32 %v2902, %v3094
        %v3191 = vmul.f32 %v2903, %v3063
        %v3192 = vmul.f32 %v2904, %v3064
        %v3193 = vmul.f32 %v2905, %v3065
        %v3194 = vmul.f32 %v2906, %v3066
        %v3195 = vmul.f32 %v2907, %v3067
        %v3196 = vmul.f32 %v2908, %v3068
        %v3197 = vmul.f32 %v2909, %v3069
        %v3198 = vmul.f32 %v2910, %v3070
        %v3199 = vmul.f32 %v2911, %v3071
        %v3200 = vmul.f32 %v2912, %v3072
        %v3201 = vmul.f32 %v2913, %v3073
        %v3202 = vmul.f32 %v2914, %v3074
        %v3203 = vmul.f32 %v2915, %v3075
        %v3204 = vmul.f32 %v2916, %v3076
        %v3205 = vmul.f32 %v2917, %v3077
        %v3206 = vmul.f32 %v2918, %v3078
        %v3207 = vmul.f32 %v2919, %v3079
        %v3208 = vmul.f32 %v2920, %v3080
        %v3209 = vmul.f32 %v2921, %v3081
        %v3210 = vmul.f32 %v2922, %v3082
        %v3211 = vmul.f32 %v2923, %v3083
        %v3212 = vmul.f32 %v2924, %v3084
        %v3213 = vmul.f32 %v2925, %v3085
        %v3214 = vmul.f32 %v2926, %v3086
        %v3215 = vmul.f32 %v2927, %v3087
        %v3216 = vmul.f32 %v2928, %v3088
        %v3217 = vmul.f32 %v2929, %v3089
        %v3218 = vmul.f32 %v2930, %v3090
        %v3219 = vmul.f32 %v2931, %v3091
        %v3220 = vmul.f32 %v2932, %v3092
        %v3221 = vmul.f32 %v2933, %v3093
        %v3222 = vmul.f32 %v2934, %v3094
        %v3223 = vmul.f32 %v2935, %v3063
        %v3224 = vmul.f32 %v2936, %v3064
        %v3225 = vmul.f32 %v2937, %v3065
        %v3226 = vmul.f32 %v2938, %v3066
        %v3227 = vmul.f32 %v2939, %v3067
        %v3228 = vmul.f32 %v2940, %v3068
        %v3229 = vmul.f32 %v2941, %v3069
        %v3230 = vmul.f32 %v2942, %v3070
        %v3231 = vmul.f32 %v2943, %v3071
        %v3232 = vmul.f32 %v2944, %v3072
        %v3233 = vmul.f32 %v2945, %v3073
        %v3234 = vmul.f32 %v2946, %v3074
        %v3235 = vmul.f32 %v2947, %v3075
        %v3236 = vmul.f32 %v2948, %v3076
        %v3237 = vmul.f32 %v2949, %v3077
        %v3238 = vmul.f32 %v2950, %v3078
        %v3239 = vmul.f32 %v2951, %v3079
        %v3240 = vmul.f32 %v2952, %v3080
        %v3241 = vmul.f32 %v2953, %v3081
        %v3242 = vmul.f32 %v2954, %v3082
        %v3243 = vmul.f32 %v2955, %v3083
        %v3244 = vmul.f32 %v2956, %v3084
        %v3245 = vmul.f32 %v2957, %v3085
        %v3246 = vmul.f32 %v2958, %v3086
        %v3247 = vmul.f32 %v2959, %v3087
        %v3248 = vmul.f32 %v2960, %v3088
        %v3249 = vmul.f32 %v2961, %v3089
        %v3250 = vmul.f32 %v2962, %v3090
        %v3251 = vmul.f32 %v2963, %v3091
        %v3252 = vmul.f32 %v2964, %v3092
        %v3253 = vmul.f32 %v2965, %v3093
        %v3254 = vmul.f32 %v2966, %v3094
        %v3255 = vmul.f32 %v2967, %v3063
        %v3256 = vmul.f32 %v2968, %v3064
        %v3257 = vmul.f32 %v2969, %v3065
        %v3258 = vmul.f32 %v2970, %v3066
        %v3259 = vmul.f32 %v2971, %v3067
        %v3260 = vmul.f32 %v2972, %v3068
        %v3261 = vmul.f32 %v2973, %v3069
        %v3262 = vmul.f32 %v2974, %v3070
        %v3263 = vmul.f32 %v2975, %v3071
        %v3264 = vmul.f32 %v2976, %v3072
        %v3265 = vmul.f32 %v2977, %v3073
        %v3266 = vmul.f32 %v2978, %v3074
        %v3267 = vmul.f32 %v2979, %v3075
        %v3268 = vmul.f32 %v2980, %v3076
        %v3269 = vmul.f32 %v2981, %v3077
        %v3270 = vmul.f32 %v2982, %v3078
        %v3271 = vmul.f32 %v2983, %v3079
        %v3272 = vmul.f32 %v2984, %v3080
        %v3273 = vmul.f32 %v2985, %v3081
        %v3274 = vmul.f32 %v2986, %v3082
        %v3275 = vmul.f32 %v2987, %v3083
        %v3276 = vmul.f32 %v2988, %v3084
        %v3277 = vmul.f32 %v2989, %v3085
        %v3278 = vmul.f32 %v2990, %v3086
        %v3279 = vmul.f32 %v2991, %v3087
        %v3280 = vmul.f32 %v2992, %v3088
        %v3281 = vmul.f32 %v2993, %v3089
        %v3282 = vmul.f32 %v2994, %v3090
        %v3283 = vmul.f32 %v2995, %v3091
        %v3284 = vmul.f32 %v2996, %v3092
        %v3285 = vmul.f32 %v2997, %v3093
        %v3286 = vmul.f32 %v2998, %v3094
        %v3287 = vmul.f32 %v2999, %v3063
        %v3288 = vmul.f32 %v3000, %v3064
        %v3289 = vmul.f32 %v3001, %v3065
        %v3290 = vmul.f32 %v3002, %v3066
        %v3291 = vmul.f32 %v3003, %v3067
        %v3292 = vmul.f32 %v3004, %v3068
        %v3293 = vmul.f32 %v3005, %v3069
        %v3294 = vmul.f32 %v3006, %v3070
        %v3295 = vmul.f32 %v3007, %v3071
        %v3296 = vmul.f32 %v3008, %v3072
        %v3297 = vmul.f32 %v3009, %v3073
        %v3298 = vmul.f32 %v3010, %v3074
        %v3299 = vmul.f32 %v3011, %v3075
        %v3300 = vmul.f32 %v3012, %v3076
        %v3301 = vmul.f32 %v3013, %v3077
        %v3302 = vmul.f32 %v3014, %v3078
        %v3303 = vmul.f32 %v3015, %v3079
        %v3304 = vmul.f32 %v3016, %v3080
        %v3305 = vmul.f32 %v3017, %v3081
        %v3306 = vmul.f32 %v3018, %v3082
        %v3307 = vmul.f32 %v3019, %v3083
        %v3308 = vmul.f32 %v3020, %v3084
        %v3309 = vmul.f32 %v3021, %v3085
        %v3310 = vmul.f32 %v3022, %v3086
        %v3311 = vmul.f32 %v3023, %v3087
        %v3312 = vmul.f32 %v3024, %v3088
        %v3313 = vmul.f32 %v3025, %v3089
        %v3314 = vmul.f32 %v3026, %v3090
        %v3315 = vmul.f32 %v3027, %v3091
        %v3316 = vmul.f32 %v3028, %v3092
        %v3317 = vmul.f32 %v3029, %v3093
        %v3318 = vmul.f32 %v3030, %v3094
        %v3319 = vmul.f32 %v3031, %v3063
        %v3320 = vmul.f32 %v3032, %v3064
        %v3321 = vmul.f32 %v3033, %v3065
        %v3322 = vmul.f32 %v3034, %v3066
        %v3323 = vmul.f32 %v3035, %v3067
        %v3324 = vmul.f32 %v3036, %v3068
        %v3325 = vmul.f32 %v3037, %v3069
        %v3326 = vmul.f32 %v3038, %v3070
        %v3327 = vmul.f32 %v3039, %v3071
        %v3328 = vmul.f32 %v3040, %v3072
        %v3329 = vmul.f32 %v3041, %v3073
        %v3330 = vmul.f32 %v3042, %v3074
        %v3331 = vmul.f32 %v3043, %v3075
        %v3332 = vmul.f32 %v3044, %v3076
        %v3333 = vmul.f32 %v3045, %v3077
        %v3334 = vmul.f32 %v3046, %v3078
        %v3335 = vmul.f32 %v3047, %v3079
        %v3336 = vmul.f32 %v3048, %v3080
        %v3337 = vmul.f32 %v3049, %v3081
        %v3338 = vmul.f32 %v3050, %v3082
        %v3339 = vmul.f32 %v3051, %v3083
        %v3340 = vmul.f32 %v3052, %v3084
        %v3341 = vmul.f32 %v3053, %v3085
        %v3342 = vmul.f32 %v3054, %v3086
        %v3343 = vmul.f32 %v3055, %v3087
        %v3344 = vmul.f32 %v3056, %v3088
        %v3345 = vmul.f32 %v3057, %v3089
        %v3346 = vmul.f32 %v3058, %v3090
        %v3347 = vmul.f32 %v3059, %v3091
        %v3348 = vmul.f32 %v3060, %v3092
        %v3349 = vmul.f32 %v3061, %v3093
        %v3350 = vmul.f32 %v3062, %v3094
        %v3351 = vadd.f32 %v3095, %v3096
        %3352 = vadd.xlane.f32.xlu0 %v3351
        %v3353 = vpop.xlane.xlu0 %3352
        %v3354 = vadd.f32 %v3097, %v3098
        %3355 = vadd.xlane.f32.xlu0 %v3354
        %v3356 = vpop.xlane.xlu0 %3355
        %v3357 = vadd.f32 %v3099, %v3100
        %3358 = vadd.xlane.f32.xlu0 %v3357
        %v3359 = vpop.xlane.xlu0 %3358
        %v3360 = vadd.f32 %v3101, %v3102
        %3361 = vadd.xlane.f32.xlu0 %v3360
        %v3362 = vpop.xlane.xlu0 %3361
        %v3363 = vadd.f32 %v3103, %v3104
        %3364 = vadd.xlane.f32.xlu0 %v3363
        %v3365 = vpop.xlane.xlu0 %3364
        %v3366 = vadd.f32 %v3105, %v3106
        %3367 = vadd.xlane.f32.xlu0 %v3366
        %v3368 = vpop.xlane.xlu0 %3367
        %v3369 = vadd.f32 %v3107, %v3108
        %3370 = vadd.xlane.f32.xlu0 %v3369
        %v3371 = vpop.xlane.xlu0 %3370
        %v3372 = vadd.f32 %v3109, %v3110
        %3373 = vadd.xlane.f32.xlu0 %v3372
        %v3374 = vpop.xlane.xlu0 %3373
        %v3375 = vadd.f32 %v3111, %v3112
        %3376 = vadd.xlane.f32.xlu0 %v3375
        %v3377 = vpop.xlane.xlu0 %3376
        %v3378 = vadd.f32 %v3113, %v3114
        %3379 = vadd.xlane.f32.xlu0 %v3378
        %v3380 = vpop.xlane.xlu0 %3379
        %v3381 = vadd.f32 %v3115, %v3116
        %3382 = vadd.xlane.f32.xlu0 %v3381
        %v3383 = vpop.xlane.xlu0 %3382
        %v3384 = vadd.f32 %v3117, %v3118
        %3385 = vadd.xlane.f32.xlu0 %v3384
        %v3386 = vpop.xlane.xlu0 %3385
        %v3387 = vadd.f32 %v3119, %v3120
        %3388 = vadd.xlane.f32.xlu0 %v3387
        %v3389 = vpop.xlane.xlu0 %3388
        %v3390 = vadd.f32 %v3121, %v3122
        %3391 = vadd.xlane.f32.xlu0 %v3390
        %v3392 = vpop.xlane.xlu0 %3391
        %v3393 = vadd.f32 %v3123, %v3124
        %3394 = vadd.xlane.f32.xlu0 %v3393
        %v3395 = vpop.xlane.xlu0 %3394
        %v3396 = vadd.f32 %v3125, %v3126
        %3397 = vadd.xlane.f32.xlu0 %v3396
        %v3398 = vpop.xlane.xlu0 %3397
        %v3399 = vadd.f32 %v3127, %v3128
        %3400 = vadd.xlane.f32.xlu0 %v3399
        %v3401 = vpop.xlane.xlu0 %3400
        %v3402 = vadd.f32 %v3129, %v3130
        %3403 = vadd.xlane.f32.xlu0 %v3402
        %v3404 = vpop.xlane.xlu0 %3403
        %v3405 = vadd.f32 %v3131, %v3132
        %3406 = vadd.xlane.f32.xlu0 %v3405
        %v3407 = vpop.xlane.xlu0 %3406
        %v3408 = vadd.f32 %v3133, %v3134
        %3409 = vadd.xlane.f32.xlu0 %v3408
        %v3410 = vpop.xlane.xlu0 %3409
        %v3411 = vadd.f32 %v3135, %v3136
        %3412 = vadd.xlane.f32.xlu0 %v3411
        %v3413 = vpop.xlane.xlu0 %3412
        %v3414 = vadd.f32 %v3137, %v3138
        %3415 = vadd.xlane.f32.xlu0 %v3414
        %v3416 = vpop.xlane.xlu0 %3415
        %v3417 = vadd.f32 %v3139, %v3140
        %3418 = vadd.xlane.f32.xlu0 %v3417
        %v3419 = vpop.xlane.xlu0 %3418
        %v3420 = vadd.f32 %v3141, %v3142
        %3421 = vadd.xlane.f32.xlu0 %v3420
        %v3422 = vpop.xlane.xlu0 %3421
        %v3423 = vadd.f32 %v3143, %v3144
        %3424 = vadd.xlane.f32.xlu0 %v3423
        %v3425 = vpop.xlane.xlu0 %3424
        %v3426 = vadd.f32 %v3145, %v3146
        %3427 = vadd.xlane.f32.xlu0 %v3426
        %v3428 = vpop.xlane.xlu0 %3427
        %v3429 = vadd.f32 %v3147, %v3148
        %3430 = vadd.xlane.f32.xlu0 %v3429
        %v3431 = vpop.xlane.xlu0 %3430
        %v3432 = vadd.f32 %v3149, %v3150
        %3433 = vadd.xlane.f32.xlu0 %v3432
        %v3434 = vpop.xlane.xlu0 %3433
        %v3435 = vadd.f32 %v3151, %v3152
        %3436 = vadd.xlane.f32.xlu0 %v3435
        %v3437 = vpop.xlane.xlu0 %3436
        %v3438 = vadd.f32 %v3153, %v3154
        %3439 = vadd.xlane.f32.xlu0 %v3438
        %v3440 = vpop.xlane.xlu0 %3439
        %v3441 = vadd.f32 %v3155, %v3156
        %3442 = vadd.xlane.f32.xlu0 %v3441
        %v3443 = vpop.xlane.xlu0 %3442
        %v3444 = vadd.f32 %v3157, %v3158
        %3445 = vadd.xlane.f32.xlu0 %v3444
        %v3446 = vpop.xlane.xlu0 %3445
        %v3447 = vadd.f32 %v3159, %v3160
        %3448 = vadd.xlane.f32.xlu0 %v3447
        %v3449 = vpop.xlane.xlu0 %3448
        %v3450 = vadd.f32 %v3161, %v3162
        %3451 = vadd.xlane.f32.xlu0 %v3450
        %v3452 = vpop.xlane.xlu0 %3451
        %v3453 = vadd.f32 %v3163, %v3164
        %3454 = vadd.xlane.f32.xlu0 %v3453
        %v3455 = vpop.xlane.xlu0 %3454
        %v3456 = vadd.f32 %v3165, %v3166
        %3457 = vadd.xlane.f32.xlu0 %v3456
        %v3458 = vpop.xlane.xlu0 %3457
        %v3459 = vadd.f32 %v3167, %v3168
        %3460 = vadd.xlane.f32.xlu0 %v3459
        %v3461 = vpop.xlane.xlu0 %3460
        %v3462 = vadd.f32 %v3169, %v3170
        %3463 = vadd.xlane.f32.xlu0 %v3462
        %v3464 = vpop.xlane.xlu0 %3463
        %v3465 = vadd.f32 %v3171, %v3172
        %3466 = vadd.xlane.f32.xlu0 %v3465
        %v3467 = vpop.xlane.xlu0 %3466
        %v3468 = vadd.f32 %v3173, %v3174
        %3469 = vadd.xlane.f32.xlu0 %v3468
        %v3470 = vpop.xlane.xlu0 %3469
        %v3471 = vadd.f32 %v3175, %v3176
        %3472 = vadd.xlane.f32.xlu0 %v3471
        %v3473 = vpop.xlane.xlu0 %3472
        %v3474 = vadd.f32 %v3177, %v3178
        %3475 = vadd.xlane.f32.xlu0 %v3474
        %v3476 = vpop.xlane.xlu0 %3475
        %v3477 = vadd.f32 %v3179, %v3180
        %3478 = vadd.xlane.f32.xlu0 %v3477
        %v3479 = vpop.xlane.xlu0 %3478
        %v3480 = vadd.f32 %v3181, %v3182
        %3481 = vadd.xlane.f32.xlu0 %v3480
        %v3482 = vpop.xlane.xlu0 %3481
        %v3483 = vadd.f32 %v3183, %v3184
        %3484 = vadd.xlane.f32.xlu0 %v3483
        %v3485 = vpop.xlane.xlu0 %3484
        %v3486 = vadd.f32 %v3185, %v3186
        %3487 = vadd.xlane.f32.xlu0 %v3486
        %v3488 = vpop.xlane.xlu0 %3487
        %v3489 = vadd.f32 %v3187, %v3188
        %3490 = vadd.xlane.f32.xlu0 %v3489
        %v3491 = vpop.xlane.xlu0 %3490
        %v3492 = vadd.f32 %v3189, %v3190
        %3493 = vadd.xlane.f32.xlu0 %v3492
        %v3494 = vpop.xlane.xlu0 %3493
        %v3495 = vadd.f32 %v3191, %v3192
        %3496 = vadd.xlane.f32.xlu0 %v3495
        %v3497 = vpop.xlane.xlu0 %3496
        %v3498 = vadd.f32 %v3193, %v3194
        %3499 = vadd.xlane.f32.xlu0 %v3498
        %v3500 = vpop.xlane.xlu0 %3499
        %v3501 = vadd.f32 %v3195, %v3196
        %3502 = vadd.xlane.f32.xlu0 %v3501
        %v3503 = vpop.xlane.xlu0 %3502
        %v3504 = vadd.f32 %v3197, %v3198
        %3505 = vadd.xlane.f32.xlu0 %v3504
        %v3506 = vpop.xlane.xlu0 %3505
        %v3507 = vadd.f32 %v3199, %v3200
        %3508 = vadd.xlane.f32.xlu0 %v3507
        %v3509 = vpop.xlane.xlu0 %3508
        %v3510 = vadd.f32 %v3201, %v3202
        %3511 = vadd.xlane.f32.xlu0 %v3510
        %v3512 = vpop.xlane.xlu0 %3511
        %v3513 = vadd.f32 %v3203, %v3204
        %3514 = vadd.xlane.f32.xlu0 %v3513
        %v3515 = vpop.xlane.xlu0 %3514
        %v3516 = vadd.f32 %v3205, %v3206
        %3517 = vadd.xlane.f32.xlu0 %v3516
        %v3518 = vpop.xlane.xlu0 %3517
        %v3519 = vadd.f32 %v3207, %v3208
        %3520 = vadd.xlane.f32.xlu0 %v3519
        %v3521 = vpop.xlane.xlu0 %3520
        %v3522 = vadd.f32 %v3209, %v3210
        %3523 = vadd.xlane.f32.xlu0 %v3522
        %v3524 = vpop.xlane.xlu0 %3523
        %v3525 = vadd.f32 %v3211, %v3212
        %3526 = vadd.xlane.f32.xlu0 %v3525
        %v3527 = vpop.xlane.xlu0 %3526
        %v3528 = vadd.f32 %v3213, %v3214
        %3529 = vadd.xlane.f32.xlu0 %v3528
        %v3530 = vpop.xlane.xlu0 %3529
        %v3531 = vadd.f32 %v3215, %v3216
        %3532 = vadd.xlane.f32.xlu0 %v3531
        %v3533 = vpop.xlane.xlu0 %3532
        %v3534 = vadd.f32 %v3217, %v3218
        %3535 = vadd.xlane.f32.xlu0 %v3534
        %v3536 = vpop.xlane.xlu0 %3535
        %v3537 = vadd.f32 %v3219, %v3220
        %3538 = vadd.xlane.f32.xlu0 %v3537
        %v3539 = vpop.xlane.xlu0 %3538
        %v3540 = vadd.f32 %v3221, %v3222
        %3541 = vadd.xlane.f32.xlu0 %v3540
        %v3542 = vpop.xlane.xlu0 %3541
        %v3543 = vadd.f32 %v3223, %v3224
        %3544 = vadd.xlane.f32.xlu0 %v3543
        %v3545 = vpop.xlane.xlu0 %3544
        %v3546 = vadd.f32 %v3225, %v3226
        %3547 = vadd.xlane.f32.xlu0 %v3546
        %v3548 = vpop.xlane.xlu0 %3547
        %v3549 = vadd.f32 %v3227, %v3228
        %3550 = vadd.xlane.f32.xlu0 %v3549
        %v3551 = vpop.xlane.xlu0 %3550
        %v3552 = vadd.f32 %v3229, %v3230
        %3553 = vadd.xlane.f32.xlu0 %v3552
        %v3554 = vpop.xlane.xlu0 %3553
        %v3555 = vadd.f32 %v3231, %v3232
        %3556 = vadd.xlane.f32.xlu0 %v3555
        %v3557 = vpop.xlane.xlu0 %3556
        %v3558 = vadd.f32 %v3233, %v3234
        %3559 = vadd.xlane.f32.xlu0 %v3558
        %v3560 = vpop.xlane.xlu0 %3559
        %v3561 = vadd.f32 %v3235, %v3236
        %3562 = vadd.xlane.f32.xlu0 %v3561
        %v3563 = vpop.xlane.xlu0 %3562
        %v3564 = vadd.f32 %v3237, %v3238
        %3565 = vadd.xlane.f32.xlu0 %v3564
        %v3566 = vpop.xlane.xlu0 %3565
        %v3567 = vadd.f32 %v3239, %v3240
        %3568 = vadd.xlane.f32.xlu0 %v3567
        %v3569 = vpop.xlane.xlu0 %3568
        %v3570 = vadd.f32 %v3241, %v3242
        %3571 = vadd.xlane.f32.xlu0 %v3570
        %v3572 = vpop.xlane.xlu0 %3571
        %v3573 = vadd.f32 %v3243, %v3244
        %3574 = vadd.xlane.f32.xlu0 %v3573
        %v3575 = vpop.xlane.xlu0 %3574
        %v3576 = vadd.f32 %v3245, %v3246
        %3577 = vadd.xlane.f32.xlu0 %v3576
        %v3578 = vpop.xlane.xlu0 %3577
        %v3579 = vadd.f32 %v3247, %v3248
        %3580 = vadd.xlane.f32.xlu0 %v3579
        %v3581 = vpop.xlane.xlu0 %3580
        %v3582 = vadd.f32 %v3249, %v3250
        %3583 = vadd.xlane.f32.xlu0 %v3582
        %v3584 = vpop.xlane.xlu0 %3583
        %v3585 = vadd.f32 %v3251, %v3252
        %3586 = vadd.xlane.f32.xlu0 %v3585
        %v3587 = vpop.xlane.xlu0 %3586
        %v3588 = vadd.f32 %v3253, %v3254
        %3589 = vadd.xlane.f32.xlu0 %v3588
        %v3590 = vpop.xlane.xlu0 %3589
        %v3591 = vadd.f32 %v3255, %v3256
        %3592 = vadd.xlane.f32.xlu0 %v3591
        %v3593 = vpop.xlane.xlu0 %3592
        %v3594 = vadd.f32 %v3257, %v3258
        %3595 = vadd.xlane.f32.xlu0 %v3594
        %v3596 = vpop.xlane.xlu0 %3595
        %v3597 = vadd.f32 %v3259, %v3260
        %3598 = vadd.xlane.f32.xlu0 %v3597
        %v3599 = vpop.xlane.xlu0 %3598
        %v3600 = vadd.f32 %v3261, %v3262
        %3601 = vadd.xlane.f32.xlu0 %v3600
        %v3602 = vpop.xlane.xlu0 %3601
        %v3603 = vadd.f32 %v3263, %v3264
        %3604 = vadd.xlane.f32.xlu0 %v3603
        %v3605 = vpop.xlane.xlu0 %3604
        %v3606 = vadd.f32 %v3265, %v3266
        %3607 = vadd.xlane.f32.xlu0 %v3606
        %v3608 = vpop.xlane.xlu0 %3607
        %v3609 = vadd.f32 %v3267, %v3268
        %3610 = vadd.xlane.f32.xlu0 %v3609
        %v3611 = vpop.xlane.xlu0 %3610
        %v3612 = vadd.f32 %v3269, %v3270
        %3613 = vadd.xlane.f32.xlu0 %v3612
        %v3614 = vpop.xlane.xlu0 %3613
        %v3615 = vadd.f32 %v3271, %v3272
        %3616 = vadd.xlane.f32.xlu0 %v3615
        %v3617 = vpop.xlane.xlu0 %3616
        %v3618 = vadd.f32 %v3273, %v3274
        %3619 = vadd.xlane.f32.xlu0 %v3618
        %v3620 = vpop.xlane.xlu0 %3619
        %v3621 = vadd.f32 %v3275, %v3276
        %3622 = vadd.xlane.f32.xlu0 %v3621
        %v3623 = vpop.xlane.xlu0 %3622
        %v3624 = vadd.f32 %v3277, %v3278
        %3625 = vadd.xlane.f32.xlu0 %v3624
        %v3626 = vpop.xlane.xlu0 %3625
        %v3627 = vadd.f32 %v3279, %v3280
        %3628 = vadd.xlane.f32.xlu0 %v3627
        %v3629 = vpop.xlane.xlu0 %3628
        %v3630 = vadd.f32 %v3281, %v3282
        %3631 = vadd.xlane.f32.xlu0 %v3630
        %v3632 = vpop.xlane.xlu0 %3631
        %v3633 = vadd.f32 %v3283, %v3284
        %3634 = vadd.xlane.f32.xlu0 %v3633
        %v3635 = vpop.xlane.xlu0 %3634
        %v3636 = vadd.f32 %v3285, %v3286
        %3637 = vadd.xlane.f32.xlu0 %v3636
        %v3638 = vpop.xlane.xlu0 %3637
        %v3639 = vadd.f32 %v3287, %v3288
        %3640 = vadd.xlane.f32.xlu0 %v3639
        %v3641 = vpop.xlane.xlu0 %3640
        %v3642 = vadd.f32 %v3289, %v3290
        %3643 = vadd.xlane.f32.xlu0 %v3642
        %v3644 = vpop.xlane.xlu0 %3643
        %v3645 = vadd.f32 %v3291, %v3292
        %3646 = vadd.xlane.f32.xlu0 %v3645
        %v3647 = vpop.xlane.xlu0 %3646
        %v3648 = vadd.f32 %v3293, %v3294
        %3649 = vadd.xlane.f32.xlu0 %v3648
        %v3650 = vpop.xlane.xlu0 %3649
        %v3651 = vadd.f32 %v3295, %v3296
        %3652 = vadd.xlane.f32.xlu0 %v3651
        %v3653 = vpop.xlane.xlu0 %3652
        %v3654 = vadd.f32 %v3297, %v3298
        %3655 = vadd.xlane.f32.xlu0 %v3654
        %v3656 = vpop.xlane.xlu0 %3655
        %v3657 = vadd.f32 %v3299, %v3300
        %3658 = vadd.xlane.f32.xlu0 %v3657
        %v3659 = vpop.xlane.xlu0 %3658
        %v3660 = vadd.f32 %v3301, %v3302
        %3661 = vadd.xlane.f32.xlu0 %v3660
        %v3662 = vpop.xlane.xlu0 %3661
        %v3663 = vadd.f32 %v3303, %v3304
        %3664 = vadd.xlane.f32.xlu0 %v3663
        %v3665 = vpop.xlane.xlu0 %3664
        %v3666 = vadd.f32 %v3305, %v3306
        %3667 = vadd.xlane.f32.xlu0 %v3666
        %v3668 = vpop.xlane.xlu0 %3667
        %v3669 = vadd.f32 %v3307, %v3308
        %3670 = vadd.xlane.f32.xlu0 %v3669
        %v3671 = vpop.xlane.xlu0 %3670
        %v3672 = vadd.f32 %v3309, %v3310
        %3673 = vadd.xlane.f32.xlu0 %v3672
        %v3674 = vpop.xlane.xlu0 %3673
        %v3675 = vadd.f32 %v3311, %v3312
        %3676 = vadd.xlane.f32.xlu0 %v3675
        %v3677 = vpop.xlane.xlu0 %3676
        %v3678 = vadd.f32 %v3313, %v3314
        %3679 = vadd.xlane.f32.xlu0 %v3678
        %v3680 = vpop.xlane.xlu0 %3679
        %v3681 = vadd.f32 %v3315, %v3316
        %3682 = vadd.xlane.f32.xlu0 %v3681
        %v3683 = vpop.xlane.xlu0 %3682
        %v3684 = vadd.f32 %v3317, %v3318
        %3685 = vadd.xlane.f32.xlu0 %v3684
        %v3686 = vpop.xlane.xlu0 %3685
        %v3687 = vadd.f32 %v3319, %v3320
        %3688 = vadd.xlane.f32.xlu0 %v3687
        %v3689 = vpop.xlane.xlu0 %3688
        %v3690 = vadd.f32 %v3321, %v3322
        %3691 = vadd.xlane.f32.xlu0 %v3690
        %v3692 = vpop.xlane.xlu0 %3691
        %v3693 = vadd.f32 %v3323, %v3324
        %3694 = vadd.xlane.f32.xlu0 %v3693
        %v3695 = vpop.xlane.xlu0 %3694
        %v3696 = vadd.f32 %v3325, %v3326
        %3697 = vadd.xlane.f32.xlu0 %v3696
        %v3698 = vpop.xlane.xlu0 %3697
        %v3699 = vadd.f32 %v3327, %v3328
        %3700 = vadd.xlane.f32.xlu0 %v3699
        %v3701 = vpop.xlane.xlu0 %3700
        %v3702 = vadd.f32 %v3329, %v3330
        %3703 = vadd.xlane.f32.xlu0 %v3702
        %v3704 = vpop.xlane.xlu0 %3703
        %v3705 = vadd.f32 %v3331, %v3332
        %3706 = vadd.xlane.f32.xlu0 %v3705
        %v3707 = vpop.xlane.xlu0 %3706
        %v3708 = vadd.f32 %v3333, %v3334
        %3709 = vadd.xlane.f32.xlu0 %v3708
        %v3710 = vpop.xlane.xlu0 %3709
        %v3711 = vadd.f32 %v3335, %v3336
        %3712 = vadd.xlane.f32.xlu0 %v3711
        %v3713 = vpop.xlane.xlu0 %3712
        %v3714 = vadd.f32 %v3337, %v3338
        %3715 = vadd.xlane.f32.xlu0 %v3714
        %v3716 = vpop.xlane.xlu0 %3715
        %v3717 = vadd.f32 %v3339, %v3340
        %3718 = vadd.xlane.f32.xlu0 %v3717
        %v3719 = vpop.xlane.xlu0 %3718
        %v3720 = vadd.f32 %v3341, %v3342
        %3721 = vadd.xlane.f32.xlu0 %v3720
        %v3722 = vpop.xlane.xlu0 %3721
        %v3723 = vadd.f32 %v3343, %v3344
        %3724 = vadd.xlane.f32.xlu0 %v3723
        %v3725 = vpop.xlane.xlu0 %3724
        %v3726 = vadd.f32 %v3345, %v3346
        %3727 = vadd.xlane.f32.xlu0 %v3726
        %v3728 = vpop.xlane.xlu0 %3727
        %v3729 = vadd.f32 %v3347, %v3348
        %3730 = vadd.xlane.f32.xlu0 %v3729
        %v3731 = vpop.xlane.xlu0 %3730
        %v3732 = vadd.f32 %v3349, %v3350
        %3733 = vadd.xlane.f32.xlu0 %v3732
        %v3734 = vpop.xlane.xlu0 %3733
        %v3735 = vld [vmem:[%s341] sm:$0x1]
        %v3737 = vlaneseq
        %v3738 = vshrl.u32 %v3737, 7
        %v3739 = vsub.s32 0, %v3738
        %v3740 = vrot.slane %v3735, %v3739
        %3742 = vbcast.lane.b32.xlu0 %v3740, 256
        %v3743 = vpop.permute.xlu0 %3742
        %s3745 = sor.u32 256, 8
        %3746 = vbcast.lane.b32.xlu0 %v3740, %s3745
        %v3747 = vpop.permute.xlu0 %3746
        %s3749 = sor.u32 256, 16
        %3750 = vbcast.lane.b32.xlu0 %v3740, %s3749
        %v3751 = vpop.permute.xlu0 %3750
        %s3753 = sor.u32 256, 24
        %3754 = vbcast.lane.b32.xlu0 %v3740, %s3753
        %v3755 = vpop.permute.xlu0 %3754
        %s3757 = sor.u32 256, 32
        %3758 = vbcast.lane.b32.xlu0 %v3740, %s3757
        %v3759 = vpop.permute.xlu0 %3758
        %s3761 = sor.u32 256, 40
        %3762 = vbcast.lane.b32.xlu0 %v3740, %s3761
        %v3763 = vpop.permute.xlu0 %3762
        %s3765 = sor.u32 256, 48
        %3766 = vbcast.lane.b32.xlu0 %v3740, %s3765
        %v3767 = vpop.permute.xlu0 %3766
        %s3769 = sor.u32 256, 56
        %3770 = vbcast.lane.b32.xlu0 %v3740, %s3769
        %v3771 = vpop.permute.xlu0 %3770
        %s3773 = sor.u32 256, 64
        %3774 = vbcast.lane.b32.xlu0 %v3740, %s3773
        %v3775 = vpop.permute.xlu0 %3774
        %s3777 = sor.u32 256, 72
        %3778 = vbcast.lane.b32.xlu0 %v3740, %s3777
        %v3779 = vpop.permute.xlu0 %3778
        %s3781 = sor.u32 256, 80
        %3782 = vbcast.lane.b32.xlu0 %v3740, %s3781
        %v3783 = vpop.permute.xlu0 %3782
        %s3785 = sor.u32 256, 88
        %3786 = vbcast.lane.b32.xlu0 %v3740, %s3785
        %v3787 = vpop.permute.xlu0 %3786
        %s3789 = sor.u32 256, 96
        %3790 = vbcast.lane.b32.xlu0 %v3740, %s3789
        %v3791 = vpop.permute.xlu0 %3790
        %s3793 = sor.u32 256, 104
        %3794 = vbcast.lane.b32.xlu0 %v3740, %s3793
        %v3795 = vpop.permute.xlu0 %3794
        %s3797 = sor.u32 256, 112
        %3798 = vbcast.lane.b32.xlu0 %v3740, %s3797
        %v3799 = vpop.permute.xlu0 %3798
        %s3801 = sor.u32 256, 120
        %3802 = vbcast.lane.b32.xlu0 %v3740, %s3801
        %v3803 = vpop.permute.xlu0 %3802
        %v3820 = vadd.f32 %v3353, %v3743
        %v3821 = vadd.f32 %v3356, %v3747
        %v3822 = vadd.f32 %v3359, %v3751
        %v3823 = vadd.f32 %v3362, %v3755
        %v3824 = vadd.f32 %v3365, %v3759
        %v3825 = vadd.f32 %v3368, %v3763
        %v3826 = vadd.f32 %v3371, %v3767
        %v3827 = vadd.f32 %v3374, %v3771
        %v3828 = vadd.f32 %v3377, %v3775
        %v3829 = vadd.f32 %v3380, %v3779
        %v3830 = vadd.f32 %v3383, %v3783
        %v3831 = vadd.f32 %v3386, %v3787
        %v3832 = vadd.f32 %v3389, %v3791
        %v3833 = vadd.f32 %v3392, %v3795
        %v3834 = vadd.f32 %v3395, %v3799
        %v3835 = vadd.f32 %v3398, %v3803
        %v3836 = vadd.f32 %v3401, %v3743
        %v3837 = vadd.f32 %v3404, %v3747
        %v3838 = vadd.f32 %v3407, %v3751
        %v3839 = vadd.f32 %v3410, %v3755
        %v3840 = vadd.f32 %v3413, %v3759
        %v3841 = vadd.f32 %v3416, %v3763
        %v3842 = vadd.f32 %v3419, %v3767
        %v3843 = vadd.f32 %v3422, %v3771
        %v3844 = vadd.f32 %v3425, %v3775
        %v3845 = vadd.f32 %v3428, %v3779
        %v3846 = vadd.f32 %v3431, %v3783
        %v3847 = vadd.f32 %v3434, %v3787
        %v3848 = vadd.f32 %v3437, %v3791
        %v3849 = vadd.f32 %v3440, %v3795
        %v3850 = vadd.f32 %v3443, %v3799
        %v3851 = vadd.f32 %v3446, %v3803
        %v3852 = vadd.f32 %v3449, %v3743
        %v3853 = vadd.f32 %v3452, %v3747
        %v3854 = vadd.f32 %v3455, %v3751
        %v3855 = vadd.f32 %v3458, %v3755
        %v3856 = vadd.f32 %v3461, %v3759
        %v3857 = vadd.f32 %v3464, %v3763
        %v3858 = vadd.f32 %v3467, %v3767
        %v3859 = vadd.f32 %v3470, %v3771
        %v3860 = vadd.f32 %v3473, %v3775
        %v3861 = vadd.f32 %v3476, %v3779
        %v3862 = vadd.f32 %v3479, %v3783
        %v3863 = vadd.f32 %v3482, %v3787
        %v3864 = vadd.f32 %v3485, %v3791
        %v3865 = vadd.f32 %v3488, %v3795
        %v3866 = vadd.f32 %v3491, %v3799
        %v3867 = vadd.f32 %v3494, %v3803
        %v3868 = vadd.f32 %v3497, %v3743
        %v3869 = vadd.f32 %v3500, %v3747
        %v3870 = vadd.f32 %v3503, %v3751
        %v3871 = vadd.f32 %v3506, %v3755
        %v3872 = vadd.f32 %v3509, %v3759
        %v3873 = vadd.f32 %v3512, %v3763
        %v3874 = vadd.f32 %v3515, %v3767
        %v3875 = vadd.f32 %v3518, %v3771
        %v3876 = vadd.f32 %v3521, %v3775
        %v3877 = vadd.f32 %v3524, %v3779
        %v3878 = vadd.f32 %v3527, %v3783
        %v3879 = vadd.f32 %v3530, %v3787
        %v3880 = vadd.f32 %v3533, %v3791
        %v3881 = vadd.f32 %v3536, %v3795
        %v3882 = vadd.f32 %v3539, %v3799
        %v3883 = vadd.f32 %v3542, %v3803
        %v3884 = vadd.f32 %v3545, %v3743
        %v3885 = vadd.f32 %v3548, %v3747
        %v3886 = vadd.f32 %v3551, %v3751
        %v3887 = vadd.f32 %v3554, %v3755
        %v3888 = vadd.f32 %v3557, %v3759
        %v3889 = vadd.f32 %v3560, %v3763
        %v3890 = vadd.f32 %v3563, %v3767
        %v3891 = vadd.f32 %v3566, %v3771
        %v3892 = vadd.f32 %v3569, %v3775
        %v3893 = vadd.f32 %v3572, %v3779
        %v3894 = vadd.f32 %v3575, %v3783
        %v3895 = vadd.f32 %v3578, %v3787
        %v3896 = vadd.f32 %v3581, %v3791
        %v3897 = vadd.f32 %v3584, %v3795
        %v3898 = vadd.f32 %v3587, %v3799
        %v3899 = vadd.f32 %v3590, %v3803
        %v3900 = vadd.f32 %v3593, %v3743
        %v3901 = vadd.f32 %v3596, %v3747
        %v3902 = vadd.f32 %v3599, %v3751
        %v3903 = vadd.f32 %v3602, %v3755
        %v3904 = vadd.f32 %v3605, %v3759
        %v3905 = vadd.f32 %v3608, %v3763
        %v3906 = vadd.f32 %v3611, %v3767
        %v3907 = vadd.f32 %v3614, %v3771
        %v3908 = vadd.f32 %v3617, %v3775
        %v3909 = vadd.f32 %v3620, %v3779
        %v3910 = vadd.f32 %v3623, %v3783
        %v3911 = vadd.f32 %v3626, %v3787
        %v3912 = vadd.f32 %v3629, %v3791
        %v3913 = vadd.f32 %v3632, %v3795
        %v3914 = vadd.f32 %v3635, %v3799
        %v3915 = vadd.f32 %v3638, %v3803
        %v3916 = vadd.f32 %v3641, %v3743
        %v3917 = vadd.f32 %v3644, %v3747
        %v3918 = vadd.f32 %v3647, %v3751
        %v3919 = vadd.f32 %v3650, %v3755
        %v3920 = vadd.f32 %v3653, %v3759
        %v3921 = vadd.f32 %v3656, %v3763
        %v3922 = vadd.f32 %v3659, %v3767
        %v3923 = vadd.f32 %v3662, %v3771
        %v3924 = vadd.f32 %v3665, %v3775
        %v3925 = vadd.f32 %v3668, %v3779
        %v3926 = vadd.f32 %v3671, %v3783
        %v3927 = vadd.f32 %v3674, %v3787
        %v3928 = vadd.f32 %v3677, %v3791
        %v3929 = vadd.f32 %v3680, %v3795
        %v3930 = vadd.f32 %v3683, %v3799
        %v3931 = vadd.f32 %v3686, %v3803
        %v3932 = vadd.f32 %v3689, %v3743
        %v3933 = vadd.f32 %v3692, %v3747
        %v3934 = vadd.f32 %v3695, %v3751
        %v3935 = vadd.f32 %v3698, %v3755
        %v3936 = vadd.f32 %v3701, %v3759
        %v3937 = vadd.f32 %v3704, %v3763
        %v3938 = vadd.f32 %v3707, %v3767
        %v3939 = vadd.f32 %v3710, %v3771
        %v3940 = vadd.f32 %v3713, %v3775
        %v3941 = vadd.f32 %v3716, %v3779
        %v3942 = vadd.f32 %v3719, %v3783
        %v3943 = vadd.f32 %v3722, %v3787
        %v3944 = vadd.f32 %v3725, %v3791
        %v3945 = vadd.f32 %v3728, %v3795
        %v3946 = vadd.f32 %v3731, %v3799
        %v3947 = vadd.f32 %v3734, %v3803
        %4076 = vset.pattern.permute.xlu0 0
        %4077 = vperm.xlu0 %4076, %v3820
        %v4078 = vpop.permute.xlu0 %4077
        %4079 = vset.pattern.permute.xlu0 0
        %4080 = vperm.xlu0 %4079, %v3821
        %v4081 = vpop.permute.xlu0 %4080
        %4082 = vset.pattern.permute.xlu0 0
        %4083 = vperm.xlu0 %4082, %v3822
        %v4084 = vpop.permute.xlu0 %4083
        %4085 = vset.pattern.permute.xlu0 0
        %4086 = vperm.xlu0 %4085, %v3823
        %v4087 = vpop.permute.xlu0 %4086
        %4088 = vset.pattern.permute.xlu0 0
        %4089 = vperm.xlu0 %4088, %v3824
        %v4090 = vpop.permute.xlu0 %4089
        %4091 = vset.pattern.permute.xlu0 0
        %4092 = vperm.xlu0 %4091, %v3825
        %v4093 = vpop.permute.xlu0 %4092
        %4094 = vset.pattern.permute.xlu0 0
        %4095 = vperm.xlu0 %4094, %v3826
        %v4096 = vpop.permute.xlu0 %4095
        %4097 = vset.pattern.permute.xlu0 0
        %4098 = vperm.xlu0 %4097, %v3827
        %v4099 = vpop.permute.xlu0 %4098
        %4100 = vset.pattern.permute.xlu0 0
        %4101 = vperm.xlu0 %4100, %v3828
        %v4102 = vpop.permute.xlu0 %4101
        %4103 = vset.pattern.permute.xlu0 0
        %4104 = vperm.xlu0 %4103, %v3829
        %v4105 = vpop.permute.xlu0 %4104
        %4106 = vset.pattern.permute.xlu0 0
        %4107 = vperm.xlu0 %4106, %v3830
        %v4108 = vpop.permute.xlu0 %4107
        %4109 = vset.pattern.permute.xlu0 0
        %4110 = vperm.xlu0 %4109, %v3831
        %v4111 = vpop.permute.xlu0 %4110
        %4112 = vset.pattern.permute.xlu0 0
        %4113 = vperm.xlu0 %4112, %v3832
        %v4114 = vpop.permute.xlu0 %4113
        %4115 = vset.pattern.permute.xlu0 0
        %4116 = vperm.xlu0 %4115, %v3833
        %v4117 = vpop.permute.xlu0 %4116
        %4118 = vset.pattern.permute.xlu0 0
        %4119 = vperm.xlu0 %4118, %v3834
        %v4120 = vpop.permute.xlu0 %4119
        %4121 = vset.pattern.permute.xlu0 0
        %4122 = vperm.xlu0 %4121, %v3835
        %v4123 = vpop.permute.xlu0 %4122
        %4124 = vset.pattern.permute.xlu0 0
        %4125 = vperm.xlu0 %4124, %v3836
        %v4126 = vpop.permute.xlu0 %4125
        %4127 = vset.pattern.permute.xlu0 0
        %4128 = vperm.xlu0 %4127, %v3837
        %v4129 = vpop.permute.xlu0 %4128
        %4130 = vset.pattern.permute.xlu0 0
        %4131 = vperm.xlu0 %4130, %v3838
        %v4132 = vpop.permute.xlu0 %4131
        %4133 = vset.pattern.permute.xlu0 0
        %4134 = vperm.xlu0 %4133, %v3839
        %v4135 = vpop.permute.xlu0 %4134
        %4136 = vset.pattern.permute.xlu0 0
        %4137 = vperm.xlu0 %4136, %v3840
        %v4138 = vpop.permute.xlu0 %4137
        %4139 = vset.pattern.permute.xlu0 0
        %4140 = vperm.xlu0 %4139, %v3841
        %v4141 = vpop.permute.xlu0 %4140
        %4142 = vset.pattern.permute.xlu0 0
        %4143 = vperm.xlu0 %4142, %v3842
        %v4144 = vpop.permute.xlu0 %4143
        %4145 = vset.pattern.permute.xlu0 0
        %4146 = vperm.xlu0 %4145, %v3843
        %v4147 = vpop.permute.xlu0 %4146
        %4148 = vset.pattern.permute.xlu0 0
        %4149 = vperm.xlu0 %4148, %v3844
        %v4150 = vpop.permute.xlu0 %4149
        %4151 = vset.pattern.permute.xlu0 0
        %4152 = vperm.xlu0 %4151, %v3845
        %v4153 = vpop.permute.xlu0 %4152
        %4154 = vset.pattern.permute.xlu0 0
        %4155 = vperm.xlu0 %4154, %v3846
        %v4156 = vpop.permute.xlu0 %4155
        %4157 = vset.pattern.permute.xlu0 0
        %4158 = vperm.xlu0 %4157, %v3847
        %v4159 = vpop.permute.xlu0 %4158
        %4160 = vset.pattern.permute.xlu0 0
        %4161 = vperm.xlu0 %4160, %v3848
        %v4162 = vpop.permute.xlu0 %4161
        %4163 = vset.pattern.permute.xlu0 0
        %4164 = vperm.xlu0 %4163, %v3849
        %v4165 = vpop.permute.xlu0 %4164
        %4166 = vset.pattern.permute.xlu0 0
        %4167 = vperm.xlu0 %4166, %v3850
        %v4168 = vpop.permute.xlu0 %4167
        %4169 = vset.pattern.permute.xlu0 0
        %4170 = vperm.xlu0 %4169, %v3851
        %v4171 = vpop.permute.xlu0 %4170
        %4172 = vset.pattern.permute.xlu0 0
        %4173 = vperm.xlu0 %4172, %v3852
        %v4174 = vpop.permute.xlu0 %4173
        %4175 = vset.pattern.permute.xlu0 0
        %4176 = vperm.xlu0 %4175, %v3853
        %v4177 = vpop.permute.xlu0 %4176
        %4178 = vset.pattern.permute.xlu0 0
        %4179 = vperm.xlu0 %4178, %v3854
        %v4180 = vpop.permute.xlu0 %4179
        %4181 = vset.pattern.permute.xlu0 0
        %4182 = vperm.xlu0 %4181, %v3855
        %v4183 = vpop.permute.xlu0 %4182
        %4184 = vset.pattern.permute.xlu0 0
        %4185 = vperm.xlu0 %4184, %v3856
        %v4186 = vpop.permute.xlu0 %4185
        %4187 = vset.pattern.permute.xlu0 0
        %4188 = vperm.xlu0 %4187, %v3857
        %v4189 = vpop.permute.xlu0 %4188
        %4190 = vset.pattern.permute.xlu0 0
        %4191 = vperm.xlu0 %4190, %v3858
        %v4192 = vpop.permute.xlu0 %4191
        %4193 = vset.pattern.permute.xlu0 0
        %4194 = vperm.xlu0 %4193, %v3859
        %v4195 = vpop.permute.xlu0 %4194
        %4196 = vset.pattern.permute.xlu0 0
        %4197 = vperm.xlu0 %4196, %v3860
        %v4198 = vpop.permute.xlu0 %4197
        %4199 = vset.pattern.permute.xlu0 0
        %4200 = vperm.xlu0 %4199, %v3861
        %v4201 = vpop.permute.xlu0 %4200
        %4202 = vset.pattern.permute.xlu0 0
        %4203 = vperm.xlu0 %4202, %v3862
        %v4204 = vpop.permute.xlu0 %4203
        %4205 = vset.pattern.permute.xlu0 0
        %4206 = vperm.xlu0 %4205, %v3863
        %v4207 = vpop.permute.xlu0 %4206
        %4208 = vset.pattern.permute.xlu0 0
        %4209 = vperm.xlu0 %4208, %v3864
        %v4210 = vpop.permute.xlu0 %4209
        %4211 = vset.pattern.permute.xlu0 0
        %4212 = vperm.xlu0 %4211, %v3865
        %v4213 = vpop.permute.xlu0 %4212
        %4214 = vset.pattern.permute.xlu0 0
        %4215 = vperm.xlu0 %4214, %v3866
        %v4216 = vpop.permute.xlu0 %4215
        %4217 = vset.pattern.permute.xlu0 0
        %4218 = vperm.xlu0 %4217, %v3867
        %v4219 = vpop.permute.xlu0 %4218
        %4220 = vset.pattern.permute.xlu0 0
        %4221 = vperm.xlu0 %4220, %v3868
        %v4222 = vpop.permute.xlu0 %4221
        %4223 = vset.pattern.permute.xlu0 0
        %4224 = vperm.xlu0 %4223, %v3869
        %v4225 = vpop.permute.xlu0 %4224
        %4226 = vset.pattern.permute.xlu0 0
        %4227 = vperm.xlu0 %4226, %v3870
        %v4228 = vpop.permute.xlu0 %4227
        %4229 = vset.pattern.permute.xlu0 0
        %4230 = vperm.xlu0 %4229, %v3871
        %v4231 = vpop.permute.xlu0 %4230
        %4232 = vset.pattern.permute.xlu0 0
        %4233 = vperm.xlu0 %4232, %v3872
        %v4234 = vpop.permute.xlu0 %4233
        %4235 = vset.pattern.permute.xlu0 0
        %4236 = vperm.xlu0 %4235, %v3873
        %v4237 = vpop.permute.xlu0 %4236
        %4238 = vset.pattern.permute.xlu0 0
        %4239 = vperm.xlu0 %4238, %v3874
        %v4240 = vpop.permute.xlu0 %4239
        %4241 = vset.pattern.permute.xlu0 0
        %4242 = vperm.xlu0 %4241, %v3875
        %v4243 = vpop.permute.xlu0 %4242
        %4244 = vset.pattern.permute.xlu0 0
        %4245 = vperm.xlu0 %4244, %v3876
        %v4246 = vpop.permute.xlu0 %4245
        %4247 = vset.pattern.permute.xlu0 0
        %4248 = vperm.xlu0 %4247, %v3877
        %v4249 = vpop.permute.xlu0 %4248
        %4250 = vset.pattern.permute.xlu0 0
        %4251 = vperm.xlu0 %4250, %v3878
        %v4252 = vpop.permute.xlu0 %4251
        %4253 = vset.pattern.permute.xlu0 0
        %4254 = vperm.xlu0 %4253, %v3879
        %v4255 = vpop.permute.xlu0 %4254
        %4256 = vset.pattern.permute.xlu0 0
        %4257 = vperm.xlu0 %4256, %v3880
        %v4258 = vpop.permute.xlu0 %4257
        %4259 = vset.pattern.permute.xlu0 0
        %4260 = vperm.xlu0 %4259, %v3881
        %v4261 = vpop.permute.xlu0 %4260
        %4262 = vset.pattern.permute.xlu0 0
        %4263 = vperm.xlu0 %4262, %v3882
        %v4264 = vpop.permute.xlu0 %4263
        %4265 = vset.pattern.permute.xlu0 0
        %4266 = vperm.xlu0 %4265, %v3883
        %v4267 = vpop.permute.xlu0 %4266
        %4268 = vset.pattern.permute.xlu0 0
        %4269 = vperm.xlu0 %4268, %v3884
        %v4270 = vpop.permute.xlu0 %4269
        %4271 = vset.pattern.permute.xlu0 0
        %4272 = vperm.xlu0 %4271, %v3885
        %v4273 = vpop.permute.xlu0 %4272
        %4274 = vset.pattern.permute.xlu0 0
        %4275 = vperm.xlu0 %4274, %v3886
        %v4276 = vpop.permute.xlu0 %4275
        %4277 = vset.pattern.permute.xlu0 0
        %4278 = vperm.xlu0 %4277, %v3887
        %v4279 = vpop.permute.xlu0 %4278
        %4280 = vset.pattern.permute.xlu0 0
        %4281 = vperm.xlu0 %4280, %v3888
        %v4282 = vpop.permute.xlu0 %4281
        %4283 = vset.pattern.permute.xlu0 0
        %4284 = vperm.xlu0 %4283, %v3889
        %v4285 = vpop.permute.xlu0 %4284
        %4286 = vset.pattern.permute.xlu0 0
        %4287 = vperm.xlu0 %4286, %v3890
        %v4288 = vpop.permute.xlu0 %4287
        %4289 = vset.pattern.permute.xlu0 0
        %4290 = vperm.xlu0 %4289, %v3891
        %v4291 = vpop.permute.xlu0 %4290
        %4292 = vset.pattern.permute.xlu0 0
        %4293 = vperm.xlu0 %4292, %v3892
        %v4294 = vpop.permute.xlu0 %4293
        %4295 = vset.pattern.permute.xlu0 0
        %4296 = vperm.xlu0 %4295, %v3893
        %v4297 = vpop.permute.xlu0 %4296
        %4298 = vset.pattern.permute.xlu0 0
        %4299 = vperm.xlu0 %4298, %v3894
        %v4300 = vpop.permute.xlu0 %4299
        %4301 = vset.pattern.permute.xlu0 0
        %4302 = vperm.xlu0 %4301, %v3895
        %v4303 = vpop.permute.xlu0 %4302
        %4304 = vset.pattern.permute.xlu0 0
        %4305 = vperm.xlu0 %4304, %v3896
        %v4306 = vpop.permute.xlu0 %4305
        %4307 = vset.pattern.permute.xlu0 0
        %4308 = vperm.xlu0 %4307, %v3897
        %v4309 = vpop.permute.xlu0 %4308
        %4310 = vset.pattern.permute.xlu0 0
        %4311 = vperm.xlu0 %4310, %v3898
        %v4312 = vpop.permute.xlu0 %4311
        %4313 = vset.pattern.permute.xlu0 0
        %4314 = vperm.xlu0 %4313, %v3899
        %v4315 = vpop.permute.xlu0 %4314
        %4316 = vset.pattern.permute.xlu0 0
        %4317 = vperm.xlu0 %4316, %v3900
        %v4318 = vpop.permute.xlu0 %4317
        %4319 = vset.pattern.permute.xlu0 0
        %4320 = vperm.xlu0 %4319, %v3901
        %v4321 = vpop.permute.xlu0 %4320
        %4322 = vset.pattern.permute.xlu0 0
        %4323 = vperm.xlu0 %4322, %v3902
        %v4324 = vpop.permute.xlu0 %4323
        %4325 = vset.pattern.permute.xlu0 0
        %4326 = vperm.xlu0 %4325, %v3903
        %v4327 = vpop.permute.xlu0 %4326
        %4328 = vset.pattern.permute.xlu0 0
        %4329 = vperm.xlu0 %4328, %v3904
        %v4330 = vpop.permute.xlu0 %4329
        %4331 = vset.pattern.permute.xlu0 0
        %4332 = vperm.xlu0 %4331, %v3905
        %v4333 = vpop.permute.xlu0 %4332
        %4334 = vset.pattern.permute.xlu0 0
        %4335 = vperm.xlu0 %4334, %v3906
        %v4336 = vpop.permute.xlu0 %4335
        %4337 = vset.pattern.permute.xlu0 0
        %4338 = vperm.xlu0 %4337, %v3907
        %v4339 = vpop.permute.xlu0 %4338
        %4340 = vset.pattern.permute.xlu0 0
        %4341 = vperm.xlu0 %4340, %v3908
        %v4342 = vpop.permute.xlu0 %4341
        %4343 = vset.pattern.permute.xlu0 0
        %4344 = vperm.xlu0 %4343, %v3909
        %v4345 = vpop.permute.xlu0 %4344
        %4346 = vset.pattern.permute.xlu0 0
        %4347 = vperm.xlu0 %4346, %v3910
        %v4348 = vpop.permute.xlu0 %4347
        %4349 = vset.pattern.permute.xlu0 0
        %4350 = vperm.xlu0 %4349, %v3911
        %v4351 = vpop.permute.xlu0 %4350
        %4352 = vset.pattern.permute.xlu0 0
        %4353 = vperm.xlu0 %4352, %v3912
        %v4354 = vpop.permute.xlu0 %4353
        %4355 = vset.pattern.permute.xlu0 0
        %4356 = vperm.xlu0 %4355, %v3913
        %v4357 = vpop.permute.xlu0 %4356
        %4358 = vset.pattern.permute.xlu0 0
        %4359 = vperm.xlu0 %4358, %v3914
        %v4360 = vpop.permute.xlu0 %4359
        %4361 = vset.pattern.permute.xlu0 0
        %4362 = vperm.xlu0 %4361, %v3915
        %v4363 = vpop.permute.xlu0 %4362
        %4364 = vset.pattern.permute.xlu0 0
        %4365 = vperm.xlu0 %4364, %v3916
        %v4366 = vpop.permute.xlu0 %4365
        %4367 = vset.pattern.permute.xlu0 0
        %4368 = vperm.xlu0 %4367, %v3917
        %v4369 = vpop.permute.xlu0 %4368
        %4370 = vset.pattern.permute.xlu0 0
        %4371 = vperm.xlu0 %4370, %v3918
        %v4372 = vpop.permute.xlu0 %4371
        %4373 = vset.pattern.permute.xlu0 0
        %4374 = vperm.xlu0 %4373, %v3919
        %v4375 = vpop.permute.xlu0 %4374
        %4376 = vset.pattern.permute.xlu0 0
        %4377 = vperm.xlu0 %4376, %v3920
        %v4378 = vpop.permute.xlu0 %4377
        %4379 = vset.pattern.permute.xlu0 0
        %4380 = vperm.xlu0 %4379, %v3921
        %v4381 = vpop.permute.xlu0 %4380
        %4382 = vset.pattern.permute.xlu0 0
        %4383 = vperm.xlu0 %4382, %v3922
        %v4384 = vpop.permute.xlu0 %4383
        %4385 = vset.pattern.permute.xlu0 0
        %4386 = vperm.xlu0 %4385, %v3923
        %v4387 = vpop.permute.xlu0 %4386
        %4388 = vset.pattern.permute.xlu0 0
        %4389 = vperm.xlu0 %4388, %v3924
        %v4390 = vpop.permute.xlu0 %4389
        %4391 = vset.pattern.permute.xlu0 0
        %4392 = vperm.xlu0 %4391, %v3925
        %v4393 = vpop.permute.xlu0 %4392
        %4394 = vset.pattern.permute.xlu0 0
        %4395 = vperm.xlu0 %4394, %v3926
        %v4396 = vpop.permute.xlu0 %4395
        %4397 = vset.pattern.permute.xlu0 0
        %4398 = vperm.xlu0 %4397, %v3927
        %v4399 = vpop.permute.xlu0 %4398
        %4400 = vset.pattern.permute.xlu0 0
        %4401 = vperm.xlu0 %4400, %v3928
        %v4402 = vpop.permute.xlu0 %4401
        %4403 = vset.pattern.permute.xlu0 0
        %4404 = vperm.xlu0 %4403, %v3929
        %v4405 = vpop.permute.xlu0 %4404
        %4406 = vset.pattern.permute.xlu0 0
        %4407 = vperm.xlu0 %4406, %v3930
        %v4408 = vpop.permute.xlu0 %4407
        %4409 = vset.pattern.permute.xlu0 0
        %4410 = vperm.xlu0 %4409, %v3931
        %v4411 = vpop.permute.xlu0 %4410
        %4412 = vset.pattern.permute.xlu0 0
        %4413 = vperm.xlu0 %4412, %v3932
        %v4414 = vpop.permute.xlu0 %4413
        %4415 = vset.pattern.permute.xlu0 0
        %4416 = vperm.xlu0 %4415, %v3933
        %v4417 = vpop.permute.xlu0 %4416
        %4418 = vset.pattern.permute.xlu0 0
        %4419 = vperm.xlu0 %4418, %v3934
        %v4420 = vpop.permute.xlu0 %4419
        %4421 = vset.pattern.permute.xlu0 0
        %4422 = vperm.xlu0 %4421, %v3935
        %v4423 = vpop.permute.xlu0 %4422
        %4424 = vset.pattern.permute.xlu0 0
        %4425 = vperm.xlu0 %4424, %v3936
        %v4426 = vpop.permute.xlu0 %4425
        %4427 = vset.pattern.permute.xlu0 0
        %4428 = vperm.xlu0 %4427, %v3937
        %v4429 = vpop.permute.xlu0 %4428
        %4430 = vset.pattern.permute.xlu0 0
        %4431 = vperm.xlu0 %4430, %v3938
        %v4432 = vpop.permute.xlu0 %4431
        %4433 = vset.pattern.permute.xlu0 0
        %4434 = vperm.xlu0 %4433, %v3939
        %v4435 = vpop.permute.xlu0 %4434
        %4436 = vset.pattern.permute.xlu0 0
        %4437 = vperm.xlu0 %4436, %v3940
        %v4438 = vpop.permute.xlu0 %4437
        %4439 = vset.pattern.permute.xlu0 0
        %4440 = vperm.xlu0 %4439, %v3941
        %v4441 = vpop.permute.xlu0 %4440
        %4442 = vset.pattern.permute.xlu0 0
        %4443 = vperm.xlu0 %4442, %v3942
        %v4444 = vpop.permute.xlu0 %4443
        %4445 = vset.pattern.permute.xlu0 0
        %4446 = vperm.xlu0 %4445, %v3943
        %v4447 = vpop.permute.xlu0 %4446
        %4448 = vset.pattern.permute.xlu0 0
        %4449 = vperm.xlu0 %4448, %v3944
        %v4450 = vpop.permute.xlu0 %4449
        %4451 = vset.pattern.permute.xlu0 0
        %4452 = vperm.xlu0 %4451, %v3945
        %v4453 = vpop.permute.xlu0 %4452
        %4454 = vset.pattern.permute.xlu0 0
        %4455 = vperm.xlu0 %4454, %v3946
        %v4456 = vpop.permute.xlu0 %4455
        %4457 = vset.pattern.permute.xlu0 0
        %4458 = vperm.xlu0 %4457, %v3947
        %v4459 = vpop.permute.xlu0 %4458
        %v4460 = vlaneseq
        %v4461 = vand.u32 %v4460, 127
        %v4462 = vlaneseq
        %v4463 = vshrl.u32 %v4462, 7
        %v4464 = vsub.s32 %v4461, %v4463
        %v4465 = vrot.slane %v4078, %v4464
        %v4466 = vadd.s32 %v4461, 4294967288
        %v4467 = vlaneseq
        %v4468 = vshrl.u32 %v4467, 7
        %v4469 = vsub.s32 %v4466, %v4468
        %v4470 = vrot.slane %v4081, %v4469
        %vm4471 = vcmask 130112
        %v4472 = vsel %vm4471, %v4470, %v4465
        %v4473 = vadd.s32 %v4461, 4294967280
        %v4474 = vlaneseq
        %v4475 = vshrl.u32 %v4474, 7
        %v4476 = vsub.s32 %v4473, %v4475
        %v4477 = vrot.slane %v4084, %v4476
        %vm4478 = vcmask 195712
        %v4479 = vsel %vm4478, %v4477, %v4472
        %v4480 = vadd.s32 %v4461, 4294967272
        %v4481 = vlaneseq
        %v4482 = vshrl.u32 %v4481, 7
        %v4483 = vsub.s32 %v4480, %v4482
        %v4484 = vrot.slane %v4087, %v4483
        %vm4485 = vcmask 261312
        %v4486 = vsel %vm4485, %v4484, %v4479
        %v4487 = vadd.s32 %v4461, 4294967264
        %v4488 = vlaneseq
        %v4489 = vshrl.u32 %v4488, 7
        %v4490 = vsub.s32 %v4487, %v4489
        %v4491 = vrot.slane %v4090, %v4490
        %vm4492 = vcmask 326912
        %v4493 = vsel %vm4492, %v4491, %v4486
        %v4494 = vadd.s32 %v4461, 4294967256
        %v4495 = vlaneseq
        %v4496 = vshrl.u32 %v4495, 7
        %v4497 = vsub.s32 %v4494, %v4496
        %v4498 = vrot.slane %v4093, %v4497
        %vm4499 = vcmask 392512
        %v4500 = vsel %vm4499, %v4498, %v4493
        %v4501 = vadd.s32 %v4461, 4294967248
        %v4502 = vlaneseq
        %v4503 = vshrl.u32 %v4502, 7
        %v4504 = vsub.s32 %v4501, %v4503
        %v4505 = vrot.slane %v4096, %v4504
        %vm4506 = vcmask 458112
        %v4507 = vsel %vm4506, %v4505, %v4500
        %v4508 = vadd.s32 %v4461, 4294967240
        %v4509 = vlaneseq
        %v4510 = vshrl.u32 %v4509, 7
        %v4511 = vsub.s32 %v4508, %v4510
        %v4512 = vrot.slane %v4099, %v4511
        %vm4513 = vcmask 523712
        %v4514 = vsel %vm4513, %v4512, %v4507
        %v4515 = vadd.s32 %v4461, 4294967232
        %v4516 = vlaneseq
        %v4517 = vshrl.u32 %v4516, 7
        %v4518 = vsub.s32 %v4515, %v4517
        %v4519 = vrot.slane %v4102, %v4518
        %vm4520 = vcmask 589312
        %v4521 = vsel %vm4520, %v4519, %v4514
        %v4522 = vadd.s32 %v4461, 4294967224
        %v4523 = vlaneseq
        %v4524 = vshrl.u32 %v4523, 7
        %v4525 = vsub.s32 %v4522, %v4524
        %v4526 = vrot.slane %v4105, %v4525
        %vm4527 = vcmask 654912
        %v4528 = vsel %vm4527, %v4526, %v4521
        %v4529 = vadd.s32 %v4461, 4294967216
        %v4530 = vlaneseq
        %v4531 = vshrl.u32 %v4530, 7
        %v4532 = vsub.s32 %v4529, %v4531
        %v4533 = vrot.slane %v4108, %v4532
        %vm4534 = vcmask 720512
        %v4535 = vsel %vm4534, %v4533, %v4528
        %v4536 = vadd.s32 %v4461, 4294967208
        %v4537 = vlaneseq
        %v4538 = vshrl.u32 %v4537, 7
        %v4539 = vsub.s32 %v4536, %v4538
        %v4540 = vrot.slane %v4111, %v4539
        %vm4541 = vcmask 786112
        %v4542 = vsel %vm4541, %v4540, %v4535
        %v4543 = vadd.s32 %v4461, 4294967200
        %v4544 = vlaneseq
        %v4545 = vshrl.u32 %v4544, 7
        %v4546 = vsub.s32 %v4543, %v4545
        %v4547 = vrot.slane %v4114, %v4546
        %vm4548 = vcmask 851712
        %v4549 = vsel %vm4548, %v4547, %v4542
        %v4550 = vadd.s32 %v4461, 4294967192
        %v4551 = vlaneseq
        %v4552 = vshrl.u32 %v4551, 7
        %v4553 = vsub.s32 %v4550, %v4552
        %v4554 = vrot.slane %v4117, %v4553
        %vm4555 = vcmask 917312
        %v4556 = vsel %vm4555, %v4554, %v4549
        %v4557 = vadd.s32 %v4461, 4294967184
        %v4558 = vlaneseq
        %v4559 = vshrl.u32 %v4558, 7
        %v4560 = vsub.s32 %v4557, %v4559
        %v4561 = vrot.slane %v4120, %v4560
        %vm4562 = vcmask 982912
        %v4563 = vsel %vm4562, %v4561, %v4556
        %v4564 = vadd.s32 %v4461, 4294967176
        %v4565 = vlaneseq
        %v4566 = vshrl.u32 %v4565, 7
        %v4567 = vsub.s32 %v4564, %v4566
        %v4568 = vrot.slane %v4123, %v4567
        %vm4569 = vcmask 1048512
        %v4570 = vsel %vm4569, %v4568, %v4563
        %v4571 = vlaneseq
        %v4572 = vshrl.u32 %v4571, 7
        %v4573 = vsub.s32 %v4461, %v4572
        %v4574 = vrot.slane %v4126, %v4573
        %v4575 = vlaneseq
        %v4576 = vshrl.u32 %v4575, 7
        %v4577 = vsub.s32 %v4466, %v4576
        %v4578 = vrot.slane %v4129, %v4577
        %v4579 = vsel %vm4471, %v4578, %v4574
        %v4580 = vlaneseq
        %v4581 = vshrl.u32 %v4580, 7
        %v4582 = vsub.s32 %v4473, %v4581
        %v4583 = vrot.slane %v4132, %v4582
        %v4584 = vsel %vm4478, %v4583, %v4579
        %v4585 = vlaneseq
        %v4586 = vshrl.u32 %v4585, 7
        %v4587 = vsub.s32 %v4480, %v4586
        %v4588 = vrot.slane %v4135, %v4587
        %v4589 = vsel %vm4485, %v4588, %v4584
        %v4590 = vlaneseq
        %v4591 = vshrl.u32 %v4590, 7
        %v4592 = vsub.s32 %v4487, %v4591
        %v4593 = vrot.slane %v4138, %v4592
        %v4594 = vsel %vm4492, %v4593, %v4589
        %v4595 = vlaneseq
        %v4596 = vshrl.u32 %v4595, 7
        %v4597 = vsub.s32 %v4494, %v4596
        %v4598 = vrot.slane %v4141, %v4597
        %v4599 = vsel %vm4499, %v4598, %v4594
        %v4600 = vlaneseq
        %v4601 = vshrl.u32 %v4600, 7
        %v4602 = vsub.s32 %v4501, %v4601
        %v4603 = vrot.slane %v4144, %v4602
        %v4604 = vsel %vm4506, %v4603, %v4599
        %v4605 = vlaneseq
        %v4606 = vshrl.u32 %v4605, 7
        %v4607 = vsub.s32 %v4508, %v4606
        %v4608 = vrot.slane %v4147, %v4607
        %v4609 = vsel %vm4513, %v4608, %v4604
        %v4610 = vlaneseq
        %v4611 = vshrl.u32 %v4610, 7
        %v4612 = vsub.s32 %v4515, %v4611
        %v4613 = vrot.slane %v4150, %v4612
        %v4614 = vsel %vm4520, %v4613, %v4609
        %v4615 = vlaneseq
        %v4616 = vshrl.u32 %v4615, 7
        %v4617 = vsub.s32 %v4522, %v4616
        %v4618 = vrot.slane %v4153, %v4617
        %v4619 = vsel %vm4527, %v4618, %v4614
        %v4620 = vlaneseq
        %v4621 = vshrl.u32 %v4620, 7
        %v4622 = vsub.s32 %v4529, %v4621
        %v4623 = vrot.slane %v4156, %v4622
        %v4624 = vsel %vm4534, %v4623, %v4619
        %v4625 = vlaneseq
        %v4626 = vshrl.u32 %v4625, 7
        %v4627 = vsub.s32 %v4536, %v4626
        %v4628 = vrot.slane %v4159, %v4627
        %v4629 = vsel %vm4541, %v4628, %v4624
        %v4630 = vlaneseq
        %v4631 = vshrl.u32 %v4630, 7
        %v4632 = vsub.s32 %v4543, %v4631
        %v4633 = vrot.slane %v4162, %v4632
        %v4634 = vsel %vm4548, %v4633, %v4629
        %v4635 = vlaneseq
        %v4636 = vshrl.u32 %v4635, 7
        %v4637 = vsub.s32 %v4550, %v4636
        %v4638 = vrot.slane %v4165, %v4637
        %v4639 = vsel %vm4555, %v4638, %v4634
        %v4640 = vlaneseq
        %v4641 = vshrl.u32 %v4640, 7
        %v4642 = vsub.s32 %v4557, %v4641
        %v4643 = vrot.slane %v4168, %v4642
        %v4644 = vsel %vm4562, %v4643, %v4639
        %v4645 = vlaneseq
        %v4646 = vshrl.u32 %v4645, 7
        %v4647 = vsub.s32 %v4564, %v4646
        %v4648 = vrot.slane %v4171, %v4647
        %v4649 = vsel %vm4569, %v4648, %v4644
        %v4650 = vlaneseq
        %v4651 = vshrl.u32 %v4650, 7
        %v4652 = vsub.s32 %v4461, %v4651
        %v4653 = vrot.slane %v4174, %v4652
        %v4654 = vlaneseq
        %v4655 = vshrl.u32 %v4654, 7
        %v4656 = vsub.s32 %v4466, %v4655
        %v4657 = vrot.slane %v4177, %v4656
        %v4658 = vsel %vm4471, %v4657, %v4653
        %v4659 = vlaneseq
        %v4660 = vshrl.u32 %v4659, 7
        %v4661 = vsub.s32 %v4473, %v4660
        %v4662 = vrot.slane %v4180, %v4661
        %v4663 = vsel %vm4478, %v4662, %v4658
        %v4664 = vlaneseq
        %v4665 = vshrl.u32 %v4664, 7
        %v4666 = vsub.s32 %v4480, %v4665
        %v4667 = vrot.slane %v4183, %v4666
        %v4668 = vsel %vm4485, %v4667, %v4663
        %v4669 = vlaneseq
        %v4670 = vshrl.u32 %v4669, 7
        %v4671 = vsub.s32 %v4487, %v4670
        %v4672 = vrot.slane %v4186, %v4671
        %v4673 = vsel %vm4492, %v4672, %v4668
        %v4674 = vlaneseq
        %v4675 = vshrl.u32 %v4674, 7
        %v4676 = vsub.s32 %v4494, %v4675
        %v4677 = vrot.slane %v4189, %v4676
        %v4678 = vsel %vm4499, %v4677, %v4673
        %v4679 = vlaneseq
        %v4680 = vshrl.u32 %v4679, 7
        %v4681 = vsub.s32 %v4501, %v4680
        %v4682 = vrot.slane %v4192, %v4681
        %v4683 = vsel %vm4506, %v4682, %v4678
        %v4684 = vlaneseq
        %v4685 = vshrl.u32 %v4684, 7
        %v4686 = vsub.s32 %v4508, %v4685
        %v4687 = vrot.slane %v4195, %v4686
        %v4688 = vsel %vm4513, %v4687, %v4683
        %v4689 = vlaneseq
        %v4690 = vshrl.u32 %v4689, 7
        %v4691 = vsub.s32 %v4515, %v4690
        %v4692 = vrot.slane %v4198, %v4691
        %v4693 = vsel %vm4520, %v4692, %v4688
        %v4694 = vlaneseq
        %v4695 = vshrl.u32 %v4694, 7
        %v4696 = vsub.s32 %v4522, %v4695
        %v4697 = vrot.slane %v4201, %v4696
        %v4698 = vsel %vm4527, %v4697, %v4693
        %v4699 = vlaneseq
        %v4700 = vshrl.u32 %v4699, 7
        %v4701 = vsub.s32 %v4529, %v4700
        %v4702 = vrot.slane %v4204, %v4701
        %v4703 = vsel %vm4534, %v4702, %v4698
        %v4704 = vlaneseq
        %v4705 = vshrl.u32 %v4704, 7
        %v4706 = vsub.s32 %v4536, %v4705
        %v4707 = vrot.slane %v4207, %v4706
        %v4708 = vsel %vm4541, %v4707, %v4703
        %v4709 = vlaneseq
        %v4710 = vshrl.u32 %v4709, 7
        %v4711 = vsub.s32 %v4543, %v4710
        %v4712 = vrot.slane %v4210, %v4711
        %v4713 = vsel %vm4548, %v4712, %v4708
        %v4714 = vlaneseq
        %v4715 = vshrl.u32 %v4714, 7
        %v4716 = vsub.s32 %v4550, %v4715
        %v4717 = vrot.slane %v4213, %v4716
        %v4718 = vsel %vm4555, %v4717, %v4713
        %v4719 = vlaneseq
        %v4720 = vshrl.u32 %v4719, 7
        %v4721 = vsub.s32 %v4557, %v4720
        %v4722 = vrot.slane %v4216, %v4721
        %v4723 = vsel %vm4562, %v4722, %v4718
        %v4724 = vlaneseq
        %v4725 = vshrl.u32 %v4724, 7
        %v4726 = vsub.s32 %v4564, %v4725
        %v4727 = vrot.slane %v4219, %v4726
        %v4728 = vsel %vm4569, %v4727, %v4723
        %v4729 = vlaneseq
        %v4730 = vshrl.u32 %v4729, 7
        %v4731 = vsub.s32 %v4461, %v4730
        %v4732 = vrot.slane %v4222, %v4731
        %v4733 = vlaneseq
        %v4734 = vshrl.u32 %v4733, 7
        %v4735 = vsub.s32 %v4466, %v4734
        %v4736 = vrot.slane %v4225, %v4735
        %v4737 = vsel %vm4471, %v4736, %v4732
        %v4738 = vlaneseq
        %v4739 = vshrl.u32 %v4738, 7
        %v4740 = vsub.s32 %v4473, %v4739
        %v4741 = vrot.slane %v4228, %v4740
        %v4742 = vsel %vm4478, %v4741, %v4737
        %v4743 = vlaneseq
        %v4744 = vshrl.u32 %v4743, 7
        %v4745 = vsub.s32 %v4480, %v4744
        %v4746 = vrot.slane %v4231, %v4745
        %v4747 = vsel %vm4485, %v4746, %v4742
        %v4748 = vlaneseq
        %v4749 = vshrl.u32 %v4748, 7
        %v4750 = vsub.s32 %v4487, %v4749
        %v4751 = vrot.slane %v4234, %v4750
        %v4752 = vsel %vm4492, %v4751, %v4747
        %v4753 = vlaneseq
        %v4754 = vshrl.u32 %v4753, 7
        %v4755 = vsub.s32 %v4494, %v4754
        %v4756 = vrot.slane %v4237, %v4755
        %v4757 = vsel %vm4499, %v4756, %v4752
        %v4758 = vlaneseq
        %v4759 = vshrl.u32 %v4758, 7
        %v4760 = vsub.s32 %v4501, %v4759
        %v4761 = vrot.slane %v4240, %v4760
        %v4762 = vsel %vm4506, %v4761, %v4757
        %v4763 = vlaneseq
        %v4764 = vshrl.u32 %v4763, 7
        %v4765 = vsub.s32 %v4508, %v4764
        %v4766 = vrot.slane %v4243, %v4765
        %v4767 = vsel %vm4513, %v4766, %v4762
        %v4768 = vlaneseq
        %v4769 = vshrl.u32 %v4768, 7
        %v4770 = vsub.s32 %v4515, %v4769
        %v4771 = vrot.slane %v4246, %v4770
        %v4772 = vsel %vm4520, %v4771, %v4767
        %v4773 = vlaneseq
        %v4774 = vshrl.u32 %v4773, 7
        %v4775 = vsub.s32 %v4522, %v4774
        %v4776 = vrot.slane %v4249, %v4775
        %v4777 = vsel %vm4527, %v4776, %v4772
        %v4778 = vlaneseq
        %v4779 = vshrl.u32 %v4778, 7
        %v4780 = vsub.s32 %v4529, %v4779
        %v4781 = vrot.slane %v4252, %v4780
        %v4782 = vsel %vm4534, %v4781, %v4777
        %v4783 = vlaneseq
        %v4784 = vshrl.u32 %v4783, 7
        %v4785 = vsub.s32 %v4536, %v4784
        %v4786 = vrot.slane %v4255, %v4785
        %v4787 = vsel %vm4541, %v4786, %v4782
        %v4788 = vlaneseq
        %v4789 = vshrl.u32 %v4788, 7
        %v4790 = vsub.s32 %v4543, %v4789
        %v4791 = vrot.slane %v4258, %v4790
        %v4792 = vsel %vm4548, %v4791, %v4787
        %v4793 = vlaneseq
        %v4794 = vshrl.u32 %v4793, 7
        %v4795 = vsub.s32 %v4550, %v4794
        %v4796 = vrot.slane %v4261, %v4795
        %v4797 = vsel %vm4555, %v4796, %v4792
        %v4798 = vlaneseq
        %v4799 = vshrl.u32 %v4798, 7
        %v4800 = vsub.s32 %v4557, %v4799
        %v4801 = vrot.slane %v4264, %v4800
        %v4802 = vsel %vm4562, %v4801, %v4797
        %v4803 = vlaneseq
        %v4804 = vshrl.u32 %v4803, 7
        %v4805 = vsub.s32 %v4564, %v4804
        %v4806 = vrot.slane %v4267, %v4805
        %v4807 = vsel %vm4569, %v4806, %v4802
        %v4808 = vlaneseq
        %v4809 = vshrl.u32 %v4808, 7
        %v4810 = vsub.s32 %v4461, %v4809
        %v4811 = vrot.slane %v4270, %v4810
        %v4812 = vlaneseq
        %v4813 = vshrl.u32 %v4812, 7
        %v4814 = vsub.s32 %v4466, %v4813
        %v4815 = vrot.slane %v4273, %v4814
        %v4816 = vsel %vm4471, %v4815, %v4811
        %v4817 = vlaneseq
        %v4818 = vshrl.u32 %v4817, 7
        %v4819 = vsub.s32 %v4473, %v4818
        %v4820 = vrot.slane %v4276, %v4819
        %v4821 = vsel %vm4478, %v4820, %v4816
        %v4822 = vlaneseq
        %v4823 = vshrl.u32 %v4822, 7
        %v4824 = vsub.s32 %v4480, %v4823
        %v4825 = vrot.slane %v4279, %v4824
        %v4826 = vsel %vm4485, %v4825, %v4821
        %v4827 = vlaneseq
        %v4828 = vshrl.u32 %v4827, 7
        %v4829 = vsub.s32 %v4487, %v4828
        %v4830 = vrot.slane %v4282, %v4829
        %v4831 = vsel %vm4492, %v4830, %v4826
        %v4832 = vlaneseq
        %v4833 = vshrl.u32 %v4832, 7
        %v4834 = vsub.s32 %v4494, %v4833
        %v4835 = vrot.slane %v4285, %v4834
        %v4836 = vsel %vm4499, %v4835, %v4831
        %v4837 = vlaneseq
        %v4838 = vshrl.u32 %v4837, 7
        %v4839 = vsub.s32 %v4501, %v4838
        %v4840 = vrot.slane %v4288, %v4839
        %v4841 = vsel %vm4506, %v4840, %v4836
        %v4842 = vlaneseq
        %v4843 = vshrl.u32 %v4842, 7
        %v4844 = vsub.s32 %v4508, %v4843
        %v4845 = vrot.slane %v4291, %v4844
        %v4846 = vsel %vm4513, %v4845, %v4841
        %v4847 = vlaneseq
        %v4848 = vshrl.u32 %v4847, 7
        %v4849 = vsub.s32 %v4515, %v4848
        %v4850 = vrot.slane %v4294, %v4849
        %v4851 = vsel %vm4520, %v4850, %v4846
        %v4852 = vlaneseq
        %v4853 = vshrl.u32 %v4852, 7
        %v4854 = vsub.s32 %v4522, %v4853
        %v4855 = vrot.slane %v4297, %v4854
        %v4856 = vsel %vm4527, %v4855, %v4851
        %v4857 = vlaneseq
        %v4858 = vshrl.u32 %v4857, 7
        %v4859 = vsub.s32 %v4529, %v4858
        %v4860 = vrot.slane %v4300, %v4859
        %v4861 = vsel %vm4534, %v4860, %v4856
        %v4862 = vlaneseq
        %v4863 = vshrl.u32 %v4862, 7
        %v4864 = vsub.s32 %v4536, %v4863
        %v4865 = vrot.slane %v4303, %v4864
        %v4866 = vsel %vm4541, %v4865, %v4861
        %v4867 = vlaneseq
        %v4868 = vshrl.u32 %v4867, 7
        %v4869 = vsub.s32 %v4543, %v4868
        %v4870 = vrot.slane %v4306, %v4869
        %v4871 = vsel %vm4548, %v4870, %v4866
        %v4872 = vlaneseq
        %v4873 = vshrl.u32 %v4872, 7
        %v4874 = vsub.s32 %v4550, %v4873
        %v4875 = vrot.slane %v4309, %v4874
        %v4876 = vsel %vm4555, %v4875, %v4871
        %v4877 = vlaneseq
        %v4878 = vshrl.u32 %v4877, 7
        %v4879 = vsub.s32 %v4557, %v4878
        %v4880 = vrot.slane %v4312, %v4879
        %v4881 = vsel %vm4562, %v4880, %v4876
        %v4882 = vlaneseq
        %v4883 = vshrl.u32 %v4882, 7
        %v4884 = vsub.s32 %v4564, %v4883
        %v4885 = vrot.slane %v4315, %v4884
        %v4886 = vsel %vm4569, %v4885, %v4881
        %v4887 = vlaneseq
        %v4888 = vshrl.u32 %v4887, 7
        %v4889 = vsub.s32 %v4461, %v4888
        %v4890 = vrot.slane %v4318, %v4889
        %v4891 = vlaneseq
        %v4892 = vshrl.u32 %v4891, 7
        %v4893 = vsub.s32 %v4466, %v4892
        %v4894 = vrot.slane %v4321, %v4893
        %v4895 = vsel %vm4471, %v4894, %v4890
        %v4896 = vlaneseq
        %v4897 = vshrl.u32 %v4896, 7
        %v4898 = vsub.s32 %v4473, %v4897
        %v4899 = vrot.slane %v4324, %v4898
        %v4900 = vsel %vm4478, %v4899, %v4895
        %v4901 = vlaneseq
        %v4902 = vshrl.u32 %v4901, 7
        %v4903 = vsub.s32 %v4480, %v4902
        %v4904 = vrot.slane %v4327, %v4903
        %v4905 = vsel %vm4485, %v4904, %v4900
        %v4906 = vlaneseq
        %v4907 = vshrl.u32 %v4906, 7
        %v4908 = vsub.s32 %v4487, %v4907
        %v4909 = vrot.slane %v4330, %v4908
        %v4910 = vsel %vm4492, %v4909, %v4905
        %v4911 = vlaneseq
        %v4912 = vshrl.u32 %v4911, 7
        %v4913 = vsub.s32 %v4494, %v4912
        %v4914 = vrot.slane %v4333, %v4913
        %v4915 = vsel %vm4499, %v4914, %v4910
        %v4916 = vlaneseq
        %v4917 = vshrl.u32 %v4916, 7
        %v4918 = vsub.s32 %v4501, %v4917
        %v4919 = vrot.slane %v4336, %v4918
        %v4920 = vsel %vm4506, %v4919, %v4915
        %v4921 = vlaneseq
        %v4922 = vshrl.u32 %v4921, 7
        %v4923 = vsub.s32 %v4508, %v4922
        %v4924 = vrot.slane %v4339, %v4923
        %v4925 = vsel %vm4513, %v4924, %v4920
        %v4926 = vlaneseq
        %v4927 = vshrl.u32 %v4926, 7
        %v4928 = vsub.s32 %v4515, %v4927
        %v4929 = vrot.slane %v4342, %v4928
        %v4930 = vsel %vm4520, %v4929, %v4925
        %v4931 = vlaneseq
        %v4932 = vshrl.u32 %v4931, 7
        %v4933 = vsub.s32 %v4522, %v4932
        %v4934 = vrot.slane %v4345, %v4933
        %v4935 = vsel %vm4527, %v4934, %v4930
        %v4936 = vlaneseq
        %v4937 = vshrl.u32 %v4936, 7
        %v4938 = vsub.s32 %v4529, %v4937
        %v4939 = vrot.slane %v4348, %v4938
        %v4940 = vsel %vm4534, %v4939, %v4935
        %v4941 = vlaneseq
        %v4942 = vshrl.u32 %v4941, 7
        %v4943 = vsub.s32 %v4536, %v4942
        %v4944 = vrot.slane %v4351, %v4943
        %v4945 = vsel %vm4541, %v4944, %v4940
        %v4946 = vlaneseq
        %v4947 = vshrl.u32 %v4946, 7
        %v4948 = vsub.s32 %v4543, %v4947
        %v4949 = vrot.slane %v4354, %v4948
        %v4950 = vsel %vm4548, %v4949, %v4945
        %v4951 = vlaneseq
        %v4952 = vshrl.u32 %v4951, 7
        %v4953 = vsub.s32 %v4550, %v4952
        %v4954 = vrot.slane %v4357, %v4953
        %v4955 = vsel %vm4555, %v4954, %v4950
        %v4956 = vlaneseq
        %v4957 = vshrl.u32 %v4956, 7
        %v4958 = vsub.s32 %v4557, %v4957
        %v4959 = vrot.slane %v4360, %v4958
        %v4960 = vsel %vm4562, %v4959, %v4955
        %v4961 = vlaneseq
        %v4962 = vshrl.u32 %v4961, 7
        %v4963 = vsub.s32 %v4564, %v4962
        %v4964 = vrot.slane %v4363, %v4963
        %v4965 = vsel %vm4569, %v4964, %v4960
        %v4966 = vlaneseq
        %v4967 = vshrl.u32 %v4966, 7
        %v4968 = vsub.s32 %v4461, %v4967
        %v4969 = vrot.slane %v4366, %v4968
        %v4970 = vlaneseq
        %v4971 = vshrl.u32 %v4970, 7
        %v4972 = vsub.s32 %v4466, %v4971
        %v4973 = vrot.slane %v4369, %v4972
        %v4974 = vsel %vm4471, %v4973, %v4969
        %v4975 = vlaneseq
        %v4976 = vshrl.u32 %v4975, 7
        %v4977 = vsub.s32 %v4473, %v4976
        %v4978 = vrot.slane %v4372, %v4977
        %v4979 = vsel %vm4478, %v4978, %v4974
        %v4980 = vlaneseq
        %v4981 = vshrl.u32 %v4980, 7
        %v4982 = vsub.s32 %v4480, %v4981
        %v4983 = vrot.slane %v4375, %v4982
        %v4984 = vsel %vm4485, %v4983, %v4979
        %v4985 = vlaneseq
        %v4986 = vshrl.u32 %v4985, 7
        %v4987 = vsub.s32 %v4487, %v4986
        %v4988 = vrot.slane %v4378, %v4987
        %v4989 = vsel %vm4492, %v4988, %v4984
        %v4990 = vlaneseq
        %v4991 = vshrl.u32 %v4990, 7
        %v4992 = vsub.s32 %v4494, %v4991
        %v4993 = vrot.slane %v4381, %v4992
        %v4994 = vsel %vm4499, %v4993, %v4989
        %v4995 = vlaneseq
        %v4996 = vshrl.u32 %v4995, 7
        %v4997 = vsub.s32 %v4501, %v4996
        %v4998 = vrot.slane %v4384, %v4997
        %v4999 = vsel %vm4506, %v4998, %v4994
        %v5000 = vlaneseq
        %v5001 = vshrl.u32 %v5000, 7
        %v5002 = vsub.s32 %v4508, %v5001
        %v5003 = vrot.slane %v4387, %v5002
        %v5004 = vsel %vm4513, %v5003, %v4999
        %v5005 = vlaneseq
        %v5006 = vshrl.u32 %v5005, 7
        %v5007 = vsub.s32 %v4515, %v5006
        %v5008 = vrot.slane %v4390, %v5007
        %v5009 = vsel %vm4520, %v5008, %v5004
        %v5010 = vlaneseq
        %v5011 = vshrl.u32 %v5010, 7
        %v5012 = vsub.s32 %v4522, %v5011
        %v5013 = vrot.slane %v4393, %v5012
        %v5014 = vsel %vm4527, %v5013, %v5009
        %v5015 = vlaneseq
        %v5016 = vshrl.u32 %v5015, 7
        %v5017 = vsub.s32 %v4529, %v5016
        %v5018 = vrot.slane %v4396, %v5017
        %v5019 = vsel %vm4534, %v5018, %v5014
        %v5020 = vlaneseq
        %v5021 = vshrl.u32 %v5020, 7
        %v5022 = vsub.s32 %v4536, %v5021
        %v5023 = vrot.slane %v4399, %v5022
        %v5024 = vsel %vm4541, %v5023, %v5019
        %v5025 = vlaneseq
        %v5026 = vshrl.u32 %v5025, 7
        %v5027 = vsub.s32 %v4543, %v5026
        %v5028 = vrot.slane %v4402, %v5027
        %v5029 = vsel %vm4548, %v5028, %v5024
        %v5030 = vlaneseq
        %v5031 = vshrl.u32 %v5030, 7
        %v5032 = vsub.s32 %v4550, %v5031
        %v5033 = vrot.slane %v4405, %v5032
        %v5034 = vsel %vm4555, %v5033, %v5029
        %v5035 = vlaneseq
        %v5036 = vshrl.u32 %v5035, 7
        %v5037 = vsub.s32 %v4557, %v5036
        %v5038 = vrot.slane %v4408, %v5037
        %v5039 = vsel %vm4562, %v5038, %v5034
        %v5040 = vlaneseq
        %v5041 = vshrl.u32 %v5040, 7
        %v5042 = vsub.s32 %v4564, %v5041
        %v5043 = vrot.slane %v4411, %v5042
        %v5044 = vsel %vm4569, %v5043, %v5039
        %v5045 = vlaneseq
        %v5046 = vshrl.u32 %v5045, 7
        %v5047 = vsub.s32 %v4461, %v5046
        %v5048 = vrot.slane %v4414, %v5047
        %v5049 = vlaneseq
        %v5050 = vshrl.u32 %v5049, 7
        %v5051 = vsub.s32 %v4466, %v5050
        %v5052 = vrot.slane %v4417, %v5051
        %v5053 = vsel %vm4471, %v5052, %v5048
        %v5054 = vlaneseq
        %v5055 = vshrl.u32 %v5054, 7
        %v5056 = vsub.s32 %v4473, %v5055
        %v5057 = vrot.slane %v4420, %v5056
        %v5058 = vsel %vm4478, %v5057, %v5053
        %v5059 = vlaneseq
        %v5060 = vshrl.u32 %v5059, 7
        %v5061 = vsub.s32 %v4480, %v5060
        %v5062 = vrot.slane %v4423, %v5061
        %v5063 = vsel %vm4485, %v5062, %v5058
        %v5064 = vlaneseq
        %v5065 = vshrl.u32 %v5064, 7
        %v5066 = vsub.s32 %v4487, %v5065
        %v5067 = vrot.slane %v4426, %v5066
        %v5068 = vsel %vm4492, %v5067, %v5063
        %v5069 = vlaneseq
        %v5070 = vshrl.u32 %v5069, 7
        %v5071 = vsub.s32 %v4494, %v5070
        %v5072 = vrot.slane %v4429, %v5071
        %v5073 = vsel %vm4499, %v5072, %v5068
        %v5074 = vlaneseq
        %v5075 = vshrl.u32 %v5074, 7
        %v5076 = vsub.s32 %v4501, %v5075
        %v5077 = vrot.slane %v4432, %v5076
        %v5078 = vsel %vm4506, %v5077, %v5073
        %v5079 = vlaneseq
        %v5080 = vshrl.u32 %v5079, 7
        %v5081 = vsub.s32 %v4508, %v5080
        %v5082 = vrot.slane %v4435, %v5081
        %v5083 = vsel %vm4513, %v5082, %v5078
        %v5084 = vlaneseq
        %v5085 = vshrl.u32 %v5084, 7
        %v5086 = vsub.s32 %v4515, %v5085
        %v5087 = vrot.slane %v4438, %v5086
        %v5088 = vsel %vm4520, %v5087, %v5083
        %v5089 = vlaneseq
        %v5090 = vshrl.u32 %v5089, 7
        %v5091 = vsub.s32 %v4522, %v5090
        %v5092 = vrot.slane %v4441, %v5091
        %v5093 = vsel %vm4527, %v5092, %v5088
        %v5094 = vlaneseq
        %v5095 = vshrl.u32 %v5094, 7
        %v5096 = vsub.s32 %v4529, %v5095
        %v5097 = vrot.slane %v4444, %v5096
        %v5098 = vsel %vm4534, %v5097, %v5093
        %v5099 = vlaneseq
        %v5100 = vshrl.u32 %v5099, 7
        %v5101 = vsub.s32 %v4536, %v5100
        %v5102 = vrot.slane %v4447, %v5101
        %v5103 = vsel %vm4541, %v5102, %v5098
        %v5104 = vlaneseq
        %v5105 = vshrl.u32 %v5104, 7
        %v5106 = vsub.s32 %v4543, %v5105
        %v5107 = vrot.slane %v4450, %v5106
        %v5108 = vsel %vm4548, %v5107, %v5103
        %v5109 = vlaneseq
        %v5110 = vshrl.u32 %v5109, 7
        %v5111 = vsub.s32 %v4550, %v5110
        %v5112 = vrot.slane %v4453, %v5111
        %v5113 = vsel %vm4555, %v5112, %v5108
        %v5114 = vlaneseq
        %v5115 = vshrl.u32 %v5114, 7
        %v5116 = vsub.s32 %v4557, %v5115
        %v5117 = vrot.slane %v4456, %v5116
        %v5118 = vsel %vm4562, %v5117, %v5113
        %v5119 = vlaneseq
        %v5120 = vshrl.u32 %v5119, 7
        %v5121 = vsub.s32 %v4564, %v5120
        %v5122 = vrot.slane %v4459, %v5121
        %v5123 = vsel %vm4569, %v5122, %v5118
        %vm5124 = vcmask 1041409
        %v5125 = vsel %vm5124, %v4649, %v4570
        %vm5126 = vcmask 1042434
        %v5127 = vsel %vm5126, %v4728, %v5125
        %vm5128 = vcmask 1043459
        %v5129 = vsel %vm5128, %v4807, %v5127
        %vm5130 = vcmask 1044484
        %v5131 = vsel %vm5130, %v4886, %v5129
        %vm5132 = vcmask 1045509
        %v5133 = vsel %vm5132, %v4965, %v5131
        %vm5134 = vcmask 1046534
        %v5135 = vsel %vm5134, %v5044, %v5133
        %vm5136 = vcmask 1047559
        %v5137 = vsel %vm5136, %v5123, %v5135
        %5139 = vst [vmem:[%s381] sm:$0xff] %v5137
        %s5140 = sand.u32 %s161, 1
        %s5141 = scalar_lea.sflag [#allocation4], %s5140
        %s5142 = sand.u32 %s161, 1
        %s5143 = smul.addr %s5142, 8
        %s5144 = scalar_lea.vmem [#allocation10], %s5143
        // Predicated region
        $region57: #{tpu_custom_call.1} parent=39 // pred_check
          %p5145 = pneg %p171
        $region58: #{tpu_custom_call.1} parent=39 // pred_check_branch
          %5147 = sbr.rel (%p5145) target = $region60
        $region59: #{tpu_custom_call.1} parent=39 // pred_region
          %s5149 = ssub.s32 128, 128
          %5150 = vsyncadd %s5141, %s5149
          %s5151 = smul.addr %s28, 128
          %s5152 = scalar_lea.hbm %s5, %s5151
          %s5154 = sshll.u32 %s5144, 4
          %s5155 = int_to_ptr.vmem [resolvable:$true] %s5154
          %5157 = dma.vmem_to_hbm [thread:$0]  %s5155, 128, %s5152, %s5141
        $region60: #{tpu_custom_call.1} parent=39 // pred_fallthru
          _
      $region40: #{tpu_custom_call.1} parent=5 // pred_fallthru
        _
      %p5158 = scmp.le.s32.totalorder 2, %s23
      // Predicated region
      $region61: #{tpu_custom_call.1} parent=5 // pred_check
        %p5159 = pneg %p5158
      $region62: #{tpu_custom_call.1} parent=5 // pred_check_branch
        %5161 = sbr.rel (%p5159) target = $region64
      $region63: #{tpu_custom_call.1} parent=5 // pred_region
        %s5162 = ssub.s32 %s23, 2
        // Predicated region
        $region65: #{tpu_custom_call.1} parent=63 // pred_check
          %p5163 = pneg %p177
        $region66: #{tpu_custom_call.1} parent=63 // pred_check_branch
          %5165 = sbr.rel (%p5163) target = $region68
        $region67: #{tpu_custom_call.1} parent=63 // pred_region
          %s5166 = sand.u32 %s162, 1
          %s5167 = scalar_lea.sflag [#allocation4], %s5166
          %s5168 = sand.u32 %s162, 1
          %s5169 = smul.addr %s5168, 8
          %s5170 = scalar_lea.vmem [#allocation10], %s5169
          %5171 = dma.done %s5167, 128
        $region68: #{tpu_custom_call.1} parent=63 // pred_fallthru
          _
      $region64: #{tpu_custom_call.1} parent=5 // pred_fallthru
        _
    $region6: #{tpu_custom_call.1} parent=1 // loop_footer
      %s27 = sadd.s32 1, %s23
    $region7: #{tpu_custom_call.1} parent=1 // loop_footer_branch
      %22 = sbr.rel target = $region3
    $region8: #{tpu_custom_call.1} parent=1 // loop_exit
      _
    %5172 = vsyncpa [#allocation3], 1
    %s5173 = scalar_lea.sflag [#allocation3], 1
    %5174 = vsyncpa %s5173, 1
    %5175 = vsyncpa [#allocation6], 1
    %s5176 = scalar_lea.sflag [#allocation6], 1
    %5177 = vsyncpa %s5176, 1
    %5178 = vsyncpa [#allocation9], 1
    %s5179 = scalar_lea.sflag [#allocation9], 1
    %5180 = vsyncpa %s5179, 1
    %5181 = vsyncpa [#allocation4], 1
    %s5182 = scalar_lea.sflag [#allocation4], 1
    %5183 = vsyncpa %s5182, 1

</llo_original>
